<compile_context>
chip_gen: v6e
topology: v6e:2x2x1
jax: 0.10.0
libtpu: 0.0.40
codegen_flags: <defaults>
</compile_context>

<pallas_src>
import jax
import jax.numpy as jnp
from jax.experimental import pallas as pl
from jax.experimental.pallas import tpu as pltpu

EPS = 1e-5                       # nn.BatchNorm2d default eps
VMEM_LIMIT = 32 * 1024 * 1024    # explicit scoped-VMEM budget (safe on v5e/v6e/v7x)


# ----------------------------- Pallas kernels ------------------------------ #

def conv_block_kernel(x_ref, w_ref, b_ref, y_ref, sum_ref, sq_ref):
    """One M-tile of: 5x5 valid conv + bias + ReLU + 2x2 max-pool, plus
    per-channel sum / sum-of-squares accumulation for BatchNorm batch stats.

    x_ref  : (4, Mt, K)  im2col tile, one slab per 2x2 pool offset
    w_ref  : (K, C)      conv weights (previous block's BN already folded in)
    b_ref  : (1, C)      conv bias (previous block's BN shift already folded in)
    y_ref  : (Mt, C)     pre-BN pooled output tile
    sum_ref, sq_ref : (1, C) resident stat accumulators (constant block index)
    """
    step = pl.program_id(0)

    @pl.when(step == 0)
    def _init():
        sum_ref[...] = jnp.zeros_like(sum_ref)
        sq_ref[...] = jnp.zeros_like(sq_ref)

    four, mt, k = x_ref.shape
    c = w_ref.shape[1]

    # One long MXU stream over all 4 pool offsets; the pool-max is cheap VPU work.
    y4 = jnp.dot(x_ref[...].reshape(four * mt, k), w_ref[...],
                 preferred_element_type=jnp.float32).reshape(four, mt, c)
    y = jnp.max(y4, axis=0)
    # bias is per-channel and ReLU is monotonic, so both commute with the max.
    y = jnp.maximum(y + b_ref[...], 0.0)

    sum_ref[...] += jnp.sum(y, axis=0, keepdims=True)
    sq_ref[...] += jnp.sum(y * y, axis=0, keepdims=True)
    y_ref[...] = y.astype(y_ref.dtype)


def linear_kernel(x_ref, w_ref, b_ref, o_ref):
    """y = x @ W + b (W already transposed / permuted / BN-folded in wrapper)."""
    o_ref[...] = (jnp.dot(x_ref[...], w_ref[...],
                          preferred_element_type=jnp.float32)
                  + b_ref[...]).astype(o_ref.dtype)


# ----------------------------- pallas_call glue ----------------------------- #

def _row_tile(m, target):
    """Largest divisor of m that is <= target and a multiple of 8 (sublane
    tile); falls back to the full extent (single tile) if none exists."""
    if m <= target:
        return m
    best = None
    for t in range(8, target + 1, 8):
        if m % t == 0:
            best = t
    return best if best is not None else m


def conv_block(x4, w_mat, b, row_tile):
    """x4: (4, M, K) im2col, w_mat: (K, C), b: (1, C).
    Returns (y: (M, C) pre-BN output, sum: (1, C), sumsq: (1, C))."""
    _, m, k = x4.shape
    c = w_mat.shape[1]
    grid = (m // row_tile,)
    flops = 2 * 4 * m * k * c + 8 * m * c
    bytes_accessed = (x4.size + w_mat.size + b.size + m * c + 2 * c) * 4
    return pl.pallas_call(
        conv_block_kernel,
        grid=grid,
        in_specs=[
            pl.BlockSpec((4, row_tile, k), lambda i: (0, i, 0)),
            pl.BlockSpec((k, c), lambda i: (0, 0)),
            pl.BlockSpec((1, c), lambda i: (0, 0)),
        ],
        out_specs=(
            pl.BlockSpec((row_tile, c), lambda i: (i, 0)),
            pl.BlockSpec((1, c), lambda i: (0, 0)),   # resident accumulator
            pl.BlockSpec((1, c), lambda i: (0, 0)),   # resident accumulator
        ),
        out_shape=(
            jax.ShapeDtypeStruct((m, c), jnp.float32),
            jax.ShapeDtypeStruct((1, c), jnp.float32),
            jax.ShapeDtypeStruct((1, c), jnp.float32),
        ),
        compiler_params=pltpu.CompilerParams(
            dimension_semantics=("arbitrary",),       # stat reduction over M tiles
            vmem_limit_bytes=VMEM_LIMIT,
        ),
        cost_estimate=pl.CostEstimate(
            flops=int(flops), transcendentals=0,
            bytes_accessed=int(bytes_accessed)),
    )(x4, w_mat, b)


def linear(x, w, b, row_tile):
    """x: (M, K), w: (K, N), b: (1, N) -> (M, N)."""
    m, k = x.shape
    n = w.shape[1]
    grid = (m // row_tile,)
    return pl.pallas_call(
        linear_kernel,
        grid=grid,
        in_specs=[
            pl.BlockSpec((row_tile, k), lambda i: (i, 0)),
            pl.BlockSpec((k, n), lambda i: (0, 0)),
            pl.BlockSpec((1, n), lambda i: (0, 0)),
        ],
        out_specs=pl.BlockSpec((row_tile, n), lambda i: (i, 0)),
        out_shape=jax.ShapeDtypeStruct((m, n), jnp.float32),
        compiler_params=pltpu.CompilerParams(
            dimension_semantics=("parallel",),
            vmem_limit_bytes=VMEM_LIMIT,
        ),
        cost_estimate=pl.CostEstimate(
            flops=int(2 * m * k * n), transcendentals=0,
            bytes_accessed=int((m * k + k * n + n + m * n) * 4)),
    )(x, w, b)


def im2col_pooled(x_nhwc, k=5):
    """Build 4 im2col matrices (one per 2x2 max-pool offset).

    Returns ((4, N*Hp*Wp, Cin*k*k), (Hp, Wp)).  Patch elements are ordered
    (cin, kh, kw) to match PyTorch Conv2d weight layout
    (Cout, Cin, KH, KW).reshape(Cout, -1).  Pure XLA indexing glue; all FLOPs
    happen inside the Pallas kernels.
    """
    n, h, w, cin = x_nhwc.shape
    oh, ow = h - k + 1, w - k + 1
    hp, wp = oh // 2, ow // 2
    mats = []
    for a in range(2):
        for b in range(2):
            cols = []
            for kh in range(k):
                for kw in range(k):
                    sl = x_nhwc[:, a + kh: a + kh + 2 * hp: 2,
                                b + kw: b + kw + 2 * wp: 2, :]   # (N,Hp,Wp,Cin)
                    cols.append(sl)
            stk = jnp.stack(cols, axis=3)                         # (N,Hp,Wp,k*k,Cin)
            stk = jnp.transpose(stk, (0, 1, 2, 4, 3))             # (N,Hp,Wp,Cin,k*k)
            mats.append(stk.reshape(n * hp * wp, cin * k * k))
    return jnp.stack(mats, axis=0), (hp, wp)


def _bn_scale_shift(sum_, sq, count, gamma, beta):
    """Training-mode BatchNorm: per-channel scale/shift from one-pass stats."""
    mean = sum_[0] / count
    var = jnp.maximum(sq[0] / count - mean * mean, 0.0)
    scale = gamma * jax.lax.rsqrt(var + EPS)
    shift = beta - mean * scale
    return scale, shift


# ------------------------------- parameters -------------------------------- #

def init_params(key, output_dim=64):
    ks = jax.random.split(key, 6)
    p = {
        # conv1: Conv2d(1, 32, 5)
        "w1": 0.10 * jax.random.normal(ks[0], (32, 1, 5, 5), jnp.float32),
        "b1": 0.10 * jax.random.normal(ks[1], (32,), jnp.float32),
        # bnorm1: BatchNorm2d(32)  (PyTorch init: gamma=1, beta=0)
        "g1": jnp.ones((32,), jnp.float32),
        "be1": jnp.zeros((32,), jnp.float32),
        # conv2: Conv2d(32, 64, 5)
        "w2": 0.05 * jax.random.normal(ks[2], (64, 32, 5, 5), jnp.float32),
        "b2": 0.10 * jax.random.normal(ks[3], (64,), jnp.float32),
        # bnorm2: BatchNorm2d(64)
        "g2": jnp.ones((64,), jnp.float32),
        "be2": jnp.zeros((64,), jnp.float32),
        # fc1: Linear(1024, output_dim)
        "wf": 0.05 * jax.random.normal(ks[4], (output_dim, 1024), jnp.float32),
        "bf": 0.10 * jax.random.normal(ks[5], (output_dim,), jnp.float32),
    }
    return p


# ------------------------------ forward pass -------------------------------- #

@jax.jit
def image_model_forward(params, x_nchw):
    n = x_nchw.shape[0]
    x = jnp.transpose(x_nchw, (0, 2, 3, 1))                  # NCHW -> NHWC

    # ---- block 1: conv1 + ReLU + max_pool2d(2); BN1 folded into conv2 ----
    x4, (hp, wp) = im2col_pooled(x, 5)                       # (4, N*144, 25)
    w1_mat = params["w1"].reshape(32, 1 * 5 * 5).T           # (25, 32)
    y1, s1, q1 = conv_block(x4, w1_mat, params["b1"][None, :],
                            _row_tile(n * hp * wp, 4608))    # ~32 samples / tile
    scale1, shift1 = _bn_scale_shift(s1, q1, n * hp * wp,
                                     params["g1"], params["be1"])

    # Fold BN1 (per-input-channel affine) into conv2's weights / bias:
    #   conv2(scale1*x + shift1) = conv2_{w*scale1}(x) + sum(w*shift1) + b2
    w2 = params["w2"]                                        # (64, 32, 5, 5)
    w2_mat = (w2 * scale1[None, :, None, None]).reshape(64, 32 * 25).T   # (800,64)
    b2_eff = params["b2"] + jnp.einsum("oikl,i->o", w2, shift1)          # (64,)

    x = y1.reshape(n, hp, wp, 32)                            # pre-BN1 NHWC activations

    # ---- block 2: conv2 + ReLU + max_pool2d(2); BN2 folded into fc1 ----
    x4, (hp2, wp2) = im2col_pooled(x, 5)                     # (4, N*16, 800)
    y2, s2, q2 = conv_block(x4, w2_mat, b2_eff[None, :],
                            _row_tile(n * hp2 * wp2, 256))   # ~16 samples / tile
    scale2, shift2 = _bn_scale_shift(s2, q2, n * hp2 * wp2,
                                     params["g2"], params["be2"])

    # ---- fc1, with BN2 + the NCHW-flatten permutation folded into wf ----
    # y2 rows are (n, ph, pw) with channels on lanes, so y2.reshape(N, 1024)
    # is the per-sample (pixel, channel) flatten; permute wf's columns to match
    # (original flat index = c*16 + p  ->  row index p*64 + c).
    out_dim = params["wf"].shape[0]
    npix = hp2 * wp2                                          # 16
    wf3 = params["wf"].reshape(out_dim, 64, npix)             # [o, c, p]
    wf_eff = jnp.transpose(wf3 * scale2[None, :, None], (2, 1, 0))
    wf_eff = wf_eff.reshape(npix * 64, out_dim)               # (1024, out_dim)
    bf_eff = params["bf"] + jnp.einsum("ocp,c->o", wf3, shift2)

    y2_flat = y2.reshape(n, npix * 64)                        # (N, 1024), no transpose
    return linear(y2_flat, wf_eff, bf_eff[None, :], _row_tile(n, 512))


if __name__ == "__main__":
    key = jax.random.PRNGKey(0)
    pkey, xkey = jax.random.split(key)
    params = init_params(pkey, output_dim=64)

    # MNIST-shaped input implied by fc1 = Linear(1024, .): (N, 1, 28, 28) NCHW.
    x_small = jax.random.normal(xkey, (2, 1, 28, 28), jnp.float32)
    out_small = image_model_forward(params, x_small)
    jax.block_until_ready(out_small)
    assert out_small.shape == (2, 64) and out_small.dtype == jnp.float32

    # A second, larger batch exercises the multi-tile (grid > 1) pipelined path.
    x_big = jax.random.normal(xkey, (64, 1, 28, 28), jnp.float32)
    out_big = image_model_forward(params, x_big)
    jax.block_until_ready(out_big)
    assert out_big.shape == (64, 64) and out_big.dtype == jnp.float32

    print("KERNEL_OK")
</pallas_src>

<mosaic_0001>
module attributes {stable_mosaic.version = 11 : i64} {
  func.func @conv_block_kernel(%arg0: i32, %arg1: memref<4x288x25xf32, #tpu.memory_space<vmem>>, %arg2: memref<25x32xf32, #tpu.memory_space<vmem>>, %arg3: memref<1x32xf32, #tpu.memory_space<vmem>>, %arg4: memref<288x32xf32, #tpu.memory_space<vmem>>, %arg5: memref<1x32xf32, #tpu.memory_space<vmem>>, %arg6: memref<1x32xf32, #tpu.memory_space<vmem>>) attributes {dimension_semantics = [#tpu.dimension_semantics<arbitrary>], iteration_bounds = array<i64: 1>, scalar_prefetch = 0 : i64, scratch_operands = 0 : i64, tpu.core_type = #tpu.core_type<tc>, window_params = [{transform_indices = @transform_0, window_bounds = array<i64: 4, 288, 25>}, {pipeline_mode = #tpu.pipeline_mode<synchronous>, transform_indices = @transform_1, window_bounds = array<i64: 25, 32>}, {pipeline_mode = #tpu.pipeline_mode<synchronous>, transform_indices = @transform_2, window_bounds = array<i64: 1, 32>}, {transform_indices = @transform_3, window_bounds = array<i64: 288, 32>}, {pipeline_mode = #tpu.pipeline_mode<synchronous>, transform_indices = @transform_4, window_bounds = array<i64: 1, 32>}, {pipeline_mode = #tpu.pipeline_mode<synchronous>, transform_indices = @transform_5, window_bounds = array<i64: 1, 32>}]} {
    %c0_i32 = arith.constant 0 : i32
    %0 = arith.cmpi eq, %arg0, %c0_i32 : i32
    %1 = arith.extui %0 : i1 to i32
    %c0_i32_0 = arith.constant 0 : i32
    %2 = arith.cmpi ne, %1, %c0_i32_0 : i32
    scf.if %2 {
      %cst_21 = arith.constant 0.000000e+00 : f32
      %26 = vector.broadcast %cst_21 : f32 to vector<1x32xf32>
      %c0_22 = arith.constant 0 : index
      %c0_23 = arith.constant 0 : index
      %27 = vector.load %arg5[%c0_22, %c0_23] : memref<1x32xf32, #tpu.memory_space<vmem>>, vector<1x32xf32>
      tpu.vector_store %arg5[%c0_22, %c0_23], %26 {strides = array<i32>} : memref<1x32xf32, #tpu.memory_space<vmem>>, vector<1x32xf32>,
      %cst_24 = arith.constant 0.000000e+00 : f32
      %28 = vector.broadcast %cst_24 : f32 to vector<1x32xf32>
      %c0_25 = arith.constant 0 : index
      %c0_26 = arith.constant 0 : index
      %29 = vector.load %arg6[%c0_25, %c0_26] : memref<1x32xf32, #tpu.memory_space<vmem>>, vector<1x32xf32>
      tpu.vector_store %arg6[%c0_25, %c0_26], %28 {strides = array<i32>} : memref<1x32xf32, #tpu.memory_space<vmem>>, vector<1x32xf32>,
    } else {
    }
    %c0 = arith.constant 0 : index
    %c0_1 = arith.constant 0 : index
    %c0_2 = arith.constant 0 : index
    %3 = vector.load %arg1[%c0, %c0_1, %c0_2] : memref<4x288x25xf32, #tpu.memory_space<vmem>>, vector<4x288x25xf32>
    %4 = vector.shape_cast %3 : vector<4x288x25xf32> to vector<1152x25xf32>
    %c0_3 = arith.constant 0 : index
    %c0_4 = arith.constant 0 : index
    %5 = vector.load %arg2[%c0_3, %c0_4] : memref<25x32xf32, #tpu.memory_space<vmem>>, vector<25x32xf32>
    %cst = arith.constant dense<0.000000e+00> : vector<1152x32xf32>
    %6 = tpu.matmul %4, %5, %cst {dimension_numbers = #tpu.dot_dimension_numbers<[1], [0], [0], [1], [0, 0, 1, 1], [], []>} : vector<1152x25xf32>, vector<25x32xf32>, vector<1152x32xf32> -> vector<1152x32xf32>
    %7 = vector.shape_cast %6 : vector<1152x32xf32> to vector<4x288x32xf32>
    %cst_5 = arith.constant dense<0xFF800000> : vector<288x32xf32>
    %8 = vector.multi_reduction <maximumf>, %7, %cst_5 [0] : vector<4x288x32xf32> to vector<288x32xf32>
    %c0_6 = arith.constant 0 : index
    %c0_7 = arith.constant 0 : index
    %9 = vector.load %arg3[%c0_6, %c0_7] : memref<1x32xf32, #tpu.memory_space<vmem>>, vector<1x32xf32>
    %10 = vector.broadcast %9 : vector<1x32xf32> to vector<288x32xf32>
    %11 = arith.addf %8, %10 : vector<288x32xf32>
    %cst_8 = arith.constant 0.000000e+00 : f32
    %12 = vector.broadcast %cst_8 : f32 to vector<288x32xf32>
    %13 = arith.maximumf %11, %12 : vector<288x32xf32>
    %c0_9 = arith.constant 0 : index
    %c0_10 = arith.constant 0 : index
    %14 = vector.load %arg5[%c0_9, %c0_10] : memref<1x32xf32, #tpu.memory_space<vmem>>, vector<1x32xf32>
    %cst_11 = arith.constant dense<0.000000e+00> : vector<32xf32>
    %15 = vector.multi_reduction <add>, %13, %cst_11 [0] : vector<288x32xf32> to vector<32xf32>
    %16 = vector.shape_cast %15 : vector<32xf32> to vector<1x32xf32>
    %17 = arith.addf %14, %16 : vector<1x32xf32>
    %c0_12 = arith.constant 0 : index
    %c0_13 = arith.constant 0 : index
    %18 = vector.load %arg5[%c0_12, %c0_13] : memref<1x32xf32, #tpu.memory_space<vmem>>, vector<1x32xf32>
    tpu.vector_store %arg5[%c0_12, %c0_13], %17 {strides = array<i32>} : memref<1x32xf32, #tpu.memory_space<vmem>>, vector<1x32xf32>,
    %c0_14 = arith.constant 0 : index
    %c0_15 = arith.constant 0 : index
    %19 = vector.load %arg6[%c0_14, %c0_15] : memref<1x32xf32, #tpu.memory_space<vmem>>, vector<1x32xf32>
    %20 = arith.mulf %13, %13 : vector<288x32xf32>
    %cst_16 = arith.constant dense<0.000000e+00> : vector<32xf32>
    %21 = vector.multi_reduction <add>, %20, %cst_16 [0] : vector<288x32xf32> to vector<32xf32>
    %22 = vector.shape_cast %21 : vector<32xf32> to vector<1x32xf32>
    %23 = arith.addf %19, %22 : vector<1x32xf32>
    %c0_17 = arith.constant 0 : index
    %c0_18 = arith.constant 0 : index
    %24 = vector.load %arg6[%c0_17, %c0_18] : memref<1x32xf32, #tpu.memory_space<vmem>>, vector<1x32xf32>
    tpu.vector_store %arg6[%c0_17, %c0_18], %23 {strides = array<i32>} : memref<1x32xf32, #tpu.memory_space<vmem>>, vector<1x32xf32>,
    %c0_19 = arith.constant 0 : index
    %c0_20 = arith.constant 0 : index
    %25 = vector.load %arg4[%c0_19, %c0_20] : memref<288x32xf32, #tpu.memory_space<vmem>>, vector<288x32xf32>
    tpu.vector_store %arg4[%c0_19, %c0_20], %13 {strides = array<i32>} : memref<288x32xf32, #tpu.memory_space<vmem>>, vector<288x32xf32>,
    return
  }
  func.func @transform_0(%arg0: i32) -> (i32, i32, i32) {
    %c0_i32 = arith.constant 0 : i32
    %c0_i32_0 = arith.constant 0 : i32
    %c0_i32_1 = arith.constant 0 : i32
    return %c0_i32, %arg0, %c0_i32_0 : i32, i32, i32
  }
  func.func @transform_1(%arg0: i32) -> (i32, i32) {
    %c0_i32 = arith.constant 0 : i32
    %c0_i32_0 = arith.constant 0 : i32
    %c0_i32_1 = arith.constant 0 : i32
    return %c0_i32, %c0_i32_0 : i32, i32
  }
  func.func @transform_2(%arg0: i32) -> (i32, i32) {
    %c0_i32 = arith.constant 0 : i32
    %c0_i32_0 = arith.constant 0 : i32
    %c0_i32_1 = arith.constant 0 : i32
    return %c0_i32, %c0_i32_0 : i32, i32
  }
  func.func @transform_3(%arg0: i32) -> (i32, i32) {
    %c0_i32 = arith.constant 0 : i32
    %c0_i32_0 = arith.constant 0 : i32
    return %arg0, %c0_i32 : i32, i32
  }
  func.func @transform_4(%arg0: i32) -> (i32, i32) {
    %c0_i32 = arith.constant 0 : i32
    %c0_i32_0 = arith.constant 0 : i32
    %c0_i32_1 = arith.constant 0 : i32
    return %c0_i32, %c0_i32_0 : i32, i32
  }
  func.func @transform_5(%arg0: i32) -> (i32, i32) {
    %c0_i32 = arith.constant 0 : i32
    %c0_i32_0 = arith.constant 0 : i32
    %c0_i32_1 = arith.constant 0 : i32
    return %c0_i32, %c0_i32_0 : i32, i32
  }
}

module attributes {stable_mosaic.version = 11 : i64} {
  func.func @conv_block_kernel(%arg0: i32, %arg1: memref<4x32x800xf32, #tpu.memory_space<vmem>>, %arg2: memref<800x64xf32, #tpu.memory_space<vmem>>, %arg3: memref<1x64xf32, #tpu.memory_space<vmem>>, %arg4: memref<32x64xf32, #tpu.memory_space<vmem>>, %arg5: memref<1x64xf32, #tpu.memory_space<vmem>>, %arg6: memref<1x64xf32, #tpu.memory_space<vmem>>) attributes {dimension_semantics = [#tpu.dimension_semantics<arbitrary>], iteration_bounds = array<i64: 1>, scalar_prefetch = 0 : i64, scratch_operands = 0 : i64, tpu.core_type = #tpu.core_type<tc>, window_params = [{transform_indices = @transform_0, window_bounds = array<i64: 4, 32, 800>}, {pipeline_mode = #tpu.pipeline_mode<synchronous>, transform_indices = @transform_1, window_bounds = array<i64: 800, 64>}, {pipeline_mode = #tpu.pipeline_mode<synchronous>, transform_indices = @transform_2, window_bounds = array<i64: 1, 64>}, {transform_indices = @transform_3, window_bounds = array<i64: 32, 64>}, {pipeline_mode = #tpu.pipeline_mode<synchronous>, transform_indices = @transform_4, window_bounds = array<i64: 1, 64>}, {pipeline_mode = #tpu.pipeline_mode<synchronous>, transform_indices = @transform_5, window_bounds = array<i64: 1, 64>}]} {
    %c0_i32 = arith.constant 0 : i32
    %0 = arith.cmpi eq, %arg0, %c0_i32 : i32
    %1 = arith.extui %0 : i1 to i32
    %c0_i32_0 = arith.constant 0 : i32
    %2 = arith.cmpi ne, %1, %c0_i32_0 : i32
    scf.if %2 {
      %cst_21 = arith.constant 0.000000e+00 : f32
      %26 = vector.broadcast %cst_21 : f32 to vector<1x64xf32>
      %c0_22 = arith.constant 0 : index
      %c0_23 = arith.constant 0 : index
      %27 = vector.load %arg5[%c0_22, %c0_23] : memref<1x64xf32, #tpu.memory_space<vmem>>, vector<1x64xf32>
      tpu.vector_store %arg5[%c0_22, %c0_23], %26 {strides = array<i32>} : memref<1x64xf32, #tpu.memory_space<vmem>>, vector<1x64xf32>,
      %cst_24 = arith.constant 0.000000e+00 : f32
      %28 = vector.broadcast %cst_24 : f32 to vector<1x64xf32>
      %c0_25 = arith.constant 0 : index
      %c0_26 = arith.constant 0 : index
      %29 = vector.load %arg6[%c0_25, %c0_26] : memref<1x64xf32, #tpu.memory_space<vmem>>, vector<1x64xf32>
      tpu.vector_store %arg6[%c0_25, %c0_26], %28 {strides = array<i32>} : memref<1x64xf32, #tpu.memory_space<vmem>>, vector<1x64xf32>,
    } else {
    }
    %c0 = arith.constant 0 : index
    %c0_1 = arith.constant 0 : index
    %c0_2 = arith.constant 0 : index
    %3 = vector.load %arg1[%c0, %c0_1, %c0_2] : memref<4x32x800xf32, #tpu.memory_space<vmem>>, vector<4x32x800xf32>
    %4 = vector.shape_cast %3 : vector<4x32x800xf32> to vector<128x800xf32>
    %c0_3 = arith.constant 0 : index
    %c0_4 = arith.constant 0 : index
    %5 = vector.load %arg2[%c0_3, %c0_4] : memref<800x64xf32, #tpu.memory_space<vmem>>, vector<800x64xf32>
    %cst = arith.constant dense<0.000000e+00> : vector<128x64xf32>
    %6 = tpu.matmul %4, %5, %cst {dimension_numbers = #tpu.dot_dimension_numbers<[1], [0], [0], [1], [0, 0, 1, 1], [], []>} : vector<128x800xf32>, vector<800x64xf32>, vector<128x64xf32> -> vector<128x64xf32>
    %7 = vector.shape_cast %6 : vector<128x64xf32> to vector<4x32x64xf32>
    %cst_5 = arith.constant dense<0xFF800000> : vector<32x64xf32>
    %8 = vector.multi_reduction <maximumf>, %7, %cst_5 [0] : vector<4x32x64xf32> to vector<32x64xf32>
    %c0_6 = arith.constant 0 : index
    %c0_7 = arith.constant 0 : index
    %9 = vector.load %arg3[%c0_6, %c0_7] : memref<1x64xf32, #tpu.memory_space<vmem>>, vector<1x64xf32>
    %10 = vector.broadcast %9 : vector<1x64xf32> to vector<32x64xf32>
    %11 = arith.addf %8, %10 : vector<32x64xf32>
    %cst_8 = arith.constant 0.000000e+00 : f32
    %12 = vector.broadcast %cst_8 : f32 to vector<32x64xf32>
    %13 = arith.maximumf %11, %12 : vector<32x64xf32>
    %c0_9 = arith.constant 0 : index
    %c0_10 = arith.constant 0 : index
    %14 = vector.load %arg5[%c0_9, %c0_10] : memref<1x64xf32, #tpu.memory_space<vmem>>, vector<1x64xf32>
    %cst_11 = arith.constant dense<0.000000e+00> : vector<64xf32>
    %15 = vector.multi_reduction <add>, %13, %cst_11 [0] : vector<32x64xf32> to vector<64xf32>
    %16 = vector.shape_cast %15 : vector<64xf32> to vector<1x64xf32>
    %17 = arith.addf %14, %16 : vector<1x64xf32>
    %c0_12 = arith.constant 0 : index
    %c0_13 = arith.constant 0 : index
    %18 = vector.load %arg5[%c0_12, %c0_13] : memref<1x64xf32, #tpu.memory_space<vmem>>, vector<1x64xf32>
    tpu.vector_store %arg5[%c0_12, %c0_13], %17 {strides = array<i32>} : memref<1x64xf32, #tpu.memory_space<vmem>>, vector<1x64xf32>,
    %c0_14 = arith.constant 0 : index
    %c0_15 = arith.constant 0 : index
    %19 = vector.load %arg6[%c0_14, %c0_15] : memref<1x64xf32, #tpu.memory_space<vmem>>, vector<1x64xf32>
    %20 = arith.mulf %13, %13 : vector<32x64xf32>
    %cst_16 = arith.constant dense<0.000000e+00> : vector<64xf32>
    %21 = vector.multi_reduction <add>, %20, %cst_16 [0] : vector<32x64xf32> to vector<64xf32>
    %22 = vector.shape_cast %21 : vector<64xf32> to vector<1x64xf32>
    %23 = arith.addf %19, %22 : vector<1x64xf32>
    %c0_17 = arith.constant 0 : index
    %c0_18 = arith.constant 0 : index
    %24 = vector.load %arg6[%c0_17, %c0_18] : memref<1x64xf32, #tpu.memory_space<vmem>>, vector<1x64xf32>
    tpu.vector_store %arg6[%c0_17, %c0_18], %23 {strides = array<i32>} : memref<1x64xf32, #tpu.memory_space<vmem>>, vector<1x64xf32>,
    %c0_19 = arith.constant 0 : index
    %c0_20 = arith.constant 0 : index
    %25 = vector.load %arg4[%c0_19, %c0_20] : memref<32x64xf32, #tpu.memory_space<vmem>>, vector<32x64xf32>
    tpu.vector_store %arg4[%c0_19, %c0_20], %13 {strides = array<i32>} : memref<32x64xf32, #tpu.memory_space<vmem>>, vector<32x64xf32>,
    return
  }
  func.func @transform_0(%arg0: i32) -> (i32, i32, i32) {
    %c0_i32 = arith.constant 0 : i32
    %c0_i32_0 = arith.constant 0 : i32
    %c0_i32_1 = arith.constant 0 : i32
    return %c0_i32, %arg0, %c0_i32_0 : i32, i32, i32
  }
  func.func @transform_1(%arg0: i32) -> (i32, i32) {
    %c0_i32 = arith.constant 0 : i32
    %c0_i32_0 = arith.constant 0 : i32
    %c0_i32_1 = arith.constant 0 : i32
    return %c0_i32, %c0_i32_0 : i32, i32
  }
  func.func @transform_2(%arg0: i32) -> (i32, i32) {
    %c0_i32 = arith.constant 0 : i32
    %c0_i32_0 = arith.constant 0 : i32
    %c0_i32_1 = arith.constant 0 : i32
    return %c0_i32, %c0_i32_0 : i32, i32
  }
  func.func @transform_3(%arg0: i32) -> (i32, i32) {
    %c0_i32 = arith.constant 0 : i32
    %c0_i32_0 = arith.constant 0 : i32
    return %arg0, %c0_i32 : i32, i32
  }
  func.func @transform_4(%arg0: i32) -> (i32, i32) {
    %c0_i32 = arith.constant 0 : i32
    %c0_i32_0 = arith.constant 0 : i32
    %c0_i32_1 = arith.constant 0 : i32
    return %c0_i32, %c0_i32_0 : i32, i32
  }
  func.func @transform_5(%arg0: i32) -> (i32, i32) {
    %c0_i32 = arith.constant 0 : i32
    %c0_i32_0 = arith.constant 0 : i32
    %c0_i32_1 = arith.constant 0 : i32
    return %c0_i32, %c0_i32_0 : i32, i32
  }
}

module attributes {stable_mosaic.version = 11 : i64} {
  func.func @linear_kernel(%arg0: i32, %arg1: memref<2x1024xf32, #tpu.memory_space<vmem>>, %arg2: memref<1024x64xf32, #tpu.memory_space<vmem>>, %arg3: memref<1x64xf32, #tpu.memory_space<vmem>>, %arg4: memref<2x64xf32, #tpu.memory_space<vmem>>) attributes {dimension_semantics = [#tpu.dimension_semantics<parallel>], iteration_bounds = array<i64: 1>, scalar_prefetch = 0 : i64, scratch_operands = 0 : i64, tpu.core_type = #tpu.core_type<tc>, window_params = [{transform_indices = @transform_0, window_bounds = array<i64: 2, 1024>}, {pipeline_mode = #tpu.pipeline_mode<synchronous>, transform_indices = @transform_1, window_bounds = array<i64: 1024, 64>}, {pipeline_mode = #tpu.pipeline_mode<synchronous>, transform_indices = @transform_2, window_bounds = array<i64: 1, 64>}, {transform_indices = @transform_3, window_bounds = array<i64: 2, 64>}]} {
    %c0 = arith.constant 0 : index
    %c0_0 = arith.constant 0 : index
    %0 = vector.load %arg1[%c0, %c0_0] : memref<2x1024xf32, #tpu.memory_space<vmem>>, vector<2x1024xf32>
    %c0_1 = arith.constant 0 : index
    %c0_2 = arith.constant 0 : index
    %1 = vector.load %arg2[%c0_1, %c0_2] : memref<1024x64xf32, #tpu.memory_space<vmem>>, vector<1024x64xf32>
    %cst = arith.constant dense<0.000000e+00> : vector<2x64xf32>
    %2 = tpu.matmul %0, %1, %cst {dimension_numbers = #tpu.dot_dimension_numbers<[1], [0], [0], [1], [0, 0, 1, 1], [], []>} : vector<2x1024xf32>, vector<1024x64xf32>, vector<2x64xf32> -> vector<2x64xf32>
    %c0_3 = arith.constant 0 : index
    %c0_4 = arith.constant 0 : index
    %3 = vector.load %arg3[%c0_3, %c0_4] : memref<1x64xf32, #tpu.memory_space<vmem>>, vector<1x64xf32>
    %4 = vector.broadcast %3 : vector<1x64xf32> to vector<2x64xf32>
    %5 = arith.addf %2, %4 : vector<2x64xf32>
    %c0_5 = arith.constant 0 : index
    %c0_6 = arith.constant 0 : index
    %6 = vector.load %arg4[%c0_5, %c0_6] : memref<2x64xf32, #tpu.memory_space<vmem>>, vector<2x64xf32>
    tpu.vector_store %arg4[%c0_5, %c0_6], %5 {strides = array<i32>} : memref<2x64xf32, #tpu.memory_space<vmem>>, vector<2x64xf32>,
    return
  }
  func.func @transform_0(%arg0: i32) -> (i32, i32) {
    %c0_i32 = arith.constant 0 : i32
    %c0_i32_0 = arith.constant 0 : i32
    return %arg0, %c0_i32 : i32, i32
  }
  func.func @transform_1(%arg0: i32) -> (i32, i32) {
    %c0_i32 = arith.constant 0 : i32
    %c0_i32_0 = arith.constant 0 : i32
    %c0_i32_1 = arith.constant 0 : i32
    return %c0_i32, %c0_i32_0 : i32, i32
  }
  func.func @transform_2(%arg0: i32) -> (i32, i32) {
    %c0_i32 = arith.constant 0 : i32
    %c0_i32_0 = arith.constant 0 : i32
    %c0_i32_1 = arith.constant 0 : i32
    return %c0_i32, %c0_i32_0 : i32, i32
  }
  func.func @transform_3(%arg0: i32) -> (i32, i32) {
    %c0_i32 = arith.constant 0 : i32
    %c0_i32_0 = arith.constant 0 : i32
    return %arg0, %c0_i32 : i32, i32
  }
}

</mosaic_0001>

<llo_original>
// kernel: image_model_forward.3
$region0: #{image_model_forward.3}
  #allocation0 [shape = 'u32[]', space=smem, size = 0x4, offset = 0x4, fixed_abs, tag = 'smem constant byte address 0x4 - core index']
  #allocation1 [shape = 'u32[144,128]{1,0:T(1,128)}', space=vmem, size = 0x12000, scoped, tag = 'internal scratch']
  %s0 = inlined_call_operand.vmem [shape: f32[4,288,25], index: 0, kind: input, shape index: {}]
  %s1 = inlined_call_operand.vmem [shape: f32[25,32], index: 1, kind: input, shape index: {}]
  %s2 = inlined_call_operand.vmem [shape: f32[1,32], index: 2, kind: input, shape index: {}]
  %s3 = inlined_call_operand.vmem [shape: f32[288,32], index: 3, kind: output, shape index: {0}]
  %s4 = inlined_call_operand.vmem [shape: f32[1,32], index: 4, kind: output, shape index: {1}]
  %s5 = inlined_call_operand.vmem [shape: f32[1,32], index: 5, kind: output, shape index: {2}]
  %6 = xla_tuple %s3, %s4, %s5
  %s7 = sld [smem:[#allocation0]]
  $region42: #{image_model_forward.3} parent=0
    _
  %s9 = ssub.s32 1, %s7
  %s10 = scalar_select 0, %s9, %s7
  // Predicated region
  $region2: #{image_model_forward.3} parent=0 // pred_check
    _
  $region3: #{image_model_forward.3} parent=0 // pred_check_branch
    %12 = sbr.rel (0) target = $region5
  $region4: #{image_model_forward.3} parent=0 // pred_region
    _
  $region5: #{image_model_forward.3} parent=0 // pred_fallthru
    _
  // Predicated region
  $region6: #{image_model_forward.3} parent=0 // pred_check
    _
  $region7: #{image_model_forward.3} parent=0 // pred_check_branch
    %14 = sbr.rel (0) target = $region9
  $region8: #{image_model_forward.3} parent=0 // pred_region
    _
  $region9: #{image_model_forward.3} parent=0 // pred_fallthru
    _
  // Predicated region
  $region10: #{image_model_forward.3} parent=0 // pred_check
    _
  $region11: #{image_model_forward.3} parent=0 // pred_check_branch
    %16 = sbr.rel (0) target = $region13
  $region12: #{image_model_forward.3} parent=0 // pred_region
    _
  $region13: #{image_model_forward.3} parent=0 // pred_fallthru
    _
  %p17 = scmp.eq.s32.totalorder 0, 0
  // Predicated region
  $region14: #{image_model_forward.3} parent=0 // pred_check
    %p18 = pneg %p17
  $region15: #{image_model_forward.3} parent=0 // pred_check_branch
    %20 = sbr.rel (%p18) target = $region17
  $region16: #{image_model_forward.3} parent=0 // pred_region
    %vm21 = vcmask 253952
    %22 = vst.msk [vmem:[%s4] sm:$0x1] %vm21, 0.0
    %23 = vst.msk [vmem:[%s5] sm:$0x1] %vm21, 0.0
  $region17: #{image_model_forward.3} parent=0 // pred_fallthru
    _
  %v24 = vld [vmem:[%s0] sm:$0xff]
  %v25 = vld [vmem:[%s0 + $0x8] sm:$0xff]
  %v26 = vld [vmem:[%s0 + $0x10] sm:$0xff]
  %v27 = vld [vmem:[%s0 + $0x18] sm:$0xff]
  %v28 = vld [vmem:[%s0 + $0x20] sm:$0xff]
  %v29 = vld [vmem:[%s0 + $0x28] sm:$0xff]
  %v30 = vld [vmem:[%s0 + $0x30] sm:$0xff]
  %v31 = vld [vmem:[%s0 + $0x38] sm:$0xff]
  %v32 = vld [vmem:[%s0 + $0x40] sm:$0xff]
  %v33 = vld [vmem:[%s0 + $0x48] sm:$0xff]
  %v34 = vld [vmem:[%s0 + $0x50] sm:$0xff]
  %v35 = vld [vmem:[%s0 + $0x58] sm:$0xff]
  %v36 = vld [vmem:[%s0 + $0x60] sm:$0xff]
  %v37 = vld [vmem:[%s0 + $0x68] sm:$0xff]
  %v38 = vld [vmem:[%s0 + $0x70] sm:$0xff]
  %v39 = vld [vmem:[%s0 + $0x78] sm:$0xff]
  %v40 = vld [vmem:[%s0 + $0x80] sm:$0xff]
  %v41 = vld [vmem:[%s0 + $0x88] sm:$0xff]
  %v42 = vld [vmem:[%s0 + $0x90] sm:$0xff]
  %v43 = vld [vmem:[%s0 + $0x98] sm:$0xff]
  %v44 = vld [vmem:[%s0 + $0xa0] sm:$0xff]
  %v45 = vld [vmem:[%s0 + $0xa8] sm:$0xff]
  %v46 = vld [vmem:[%s0 + $0xb0] sm:$0xff]
  %v47 = vld [vmem:[%s0 + $0xb8] sm:$0xff]
  %v48 = vld [vmem:[%s0 + $0xc0] sm:$0xff]
  %v49 = vld [vmem:[%s0 + $0xc8] sm:$0xff]
  %v50 = vld [vmem:[%s0 + $0xd0] sm:$0xff]
  %v51 = vld [vmem:[%s0 + $0xd8] sm:$0xff]
  %v52 = vld [vmem:[%s0 + $0xe0] sm:$0xff]
  %v53 = vld [vmem:[%s0 + $0xe8] sm:$0xff]
  %v54 = vld [vmem:[%s0 + $0xf0] sm:$0xff]
  %v55 = vld [vmem:[%s0 + $0xf8] sm:$0xff]
  %v56 = vld [vmem:[%s0 + $0x100] sm:$0xff]
  %v57 = vld [vmem:[%s0 + $0x108] sm:$0xff]
  %v58 = vld [vmem:[%s0 + $0x110] sm:$0xff]
  %v59 = vld [vmem:[%s0 + $0x118] sm:$0xff]
  %v60 = vld [vmem:[%s0 + $0x120] sm:$0xff]
  %v61 = vld [vmem:[%s0 + $0x128] sm:$0xff]
  %v62 = vld [vmem:[%s0 + $0x130] sm:$0xff]
  %v63 = vld [vmem:[%s0 + $0x138] sm:$0xff]
  %v64 = vld [vmem:[%s0 + $0x140] sm:$0xff]
  %v65 = vld [vmem:[%s0 + $0x148] sm:$0xff]
  %v66 = vld [vmem:[%s0 + $0x150] sm:$0xff]
  %v67 = vld [vmem:[%s0 + $0x158] sm:$0xff]
  %v68 = vld [vmem:[%s0 + $0x160] sm:$0xff]
  %v69 = vld [vmem:[%s0 + $0x168] sm:$0xff]
  %v70 = vld [vmem:[%s0 + $0x170] sm:$0xff]
  %v71 = vld [vmem:[%s0 + $0x178] sm:$0xff]
  %v72 = vld [vmem:[%s0 + $0x180] sm:$0xff]
  %v73 = vld [vmem:[%s0 + $0x188] sm:$0xff]
  %v74 = vld [vmem:[%s0 + $0x190] sm:$0xff]
  %v75 = vld [vmem:[%s0 + $0x198] sm:$0xff]
  %v76 = vld [vmem:[%s0 + $0x1a0] sm:$0xff]
  %v77 = vld [vmem:[%s0 + $0x1a8] sm:$0xff]
  %v78 = vld [vmem:[%s0 + $0x1b0] sm:$0xff]
  %v79 = vld [vmem:[%s0 + $0x1b8] sm:$0xff]
  %v80 = vld [vmem:[%s0 + $0x1c0] sm:$0xff]
  %v81 = vld [vmem:[%s0 + $0x1c8] sm:$0xff]
  %v82 = vld [vmem:[%s0 + $0x1d0] sm:$0xff]
  %v83 = vld [vmem:[%s0 + $0x1d8] sm:$0xff]
  %v84 = vld [vmem:[%s0 + $0x1e0] sm:$0xff]
  %v85 = vld [vmem:[%s0 + $0x1e8] sm:$0xff]
  %v86 = vld [vmem:[%s0 + $0x1f0] sm:$0xff]
  %v87 = vld [vmem:[%s0 + $0x1f8] sm:$0xff]
  %v88 = vld [vmem:[%s0 + $0x200] sm:$0xff]
  %v89 = vld [vmem:[%s0 + $0x208] sm:$0xff]
  %v90 = vld [vmem:[%s0 + $0x210] sm:$0xff]
  %v91 = vld [vmem:[%s0 + $0x218] sm:$0xff]
  %v92 = vld [vmem:[%s0 + $0x220] sm:$0xff]
  %v93 = vld [vmem:[%s0 + $0x228] sm:$0xff]
  %v94 = vld [vmem:[%s0 + $0x230] sm:$0xff]
  %v95 = vld [vmem:[%s0 + $0x238] sm:$0xff]
  %v96 = vld [vmem:[%s0 + $0x240] sm:$0xff]
  %v97 = vld [vmem:[%s0 + $0x248] sm:$0xff]
  %v98 = vld [vmem:[%s0 + $0x250] sm:$0xff]
  %v99 = vld [vmem:[%s0 + $0x258] sm:$0xff]
  %v100 = vld [vmem:[%s0 + $0x260] sm:$0xff]
  %v101 = vld [vmem:[%s0 + $0x268] sm:$0xff]
  %v102 = vld [vmem:[%s0 + $0x270] sm:$0xff]
  %v103 = vld [vmem:[%s0 + $0x278] sm:$0xff]
  %v104 = vld [vmem:[%s0 + $0x280] sm:$0xff]
  %v105 = vld [vmem:[%s0 + $0x288] sm:$0xff]
  %v106 = vld [vmem:[%s0 + $0x290] sm:$0xff]
  %v107 = vld [vmem:[%s0 + $0x298] sm:$0xff]
  %v108 = vld [vmem:[%s0 + $0x2a0] sm:$0xff]
  %v109 = vld [vmem:[%s0 + $0x2a8] sm:$0xff]
  %v110 = vld [vmem:[%s0 + $0x2b0] sm:$0xff]
  %v111 = vld [vmem:[%s0 + $0x2b8] sm:$0xff]
  %v112 = vld [vmem:[%s0 + $0x2c0] sm:$0xff]
  %v113 = vld [vmem:[%s0 + $0x2c8] sm:$0xff]
  %v114 = vld [vmem:[%s0 + $0x2d0] sm:$0xff]
  %v115 = vld [vmem:[%s0 + $0x2d8] sm:$0xff]
  %v116 = vld [vmem:[%s0 + $0x2e0] sm:$0xff]
  %v117 = vld [vmem:[%s0 + $0x2e8] sm:$0xff]
  %v118 = vld [vmem:[%s0 + $0x2f0] sm:$0xff]
  %v119 = vld [vmem:[%s0 + $0x2f8] sm:$0xff]
  %v120 = vld [vmem:[%s0 + $0x300] sm:$0xff]
  %v121 = vld [vmem:[%s0 + $0x308] sm:$0xff]
  %v122 = vld [vmem:[%s0 + $0x310] sm:$0xff]
  %v123 = vld [vmem:[%s0 + $0x318] sm:$0xff]
  %v124 = vld [vmem:[%s0 + $0x320] sm:$0xff]
  %v125 = vld [vmem:[%s0 + $0x328] sm:$0xff]
  %v126 = vld [vmem:[%s0 + $0x330] sm:$0xff]
  %v127 = vld [vmem:[%s0 + $0x338] sm:$0xff]
  %v128 = vld [vmem:[%s0 + $0x340] sm:$0xff]
  %v129 = vld [vmem:[%s0 + $0x348] sm:$0xff]
  %v130 = vld [vmem:[%s0 + $0x350] sm:$0xff]
  %v131 = vld [vmem:[%s0 + $0x358] sm:$0xff]
  %v132 = vld [vmem:[%s0 + $0x360] sm:$0xff]
  %v133 = vld [vmem:[%s0 + $0x368] sm:$0xff]
  %v134 = vld [vmem:[%s0 + $0x370] sm:$0xff]
  %v135 = vld [vmem:[%s0 + $0x378] sm:$0xff]
  %v136 = vld [vmem:[%s0 + $0x380] sm:$0xff]
  %v137 = vld [vmem:[%s0 + $0x388] sm:$0xff]
  %v138 = vld [vmem:[%s0 + $0x390] sm:$0xff]
  %v139 = vld [vmem:[%s0 + $0x398] sm:$0xff]
  %v140 = vld [vmem:[%s0 + $0x3a0] sm:$0xff]
  %v141 = vld [vmem:[%s0 + $0x3a8] sm:$0xff]
  %v142 = vld [vmem:[%s0 + $0x3b0] sm:$0xff]
  %v143 = vld [vmem:[%s0 + $0x3b8] sm:$0xff]
  %v144 = vld [vmem:[%s0 + $0x3c0] sm:$0xff]
  %v145 = vld [vmem:[%s0 + $0x3c8] sm:$0xff]
  %v146 = vld [vmem:[%s0 + $0x3d0] sm:$0xff]
  %v147 = vld [vmem:[%s0 + $0x3d8] sm:$0xff]
  %v148 = vld [vmem:[%s0 + $0x3e0] sm:$0xff]
  %v149 = vld [vmem:[%s0 + $0x3e8] sm:$0xff]
  %v150 = vld [vmem:[%s0 + $0x3f0] sm:$0xff]
  %v151 = vld [vmem:[%s0 + $0x3f8] sm:$0xff]
  %v152 = vld [vmem:[%s0 + $0x400] sm:$0xff]
  %v153 = vld [vmem:[%s0 + $0x408] sm:$0xff]
  %v154 = vld [vmem:[%s0 + $0x410] sm:$0xff]
  %v155 = vld [vmem:[%s0 + $0x418] sm:$0xff]
  %v156 = vld [vmem:[%s0 + $0x420] sm:$0xff]
  %v157 = vld [vmem:[%s0 + $0x428] sm:$0xff]
  %v158 = vld [vmem:[%s0 + $0x430] sm:$0xff]
  %v159 = vld [vmem:[%s0 + $0x438] sm:$0xff]
  %v160 = vld [vmem:[%s0 + $0x440] sm:$0xff]
  %v161 = vld [vmem:[%s0 + $0x448] sm:$0xff]
  %v162 = vld [vmem:[%s0 + $0x450] sm:$0xff]
  %v163 = vld [vmem:[%s0 + $0x458] sm:$0xff]
  %v164 = vld [vmem:[%s0 + $0x460] sm:$0xff]
  %v165 = vld [vmem:[%s0 + $0x468] sm:$0xff]
  %v166 = vld [vmem:[%s0 + $0x470] sm:$0xff]
  %v167 = vld [vmem:[%s0 + $0x478] sm:$0xff]
  %v168 = vld [vmem:[%s1] sm:$0xff]
  %v169 = vld [vmem:[%s1 + $0x8] sm:$0xff]
  %v170 = vld [vmem:[%s1 + $0x10] sm:$0xff]
  %v171 = vld [vmem:[%s1 + $0x18] sm:$0x1]
  %vm172 = vcmask 203776
  %v174 = vsel %vm172, %v24, 0
  %v177 = vsel %vm172, %v25, 0
  %v180 = vsel %vm172, %v26, 0
  %v183 = vsel %vm172, %v27, 0
  %v186 = vsel %vm172, %v28, 0
  %v189 = vsel %vm172, %v29, 0
  %v192 = vsel %vm172, %v30, 0
  %v195 = vsel %vm172, %v31, 0
  %v198 = vsel %vm172, %v32, 0
  %v201 = vsel %vm172, %v33, 0
  %v204 = vsel %vm172, %v34, 0
  %v207 = vsel %vm172, %v35, 0
  %v210 = vsel %vm172, %v36, 0
  %v213 = vsel %vm172, %v37, 0
  %v216 = vsel %vm172, %v38, 0
  %v219 = vsel %vm172, %v39, 0
  %v222 = vsel %vm172, %v40, 0
  %v225 = vsel %vm172, %v41, 0
  %v228 = vsel %vm172, %v42, 0
  %v231 = vsel %vm172, %v43, 0
  %v234 = vsel %vm172, %v44, 0
  %v237 = vsel %vm172, %v45, 0
  %v240 = vsel %vm172, %v46, 0
  %v243 = vsel %vm172, %v47, 0
  %v246 = vsel %vm172, %v48, 0
  %v249 = vsel %vm172, %v49, 0
  %v252 = vsel %vm172, %v50, 0
  %v255 = vsel %vm172, %v51, 0
  %v258 = vsel %vm172, %v52, 0
  %v261 = vsel %vm172, %v53, 0
  %v264 = vsel %vm172, %v54, 0
  %v267 = vsel %vm172, %v55, 0
  %v270 = vsel %vm172, %v56, 0
  %v273 = vsel %vm172, %v57, 0
  %v276 = vsel %vm172, %v58, 0
  %v279 = vsel %vm172, %v59, 0
  %v282 = vsel %vm172, %v60, 0
  %v285 = vsel %vm172, %v61, 0
  %v288 = vsel %vm172, %v62, 0
  %v291 = vsel %vm172, %v63, 0
  %v294 = vsel %vm172, %v64, 0
  %v297 = vsel %vm172, %v65, 0
  %v300 = vsel %vm172, %v66, 0
  %v303 = vsel %vm172, %v67, 0
  %v306 = vsel %vm172, %v68, 0
  %v309 = vsel %vm172, %v69, 0
  %v312 = vsel %vm172, %v70, 0
  %v315 = vsel %vm172, %v71, 0
  %v318 = vsel %vm172, %v72, 0
  %v321 = vsel %vm172, %v73, 0
  %v324 = vsel %vm172, %v74, 0
  %v327 = vsel %vm172, %v75, 0
  %v330 = vsel %vm172, %v76, 0
  %v333 = vsel %vm172, %v77, 0
  %v336 = vsel %vm172, %v78, 0
  %v339 = vsel %vm172, %v79, 0
  %v342 = vsel %vm172, %v80, 0
  %v345 = vsel %vm172, %v81, 0
  %v348 = vsel %vm172, %v82, 0
  %v351 = vsel %vm172, %v83, 0
  %v354 = vsel %vm172, %v84, 0
  %v357 = vsel %vm172, %v85, 0
  %v360 = vsel %vm172, %v86, 0
  %v363 = vsel %vm172, %v87, 0
  %v366 = vsel %vm172, %v88, 0
  %v369 = vsel %vm172, %v89, 0
  %v372 = vsel %vm172, %v90, 0
  %v375 = vsel %vm172, %v91, 0
  %v378 = vsel %vm172, %v92, 0
  %v381 = vsel %vm172, %v93, 0
  %v384 = vsel %vm172, %v94, 0
  %v387 = vsel %vm172, %v95, 0
  %v390 = vsel %vm172, %v96, 0
  %v393 = vsel %vm172, %v97, 0
  %v396 = vsel %vm172, %v98, 0
  %v399 = vsel %vm172, %v99, 0
  %v402 = vsel %vm172, %v100, 0
  %v405 = vsel %vm172, %v101, 0
  %v408 = vsel %vm172, %v102, 0
  %v411 = vsel %vm172, %v103, 0
  %v414 = vsel %vm172, %v104, 0
  %v417 = vsel %vm172, %v105, 0
  %v420 = vsel %vm172, %v106, 0
  %v423 = vsel %vm172, %v107, 0
  %v426 = vsel %vm172, %v108, 0
  %v429 = vsel %vm172, %v109, 0
  %v432 = vsel %vm172, %v110, 0
  %v435 = vsel %vm172, %v111, 0
  %v438 = vsel %vm172, %v112, 0
  %v441 = vsel %vm172, %v113, 0
  %v444 = vsel %vm172, %v114, 0
  %v447 = vsel %vm172, %v115, 0
  %v450 = vsel %vm172, %v116, 0
  %v453 = vsel %vm172, %v117, 0
  %v456 = vsel %vm172, %v118, 0
  %v459 = vsel %vm172, %v119, 0
  %v462 = vsel %vm172, %v120, 0
  %v465 = vsel %vm172, %v121, 0
  %v468 = vsel %vm172, %v122, 0
  %v471 = vsel %vm172, %v123, 0
  %v474 = vsel %vm172, %v124, 0
  %v477 = vsel %vm172, %v125, 0
  %v480 = vsel %vm172, %v126, 0
  %v483 = vsel %vm172, %v127, 0
  %v486 = vsel %vm172, %v128, 0
  %v489 = vsel %vm172, %v129, 0
  %v492 = vsel %vm172, %v130, 0
  %v495 = vsel %vm172, %v131, 0
  %v498 = vsel %vm172, %v132, 0
  %v501 = vsel %vm172, %v133, 0
  %v504 = vsel %vm172, %v134, 0
  %v507 = vsel %vm172, %v135, 0
  %v510 = vsel %vm172, %v136, 0
  %v513 = vsel %vm172, %v137, 0
  %v516 = vsel %vm172, %v138, 0
  %v519 = vsel %vm172, %v139, 0
  %v522 = vsel %vm172, %v140, 0
  %v525 = vsel %vm172, %v141, 0
  %v528 = vsel %vm172, %v142, 0
  %v531 = vsel %vm172, %v143, 0
  %v534 = vsel %vm172, %v144, 0
  %v537 = vsel %vm172, %v145, 0
  %v540 = vsel %vm172, %v146, 0
  %v543 = vsel %vm172, %v147, 0
  %v546 = vsel %vm172, %v148, 0
  %v549 = vsel %vm172, %v149, 0
  %v552 = vsel %vm172, %v150, 0
  %v555 = vsel %vm172, %v151, 0
  %v558 = vsel %vm172, %v152, 0
  %v561 = vsel %vm172, %v153, 0
  %v564 = vsel %vm172, %v154, 0
  %v567 = vsel %vm172, %v155, 0
  %v570 = vsel %vm172, %v156, 0
  %v573 = vsel %vm172, %v157, 0
  %v576 = vsel %vm172, %v158, 0
  %v579 = vsel %vm172, %v159, 0
  %v582 = vsel %vm172, %v160, 0
  %v585 = vsel %vm172, %v161, 0
  %v588 = vsel %vm172, %v162, 0
  %v591 = vsel %vm172, %v163, 0
  %v594 = vsel %vm172, %v164, 0
  %v597 = vsel %vm172, %v165, 0
  %v600 = vsel %vm172, %v166, 0
  %v603 = vsel %vm172, %v167, 0
  %vm605 = vcmask 1040384
  %v607 = vsel %vm605, %v171, 0
  %609 = vmatprep.subr.mxu0 0.0
  %610 = vmatpush1.msra.mxu0 0.0
  %611 = vmatprep.subr.mxu0 0.0
  %612 = vmatpush1.msra.mxu0 0.0
  %613 = vmatprep.subr.mxu0 0.0
  %614 = vmatpush1.msra.mxu0 0.0
  %615 = vmatprep.subr.mxu0 0.0
  %616 = vmatpush1.msra.mxu0 0.0
  %617 = vmatprep.subr.mxu0 0.0
  %618 = vmatpush1.msra.mxu0 0.0
  %619 = vmatprep.subr.mxu0 0.0
  %620 = vmatpush1.msra.mxu0 0.0
  %621 = vmatprep.subr.mxu0 0.0
  %622 = vmatpush1.msra.mxu0 0.0
  %623 = vmatprep.subr.mxu0 0.0
  %624 = vmatpush1.msra.mxu0 0.0
  %625 = vmatprep.subr.mxu0 0.0
  %626 = vmatpush1.msra.mxu0 0.0
  %627 = vmatprep.subr.mxu0 0.0
  %628 = vmatpush1.msra.mxu0 0.0
  %629 = vmatprep.subr.mxu0 0.0
  %630 = vmatpush1.msra.mxu0 0.0
  %631 = vmatprep.subr.mxu0 0.0
  %632 = vmatpush1.msra.mxu0 0.0
  %633 = vmatprep.subr.mxu0 0.0
  %634 = vmatpush1.msra.mxu0 %v607
  %635 = vmatprep.subr.mxu0 0.0
  %636 = vmatpush1.msra.mxu0 %v170
  %637 = vmatprep.subr.mxu0 0.0
  %638 = vmatpush1.msra.mxu0 %v169
  %639 = vmatprep.subr.mxu0 0.0
  %640 = vmatpush1.msra.mxu0 %v168
  %641 = vmatprep.subr.mxu0 0.0
  %642 = vmatpush2.msra.mxu0 0.0
  %643 = vmatprep.subr.mxu0 0.0
  %644 = vmatpush2.msra.mxu0 0.0
  %645 = vmatprep.subr.mxu0 0.0
  %646 = vmatpush2.msra.mxu0 0.0
  %647 = vmatprep.subr.mxu0 0.0
  %648 = vmatpush2.msra.mxu0 0.0
  %649 = vmatprep.subr.mxu0 0.0
  %650 = vmatpush2.msra.mxu0 0.0
  %651 = vmatprep.subr.mxu0 0.0
  %652 = vmatpush2.msra.mxu0 0.0
  %653 = vmatprep.subr.mxu0 0.0
  %654 = vmatpush2.msra.mxu0 0.0
  %655 = vmatprep.subr.mxu0 0.0
  %656 = vmatpush2.msra.mxu0 0.0
  %657 = vmatprep.subr.mxu0 0.0
  %658 = vmatpush2.msra.mxu0 0.0
  %659 = vmatprep.subr.mxu0 0.0
  %660 = vmatpush2.msra.mxu0 0.0
  %661 = vmatprep.subr.mxu0 0.0
  %662 = vmatpush2.msra.mxu0 0.0
  %663 = vmatprep.subr.mxu0 0.0
  %664 = vmatpush2.msra.mxu0 0.0
  %665 = vmatprep.subr.mxu0 0.0
  %666 = vmatpush2.msra.mxu0 0.0
  %667 = vmatprep.subr.mxu0 0.0
  %668 = vmatpush2.msra.mxu0 0.0
  %669 = vmatprep.subr.mxu0 0.0
  %670 = vmatpush2.msra.mxu0 0.0
  %671 = vmatprep.subr.mxu0 0.0
  %672 = vmatpush2.msra.mxu0 0.0
  %673 = vmatprep.mubr.f32.mxu0 0.0
  %674 = vmatmul.mubr.f32.gmra.mxu0 %v174
  %v675 = vpop.f32.mrf.mxu0
  %v676 = vadd.f32 0.0, %v675
  %v677 = vpop.f32.mrf.mxu0
  %678 = vmatprep.mubr.f32.mxu0 0.0
  %679 = vmatmul.mubr.f32.gmra.mxu0 %v177
  %v680 = vpop.f32.mrf.mxu0
  %v681 = vadd.f32 0.0, %v680
  %v682 = vpop.f32.mrf.mxu0
  %683 = vmatprep.mubr.f32.mxu0 0.0
  %684 = vmatmul.mubr.f32.gmra.mxu0 %v180
  %v685 = vpop.f32.mrf.mxu0
  %v686 = vadd.f32 0.0, %v685
  %v687 = vpop.f32.mrf.mxu0
  %688 = vmatprep.mubr.f32.mxu0 0.0
  %689 = vmatmul.mubr.f32.gmra.mxu0 %v183
  %v690 = vpop.f32.mrf.mxu0
  %v691 = vadd.f32 0.0, %v690
  %v692 = vpop.f32.mrf.mxu0
  %693 = vmatprep.mubr.f32.mxu0 0.0
  %694 = vmatmul.mubr.f32.gmra.mxu0 %v186
  %v695 = vpop.f32.mrf.mxu0
  %v696 = vadd.f32 0.0, %v695
  %v697 = vpop.f32.mrf.mxu0
  %698 = vmatprep.mubr.f32.mxu0 0.0
  %699 = vmatmul.mubr.f32.gmra.mxu0 %v189
  %v700 = vpop.f32.mrf.mxu0
  %v701 = vadd.f32 0.0, %v700
  %v702 = vpop.f32.mrf.mxu0
  %703 = vmatprep.mubr.f32.mxu0 0.0
  %704 = vmatmul.mubr.f32.gmra.mxu0 %v192
  %v705 = vpop.f32.mrf.mxu0
  %v706 = vadd.f32 0.0, %v705
  %v707 = vpop.f32.mrf.mxu0
  %708 = vmatprep.mubr.f32.mxu0 0.0
  %709 = vmatmul.mubr.f32.gmra.mxu0 %v195
  %v710 = vpop.f32.mrf.mxu0
  %v711 = vadd.f32 0.0, %v710
  %v712 = vpop.f32.mrf.mxu0
  %713 = vmatprep.mubr.f32.mxu0 0.0
  %714 = vmatmul.mubr.f32.gmra.mxu0 %v198
  %v715 = vpop.f32.mrf.mxu0
  %v716 = vadd.f32 0.0, %v715
  %v717 = vpop.f32.mrf.mxu0
  %718 = vmatprep.mubr.f32.mxu0 0.0
  %719 = vmatmul.mubr.f32.gmra.mxu0 %v201
  %v720 = vpop.f32.mrf.mxu0
  %v721 = vadd.f32 0.0, %v720
  %v722 = vpop.f32.mrf.mxu0
  %723 = vmatprep.mubr.f32.mxu0 0.0
  %724 = vmatmul.mubr.f32.gmra.mxu0 %v204
  %v725 = vpop.f32.mrf.mxu0
  %v726 = vadd.f32 0.0, %v725
  %v727 = vpop.f32.mrf.mxu0
  %728 = vmatprep.mubr.f32.mxu0 0.0
  %729 = vmatmul.mubr.f32.gmra.mxu0 %v207
  %v730 = vpop.f32.mrf.mxu0
  %v731 = vadd.f32 0.0, %v730
  %v732 = vpop.f32.mrf.mxu0
  %733 = vmatprep.mubr.f32.mxu0 0.0
  %734 = vmatmul.mubr.f32.gmra.mxu0 %v210
  %v735 = vpop.f32.mrf.mxu0
  %v736 = vadd.f32 0.0, %v735
  %v737 = vpop.f32.mrf.mxu0
  %738 = vmatprep.mubr.f32.mxu0 0.0
  %739 = vmatmul.mubr.f32.gmra.mxu0 %v213
  %v740 = vpop.f32.mrf.mxu0
  %v741 = vadd.f32 0.0, %v740
  %v742 = vpop.f32.mrf.mxu0
  %743 = vmatprep.mubr.f32.mxu0 0.0
  %744 = vmatmul.mubr.f32.gmra.mxu0 %v216
  %v745 = vpop.f32.mrf.mxu0
  %v746 = vadd.f32 0.0, %v745
  %v747 = vpop.f32.mrf.mxu0
  %748 = vmatprep.mubr.f32.mxu0 0.0
  %749 = vmatmul.mubr.f32.gmra.mxu0 %v219
  %v750 = vpop.f32.mrf.mxu0
  %v751 = vadd.f32 0.0, %v750
  %v752 = vpop.f32.mrf.mxu0
  %753 = vmatprep.mubr.f32.mxu0 0.0
  %754 = vmatmul.mubr.f32.gmra.mxu0 %v222
  %v755 = vpop.f32.mrf.mxu0
  %v756 = vadd.f32 0.0, %v755
  %v757 = vpop.f32.mrf.mxu0
  %758 = vmatprep.mubr.f32.mxu0 0.0
  %759 = vmatmul.mubr.f32.gmra.mxu0 %v225
  %v760 = vpop.f32.mrf.mxu0
  %v761 = vadd.f32 0.0, %v760
  %v762 = vpop.f32.mrf.mxu0
  %763 = vmatprep.mubr.f32.mxu0 0.0
  %764 = vmatmul.mubr.f32.gmra.mxu0 %v228
  %v765 = vpop.f32.mrf.mxu0
  %v766 = vadd.f32 0.0, %v765
  %v767 = vpop.f32.mrf.mxu0
  %768 = vmatprep.mubr.f32.mxu0 0.0
  %769 = vmatmul.mubr.f32.gmra.mxu0 %v231
  %v770 = vpop.f32.mrf.mxu0
  %v771 = vadd.f32 0.0, %v770
  %v772 = vpop.f32.mrf.mxu0
  %773 = vmatprep.mubr.f32.mxu0 0.0
  %774 = vmatmul.mubr.f32.gmra.mxu0 %v234
  %v775 = vpop.f32.mrf.mxu0
  %v776 = vadd.f32 0.0, %v775
  %v777 = vpop.f32.mrf.mxu0
  %778 = vmatprep.mubr.f32.mxu0 0.0
  %779 = vmatmul.mubr.f32.gmra.mxu0 %v237
  %v780 = vpop.f32.mrf.mxu0
  %v781 = vadd.f32 0.0, %v780
  %v782 = vpop.f32.mrf.mxu0
  %783 = vmatprep.mubr.f32.mxu0 0.0
  %784 = vmatmul.mubr.f32.gmra.mxu0 %v240
  %v785 = vpop.f32.mrf.mxu0
  %v786 = vadd.f32 0.0, %v785
  %v787 = vpop.f32.mrf.mxu0
  %788 = vmatprep.mubr.f32.mxu0 0.0
  %789 = vmatmul.mubr.f32.gmra.mxu0 %v243
  %v790 = vpop.f32.mrf.mxu0
  %v791 = vadd.f32 0.0, %v790
  %v792 = vpop.f32.mrf.mxu0
  %793 = vmatprep.mubr.f32.mxu0 0.0
  %794 = vmatmul.mubr.f32.gmra.mxu0 %v246
  %v795 = vpop.f32.mrf.mxu0
  %v796 = vadd.f32 0.0, %v795
  %v797 = vpop.f32.mrf.mxu0
  %798 = vmatprep.mubr.f32.mxu0 0.0
  %799 = vmatmul.mubr.f32.gmra.mxu0 %v249
  %v800 = vpop.f32.mrf.mxu0
  %v801 = vadd.f32 0.0, %v800
  %v802 = vpop.f32.mrf.mxu0
  %803 = vmatprep.mubr.f32.mxu0 0.0
  %804 = vmatmul.mubr.f32.gmra.mxu0 %v252
  %v805 = vpop.f32.mrf.mxu0
  %v806 = vadd.f32 0.0, %v805
  %v807 = vpop.f32.mrf.mxu0
  %808 = vmatprep.mubr.f32.mxu0 0.0
  %809 = vmatmul.mubr.f32.gmra.mxu0 %v255
  %v810 = vpop.f32.mrf.mxu0
  %v811 = vadd.f32 0.0, %v810
  %v812 = vpop.f32.mrf.mxu0
  %813 = vmatprep.mubr.f32.mxu0 0.0
  %814 = vmatmul.mubr.f32.gmra.mxu0 %v258
  %v815 = vpop.f32.mrf.mxu0
  %v816 = vadd.f32 0.0, %v815
  %v817 = vpop.f32.mrf.mxu0
  %818 = vmatprep.mubr.f32.mxu0 0.0
  %819 = vmatmul.mubr.f32.gmra.mxu0 %v261
  %v820 = vpop.f32.mrf.mxu0
  %v821 = vadd.f32 0.0, %v820
  %v822 = vpop.f32.mrf.mxu0
  %823 = vmatprep.mubr.f32.mxu0 0.0
  %824 = vmatmul.mubr.f32.gmra.mxu0 %v264
  %v825 = vpop.f32.mrf.mxu0
  %v826 = vadd.f32 0.0, %v825
  %v827 = vpop.f32.mrf.mxu0
  %828 = vmatprep.mubr.f32.mxu0 0.0
  %829 = vmatmul.mubr.f32.gmra.mxu0 %v267
  %v830 = vpop.f32.mrf.mxu0
  %v831 = vadd.f32 0.0, %v830
  %v832 = vpop.f32.mrf.mxu0
  %833 = vmatprep.mubr.f32.mxu0 0.0
  %834 = vmatmul.mubr.f32.gmra.mxu0 %v270
  %v835 = vpop.f32.mrf.mxu0
  %v836 = vadd.f32 0.0, %v835
  %v837 = vpop.f32.mrf.mxu0
  %838 = vmatprep.mubr.f32.mxu0 0.0
  %839 = vmatmul.mubr.f32.gmra.mxu0 %v273
  %v840 = vpop.f32.mrf.mxu0
  %v841 = vadd.f32 0.0, %v840
  %v842 = vpop.f32.mrf.mxu0
  %843 = vmatprep.mubr.f32.mxu0 0.0
  %844 = vmatmul.mubr.f32.gmra.mxu0 %v276
  %v845 = vpop.f32.mrf.mxu0
  %v846 = vadd.f32 0.0, %v845
  %v847 = vpop.f32.mrf.mxu0
  %848 = vmatprep.mubr.f32.mxu0 0.0
  %849 = vmatmul.mubr.f32.gmra.mxu0 %v279
  %v850 = vpop.f32.mrf.mxu0
  %v851 = vadd.f32 0.0, %v850
  %v852 = vpop.f32.mrf.mxu0
  %853 = vmatprep.mubr.f32.mxu0 0.0
  %854 = vmatmul.mubr.f32.gmra.mxu0 %v282
  %v855 = vpop.f32.mrf.mxu0
  %v856 = vadd.f32 0.0, %v855
  %v857 = vpop.f32.mrf.mxu0
  %858 = vmatprep.mubr.f32.mxu0 0.0
  %859 = vmatmul.mubr.f32.gmra.mxu0 %v285
  %v860 = vpop.f32.mrf.mxu0
  %v861 = vadd.f32 0.0, %v860
  %v862 = vpop.f32.mrf.mxu0
  %863 = vmatprep.mubr.f32.mxu0 0.0
  %864 = vmatmul.mubr.f32.gmra.mxu0 %v288
  %v865 = vpop.f32.mrf.mxu0
  %v866 = vadd.f32 0.0, %v865
  %v867 = vpop.f32.mrf.mxu0
  %868 = vmatprep.mubr.f32.mxu0 0.0
  %869 = vmatmul.mubr.f32.gmra.mxu0 %v291
  %v870 = vpop.f32.mrf.mxu0
  %v871 = vadd.f32 0.0, %v870
  %v872 = vpop.f32.mrf.mxu0
  %873 = vmatprep.mubr.f32.mxu0 0.0
  %874 = vmatmul.mubr.f32.gmra.mxu0 %v294
  %v875 = vpop.f32.mrf.mxu0
  %v876 = vadd.f32 0.0, %v875
  %v877 = vpop.f32.mrf.mxu0
  %878 = vmatprep.mubr.f32.mxu0 0.0
  %879 = vmatmul.mubr.f32.gmra.mxu0 %v297
  %v880 = vpop.f32.mrf.mxu0
  %v881 = vadd.f32 0.0, %v880
  %v882 = vpop.f32.mrf.mxu0
  %883 = vmatprep.mubr.f32.mxu0 0.0
  %884 = vmatmul.mubr.f32.gmra.mxu0 %v300
  %v885 = vpop.f32.mrf.mxu0
  %v886 = vadd.f32 0.0, %v885
  %v887 = vpop.f32.mrf.mxu0
  %888 = vmatprep.mubr.f32.mxu0 0.0
  %889 = vmatmul.mubr.f32.gmra.mxu0 %v303
  %v890 = vpop.f32.mrf.mxu0
  %v891 = vadd.f32 0.0, %v890
  %v892 = vpop.f32.mrf.mxu0
  %893 = vmatprep.mubr.f32.mxu0 0.0
  %894 = vmatmul.mubr.f32.gmra.mxu0 %v306
  %v895 = vpop.f32.mrf.mxu0
  %v896 = vadd.f32 0.0, %v895
  %v897 = vpop.f32.mrf.mxu0
  %898 = vmatprep.mubr.f32.mxu0 0.0
  %899 = vmatmul.mubr.f32.gmra.mxu0 %v309
  %v900 = vpop.f32.mrf.mxu0
  %v901 = vadd.f32 0.0, %v900
  %v902 = vpop.f32.mrf.mxu0
  %903 = vmatprep.mubr.f32.mxu0 0.0
  %904 = vmatmul.mubr.f32.gmra.mxu0 %v312
  %v905 = vpop.f32.mrf.mxu0
  %v906 = vadd.f32 0.0, %v905
  %v907 = vpop.f32.mrf.mxu0
  %908 = vmatprep.mubr.f32.mxu0 0.0
  %909 = vmatmul.mubr.f32.gmra.mxu0 %v315
  %v910 = vpop.f32.mrf.mxu0
  %v911 = vadd.f32 0.0, %v910
  %v912 = vpop.f32.mrf.mxu0
  %913 = vmatprep.mubr.f32.mxu0 0.0
  %914 = vmatmul.mubr.f32.gmra.mxu0 %v318
  %v915 = vpop.f32.mrf.mxu0
  %v916 = vadd.f32 0.0, %v915
  %v917 = vpop.f32.mrf.mxu0
  %918 = vmatprep.mubr.f32.mxu0 0.0
  %919 = vmatmul.mubr.f32.gmra.mxu0 %v321
  %v920 = vpop.f32.mrf.mxu0
  %v921 = vadd.f32 0.0, %v920
  %v922 = vpop.f32.mrf.mxu0
  %923 = vmatprep.mubr.f32.mxu0 0.0
  %924 = vmatmul.mubr.f32.gmra.mxu0 %v324
  %v925 = vpop.f32.mrf.mxu0
  %v926 = vadd.f32 0.0, %v925
  %v927 = vpop.f32.mrf.mxu0
  %928 = vmatprep.mubr.f32.mxu0 0.0
  %929 = vmatmul.mubr.f32.gmra.mxu0 %v327
  %v930 = vpop.f32.mrf.mxu0
  %v931 = vadd.f32 0.0, %v930
  %v932 = vpop.f32.mrf.mxu0
  %933 = vmatprep.mubr.f32.mxu0 0.0
  %934 = vmatmul.mubr.f32.gmra.mxu0 %v330
  %v935 = vpop.f32.mrf.mxu0
  %v936 = vadd.f32 0.0, %v935
  %v937 = vpop.f32.mrf.mxu0
  %938 = vmatprep.mubr.f32.mxu0 0.0
  %939 = vmatmul.mubr.f32.gmra.mxu0 %v333
  %v940 = vpop.f32.mrf.mxu0
  %v941 = vadd.f32 0.0, %v940
  %v942 = vpop.f32.mrf.mxu0
  %943 = vmatprep.mubr.f32.mxu0 0.0
  %944 = vmatmul.mubr.f32.gmra.mxu0 %v336
  %v945 = vpop.f32.mrf.mxu0
  %v946 = vadd.f32 0.0, %v945
  %v947 = vpop.f32.mrf.mxu0
  %948 = vmatprep.mubr.f32.mxu0 0.0
  %949 = vmatmul.mubr.f32.gmra.mxu0 %v339
  %v950 = vpop.f32.mrf.mxu0
  %v951 = vadd.f32 0.0, %v950
  %v952 = vpop.f32.mrf.mxu0
  %953 = vmatprep.mubr.f32.mxu0 0.0
  %954 = vmatmul.mubr.f32.gmra.mxu0 %v342
  %v955 = vpop.f32.mrf.mxu0
  %v956 = vadd.f32 0.0, %v955
  %v957 = vpop.f32.mrf.mxu0
  %958 = vmatprep.mubr.f32.mxu0 0.0
  %959 = vmatmul.mubr.f32.gmra.mxu0 %v345
  %v960 = vpop.f32.mrf.mxu0
  %v961 = vadd.f32 0.0, %v960
  %v962 = vpop.f32.mrf.mxu0
  %963 = vmatprep.mubr.f32.mxu0 0.0
  %964 = vmatmul.mubr.f32.gmra.mxu0 %v348
  %v965 = vpop.f32.mrf.mxu0
  %v966 = vadd.f32 0.0, %v965
  %v967 = vpop.f32.mrf.mxu0
  %968 = vmatprep.mubr.f32.mxu0 0.0
  %969 = vmatmul.mubr.f32.gmra.mxu0 %v351
  %v970 = vpop.f32.mrf.mxu0
  %v971 = vadd.f32 0.0, %v970
  %v972 = vpop.f32.mrf.mxu0
  %973 = vmatprep.mubr.f32.mxu0 0.0
  %974 = vmatmul.mubr.f32.gmra.mxu0 %v354
  %v975 = vpop.f32.mrf.mxu0
  %v976 = vadd.f32 0.0, %v975
  %v977 = vpop.f32.mrf.mxu0
  %978 = vmatprep.mubr.f32.mxu0 0.0
  %979 = vmatmul.mubr.f32.gmra.mxu0 %v357
  %v980 = vpop.f32.mrf.mxu0
  %v981 = vadd.f32 0.0, %v980
  %v982 = vpop.f32.mrf.mxu0
  %983 = vmatprep.mubr.f32.mxu0 0.0
  %984 = vmatmul.mubr.f32.gmra.mxu0 %v360
  %v985 = vpop.f32.mrf.mxu0
  %v986 = vadd.f32 0.0, %v985
  %v987 = vpop.f32.mrf.mxu0
  %988 = vmatprep.mubr.f32.mxu0 0.0
  %989 = vmatmul.mubr.f32.gmra.mxu0 %v363
  %v990 = vpop.f32.mrf.mxu0
  %v991 = vadd.f32 0.0, %v990
  %v992 = vpop.f32.mrf.mxu0
  %993 = vmatprep.mubr.f32.mxu0 0.0
  %994 = vmatmul.mubr.f32.gmra.mxu0 %v366
  %v995 = vpop.f32.mrf.mxu0
  %v996 = vadd.f32 0.0, %v995
  %v997 = vpop.f32.mrf.mxu0
  %998 = vmatprep.mubr.f32.mxu0 0.0
  %999 = vmatmul.mubr.f32.gmra.mxu0 %v369
  %v1000 = vpop.f32.mrf.mxu0
  %v1001 = vadd.f32 0.0, %v1000
  %v1002 = vpop.f32.mrf.mxu0
  %1003 = vmatprep.mubr.f32.mxu0 0.0
  %1004 = vmatmul.mubr.f32.gmra.mxu0 %v372
  %v1005 = vpop.f32.mrf.mxu0
  %v1006 = vadd.f32 0.0, %v1005
  %v1007 = vpop.f32.mrf.mxu0
  %1008 = vmatprep.mubr.f32.mxu0 0.0
  %1009 = vmatmul.mubr.f32.gmra.mxu0 %v375
  %v1010 = vpop.f32.mrf.mxu0
  %v1011 = vadd.f32 0.0, %v1010
  %v1012 = vpop.f32.mrf.mxu0
  %1013 = vmatprep.mubr.f32.mxu0 0.0
  %1014 = vmatmul.mubr.f32.gmra.mxu0 %v378
  %v1015 = vpop.f32.mrf.mxu0
  %v1016 = vadd.f32 0.0, %v1015
  %v1017 = vpop.f32.mrf.mxu0
  %1018 = vmatprep.mubr.f32.mxu0 0.0
  %1019 = vmatmul.mubr.f32.gmra.mxu0 %v381
  %v1020 = vpop.f32.mrf.mxu0
  %v1021 = vadd.f32 0.0, %v1020
  %v1022 = vpop.f32.mrf.mxu0
  %1023 = vmatprep.mubr.f32.mxu0 0.0
  %1024 = vmatmul.mubr.f32.gmra.mxu0 %v384
  %v1025 = vpop.f32.mrf.mxu0
  %v1026 = vadd.f32 0.0, %v1025
  %v1027 = vpop.f32.mrf.mxu0
  %1028 = vmatprep.mubr.f32.mxu0 0.0
  %1029 = vmatmul.mubr.f32.gmra.mxu0 %v387
  %v1030 = vpop.f32.mrf.mxu0
  %v1031 = vadd.f32 0.0, %v1030
  %v1032 = vpop.f32.mrf.mxu0
  %1033 = vmatprep.mubr.f32.mxu0 0.0
  %1034 = vmatmul.mubr.f32.gmra.mxu0 %v390
  %v1035 = vpop.f32.mrf.mxu0
  %v1036 = vadd.f32 0.0, %v1035
  %v1037 = vpop.f32.mrf.mxu0
  %1038 = vmatprep.mubr.f32.mxu0 0.0
  %1039 = vmatmul.mubr.f32.gmra.mxu0 %v393
  %v1040 = vpop.f32.mrf.mxu0
  %v1041 = vadd.f32 0.0, %v1040
  %v1042 = vpop.f32.mrf.mxu0
  %1043 = vmatprep.mubr.f32.mxu0 0.0
  %1044 = vmatmul.mubr.f32.gmra.mxu0 %v396
  %v1045 = vpop.f32.mrf.mxu0
  %v1046 = vadd.f32 0.0, %v1045
  %v1047 = vpop.f32.mrf.mxu0
  %1048 = vmatprep.mubr.f32.mxu0 0.0
  %1049 = vmatmul.mubr.f32.gmra.mxu0 %v399
  %v1050 = vpop.f32.mrf.mxu0
  %v1051 = vadd.f32 0.0, %v1050
  %v1052 = vpop.f32.mrf.mxu0
  %1053 = vmatprep.mubr.f32.mxu0 0.0
  %1054 = vmatmul.mubr.f32.gmra.mxu0 %v402
  %v1055 = vpop.f32.mrf.mxu0
  %v1056 = vadd.f32 0.0, %v1055
  %v1057 = vpop.f32.mrf.mxu0
  %1058 = vmatprep.mubr.f32.mxu0 0.0
  %1059 = vmatmul.mubr.f32.gmra.mxu0 %v405
  %v1060 = vpop.f32.mrf.mxu0
  %v1061 = vadd.f32 0.0, %v1060
  %v1062 = vpop.f32.mrf.mxu0
  %1063 = vmatprep.mubr.f32.mxu0 0.0
  %1064 = vmatmul.mubr.f32.gmra.mxu0 %v408
  %v1065 = vpop.f32.mrf.mxu0
  %v1066 = vadd.f32 0.0, %v1065
  %v1067 = vpop.f32.mrf.mxu0
  %1068 = vmatprep.mubr.f32.mxu0 0.0
  %1069 = vmatmul.mubr.f32.gmra.mxu0 %v411
  %v1070 = vpop.f32.mrf.mxu0
  %v1071 = vadd.f32 0.0, %v1070
  %v1072 = vpop.f32.mrf.mxu0
  %1073 = vmatprep.mubr.f32.mxu0 0.0
  %1074 = vmatmul.mubr.f32.gmra.mxu0 %v414
  %v1075 = vpop.f32.mrf.mxu0
  %v1076 = vadd.f32 0.0, %v1075
  %v1077 = vpop.f32.mrf.mxu0
  %1078 = vmatprep.mubr.f32.mxu0 0.0
  %1079 = vmatmul.mubr.f32.gmra.mxu0 %v417
  %v1080 = vpop.f32.mrf.mxu0
  %v1081 = vadd.f32 0.0, %v1080
  %v1082 = vpop.f32.mrf.mxu0
  %1083 = vmatprep.mubr.f32.mxu0 0.0
  %1084 = vmatmul.mubr.f32.gmra.mxu0 %v420
  %v1085 = vpop.f32.mrf.mxu0
  %v1086 = vadd.f32 0.0, %v1085
  %v1087 = vpop.f32.mrf.mxu0
  %1088 = vmatprep.mubr.f32.mxu0 0.0
  %1089 = vmatmul.mubr.f32.gmra.mxu0 %v423
  %v1090 = vpop.f32.mrf.mxu0
  %v1091 = vadd.f32 0.0, %v1090
  %v1092 = vpop.f32.mrf.mxu0
  %1093 = vmatprep.mubr.f32.mxu0 0.0
  %1094 = vmatmul.mubr.f32.gmra.mxu0 %v426
  %v1095 = vpop.f32.mrf.mxu0
  %v1096 = vadd.f32 0.0, %v1095
  %v1097 = vpop.f32.mrf.mxu0
  %1098 = vmatprep.mubr.f32.mxu0 0.0
  %1099 = vmatmul.mubr.f32.gmra.mxu0 %v429
  %v1100 = vpop.f32.mrf.mxu0
  %v1101 = vadd.f32 0.0, %v1100
  %v1102 = vpop.f32.mrf.mxu0
  %1103 = vmatprep.mubr.f32.mxu0 0.0
  %1104 = vmatmul.mubr.f32.gmra.mxu0 %v432
  %v1105 = vpop.f32.mrf.mxu0
  %v1106 = vadd.f32 0.0, %v1105
  %v1107 = vpop.f32.mrf.mxu0
  %1108 = vmatprep.mubr.f32.mxu0 0.0
  %1109 = vmatmul.mubr.f32.gmra.mxu0 %v435
  %v1110 = vpop.f32.mrf.mxu0
  %v1111 = vadd.f32 0.0, %v1110
  %v1112 = vpop.f32.mrf.mxu0
  %1113 = vmatprep.mubr.f32.mxu0 0.0
  %1114 = vmatmul.mubr.f32.gmra.mxu0 %v438
  %v1115 = vpop.f32.mrf.mxu0
  %v1116 = vadd.f32 0.0, %v1115
  %v1117 = vpop.f32.mrf.mxu0
  %1118 = vmatprep.mubr.f32.mxu0 0.0
  %1119 = vmatmul.mubr.f32.gmra.mxu0 %v441
  %v1120 = vpop.f32.mrf.mxu0
  %v1121 = vadd.f32 0.0, %v1120
  %v1122 = vpop.f32.mrf.mxu0
  %1123 = vmatprep.mubr.f32.mxu0 0.0
  %1124 = vmatmul.mubr.f32.gmra.mxu0 %v444
  %v1125 = vpop.f32.mrf.mxu0
  %v1126 = vadd.f32 0.0, %v1125
  %v1127 = vpop.f32.mrf.mxu0
  %1128 = vmatprep.mubr.f32.mxu0 0.0
  %1129 = vmatmul.mubr.f32.gmra.mxu0 %v447
  %v1130 = vpop.f32.mrf.mxu0
  %v1131 = vadd.f32 0.0, %v1130
  %v1132 = vpop.f32.mrf.mxu0
  %1133 = vmatprep.mubr.f32.mxu0 0.0
  %1134 = vmatmul.mubr.f32.gmra.mxu0 %v450
  %v1135 = vpop.f32.mrf.mxu0
  %v1136 = vadd.f32 0.0, %v1135
  %v1137 = vpop.f32.mrf.mxu0
  %1138 = vmatprep.mubr.f32.mxu0 0.0
  %1139 = vmatmul.mubr.f32.gmra.mxu0 %v453
  %v1140 = vpop.f32.mrf.mxu0
  %v1141 = vadd.f32 0.0, %v1140
  %v1142 = vpop.f32.mrf.mxu0
  %1143 = vmatprep.mubr.f32.mxu0 0.0
  %1144 = vmatmul.mubr.f32.gmra.mxu0 %v456
  %v1145 = vpop.f32.mrf.mxu0
  %v1146 = vadd.f32 0.0, %v1145
  %v1147 = vpop.f32.mrf.mxu0
  %1148 = vmatprep.mubr.f32.mxu0 0.0
  %1149 = vmatmul.mubr.f32.gmra.mxu0 %v459
  %v1150 = vpop.f32.mrf.mxu0
  %v1151 = vadd.f32 0.0, %v1150
  %v1152 = vpop.f32.mrf.mxu0
  %1153 = vmatprep.mubr.f32.mxu0 0.0
  %1154 = vmatmul.mubr.f32.gmra.mxu0 %v462
  %v1155 = vpop.f32.mrf.mxu0
  %v1156 = vadd.f32 0.0, %v1155
  %v1157 = vpop.f32.mrf.mxu0
  %1158 = vmatprep.mubr.f32.mxu0 0.0
  %1159 = vmatmul.mubr.f32.gmra.mxu0 %v465
  %v1160 = vpop.f32.mrf.mxu0
  %v1161 = vadd.f32 0.0, %v1160
  %v1162 = vpop.f32.mrf.mxu0
  %1163 = vmatprep.mubr.f32.mxu0 0.0
  %1164 = vmatmul.mubr.f32.gmra.mxu0 %v468
  %v1165 = vpop.f32.mrf.mxu0
  %v1166 = vadd.f32 0.0, %v1165
  %v1167 = vpop.f32.mrf.mxu0
  %1168 = vmatprep.mubr.f32.mxu0 0.0
  %1169 = vmatmul.mubr.f32.gmra.mxu0 %v471
  %v1170 = vpop.f32.mrf.mxu0
  %v1171 = vadd.f32 0.0, %v1170
  %v1172 = vpop.f32.mrf.mxu0
  %1173 = vmatprep.mubr.f32.mxu0 0.0
  %1174 = vmatmul.mubr.f32.gmra.mxu0 %v474
  %v1175 = vpop.f32.mrf.mxu0
  %v1176 = vadd.f32 0.0, %v1175
  %v1177 = vpop.f32.mrf.mxu0
  %1178 = vmatprep.mubr.f32.mxu0 0.0
  %1179 = vmatmul.mubr.f32.gmra.mxu0 %v477
  %v1180 = vpop.f32.mrf.mxu0
  %v1181 = vadd.f32 0.0, %v1180
  %v1182 = vpop.f32.mrf.mxu0
  %1183 = vmatprep.mubr.f32.mxu0 0.0
  %1184 = vmatmul.mubr.f32.gmra.mxu0 %v480
  %v1185 = vpop.f32.mrf.mxu0
  %v1186 = vadd.f32 0.0, %v1185
  %v1187 = vpop.f32.mrf.mxu0
  %1188 = vmatprep.mubr.f32.mxu0 0.0
  %1189 = vmatmul.mubr.f32.gmra.mxu0 %v483
  %v1190 = vpop.f32.mrf.mxu0
  %v1191 = vadd.f32 0.0, %v1190
  %v1192 = vpop.f32.mrf.mxu0
  %1193 = vmatprep.mubr.f32.mxu0 0.0
  %1194 = vmatmul.mubr.f32.gmra.mxu0 %v486
  %v1195 = vpop.f32.mrf.mxu0
  %v1196 = vadd.f32 0.0, %v1195
  %v1197 = vpop.f32.mrf.mxu0
  %1198 = vmatprep.mubr.f32.mxu0 0.0
  %1199 = vmatmul.mubr.f32.gmra.mxu0 %v489
  %v1200 = vpop.f32.mrf.mxu0
  %v1201 = vadd.f32 0.0, %v1200
  %v1202 = vpop.f32.mrf.mxu0
  %1203 = vmatprep.mubr.f32.mxu0 0.0
  %1204 = vmatmul.mubr.f32.gmra.mxu0 %v492
  %v1205 = vpop.f32.mrf.mxu0
  %v1206 = vadd.f32 0.0, %v1205
  %v1207 = vpop.f32.mrf.mxu0
  %1208 = vmatprep.mubr.f32.mxu0 0.0
  %1209 = vmatmul.mubr.f32.gmra.mxu0 %v495
  %v1210 = vpop.f32.mrf.mxu0
  %v1211 = vadd.f32 0.0, %v1210
  %v1212 = vpop.f32.mrf.mxu0
  %1213 = vmatprep.mubr.f32.mxu0 0.0
  %1214 = vmatmul.mubr.f32.gmra.mxu0 %v498
  %v1215 = vpop.f32.mrf.mxu0
  %v1216 = vadd.f32 0.0, %v1215
  %v1217 = vpop.f32.mrf.mxu0
  %1218 = vmatprep.mubr.f32.mxu0 0.0
  %1219 = vmatmul.mubr.f32.gmra.mxu0 %v501
  %v1220 = vpop.f32.mrf.mxu0
  %v1221 = vadd.f32 0.0, %v1220
  %v1222 = vpop.f32.mrf.mxu0
  %1223 = vmatprep.mubr.f32.mxu0 0.0
  %1224 = vmatmul.mubr.f32.gmra.mxu0 %v504
  %v1225 = vpop.f32.mrf.mxu0
  %v1226 = vadd.f32 0.0, %v1225
  %v1227 = vpop.f32.mrf.mxu0
  %1228 = vmatprep.mubr.f32.mxu0 0.0
  %1229 = vmatmul.mubr.f32.gmra.mxu0 %v507
  %v1230 = vpop.f32.mrf.mxu0
  %v1231 = vadd.f32 0.0, %v1230
  %v1232 = vpop.f32.mrf.mxu0
  %1233 = vmatprep.mubr.f32.mxu0 0.0
  %1234 = vmatmul.mubr.f32.gmra.mxu0 %v510
  %v1235 = vpop.f32.mrf.mxu0
  %v1236 = vadd.f32 0.0, %v1235
  %v1237 = vpop.f32.mrf.mxu0
  %1238 = vmatprep.mubr.f32.mxu0 0.0
  %1239 = vmatmul.mubr.f32.gmra.mxu0 %v513
  %v1240 = vpop.f32.mrf.mxu0
  %v1241 = vadd.f32 0.0, %v1240
  %v1242 = vpop.f32.mrf.mxu0
  %1243 = vmatprep.mubr.f32.mxu0 0.0
  %1244 = vmatmul.mubr.f32.gmra.mxu0 %v516
  %v1245 = vpop.f32.mrf.mxu0
  %v1246 = vadd.f32 0.0, %v1245
  %v1247 = vpop.f32.mrf.mxu0
  %1248 = vmatprep.mubr.f32.mxu0 0.0
  %1249 = vmatmul.mubr.f32.gmra.mxu0 %v519
  %v1250 = vpop.f32.mrf.mxu0
  %v1251 = vadd.f32 0.0, %v1250
  %v1252 = vpop.f32.mrf.mxu0
  %1253 = vmatprep.mubr.f32.mxu0 0.0
  %1254 = vmatmul.mubr.f32.gmra.mxu0 %v522
  %v1255 = vpop.f32.mrf.mxu0
  %v1256 = vadd.f32 0.0, %v1255
  %v1257 = vpop.f32.mrf.mxu0
  %1258 = vmatprep.mubr.f32.mxu0 0.0
  %1259 = vmatmul.mubr.f32.gmra.mxu0 %v525
  %v1260 = vpop.f32.mrf.mxu0
  %v1261 = vadd.f32 0.0, %v1260
  %v1262 = vpop.f32.mrf.mxu0
  %1263 = vmatprep.mubr.f32.mxu0 0.0
  %1264 = vmatmul.mubr.f32.gmra.mxu0 %v528
  %v1265 = vpop.f32.mrf.mxu0
  %v1266 = vadd.f32 0.0, %v1265
  %v1267 = vpop.f32.mrf.mxu0
  %1268 = vmatprep.mubr.f32.mxu0 0.0
  %1269 = vmatmul.mubr.f32.gmra.mxu0 %v531
  %v1270 = vpop.f32.mrf.mxu0
  %v1271 = vadd.f32 0.0, %v1270
  %v1272 = vpop.f32.mrf.mxu0
  %1273 = vmatprep.mubr.f32.mxu0 0.0
  %1274 = vmatmul.mubr.f32.gmra.mxu0 %v534
  %v1275 = vpop.f32.mrf.mxu0
  %v1276 = vadd.f32 0.0, %v1275
  %v1277 = vpop.f32.mrf.mxu0
  %1278 = vmatprep.mubr.f32.mxu0 0.0
  %1279 = vmatmul.mubr.f32.gmra.mxu0 %v537
  %v1280 = vpop.f32.mrf.mxu0
  %v1281 = vadd.f32 0.0, %v1280
  %v1282 = vpop.f32.mrf.mxu0
  %1283 = vmatprep.mubr.f32.mxu0 0.0
  %1284 = vmatmul.mubr.f32.gmra.mxu0 %v540
  %v1285 = vpop.f32.mrf.mxu0
  %v1286 = vadd.f32 0.0, %v1285
  %v1287 = vpop.f32.mrf.mxu0
  %1288 = vmatprep.mubr.f32.mxu0 0.0
  %1289 = vmatmul.mubr.f32.gmra.mxu0 %v543
  %v1290 = vpop.f32.mrf.mxu0
  %v1291 = vadd.f32 0.0, %v1290
  %v1292 = vpop.f32.mrf.mxu0
  %1293 = vmatprep.mubr.f32.mxu0 0.0
  %1294 = vmatmul.mubr.f32.gmra.mxu0 %v546
  %v1295 = vpop.f32.mrf.mxu0
  %v1296 = vadd.f32 0.0, %v1295
  %v1297 = vpop.f32.mrf.mxu0
  %1298 = vmatprep.mubr.f32.mxu0 0.0
  %1299 = vmatmul.mubr.f32.gmra.mxu0 %v549
  %v1300 = vpop.f32.mrf.mxu0
  %v1301 = vadd.f32 0.0, %v1300
  %v1302 = vpop.f32.mrf.mxu0
  %1303 = vmatprep.mubr.f32.mxu0 0.0
  %1304 = vmatmul.mubr.f32.gmra.mxu0 %v552
  %v1305 = vpop.f32.mrf.mxu0
  %v1306 = vadd.f32 0.0, %v1305
  %v1307 = vpop.f32.mrf.mxu0
  %1308 = vmatprep.mubr.f32.mxu0 0.0
  %1309 = vmatmul.mubr.f32.gmra.mxu0 %v555
  %v1310 = vpop.f32.mrf.mxu0
  %v1311 = vadd.f32 0.0, %v1310
  %v1312 = vpop.f32.mrf.mxu0
  %1313 = vmatprep.mubr.f32.mxu0 0.0
  %1314 = vmatmul.mubr.f32.gmra.mxu0 %v558
  %v1315 = vpop.f32.mrf.mxu0
  %v1316 = vadd.f32 0.0, %v1315
  %v1317 = vpop.f32.mrf.mxu0
  %1318 = vmatprep.mubr.f32.mxu0 0.0
  %1319 = vmatmul.mubr.f32.gmra.mxu0 %v561
  %v1320 = vpop.f32.mrf.mxu0
  %v1321 = vadd.f32 0.0, %v1320
  %v1322 = vpop.f32.mrf.mxu0
  %1323 = vmatprep.mubr.f32.mxu0 0.0
  %1324 = vmatmul.mubr.f32.gmra.mxu0 %v564
  %v1325 = vpop.f32.mrf.mxu0
  %v1326 = vadd.f32 0.0, %v1325
  %v1327 = vpop.f32.mrf.mxu0
  %1328 = vmatprep.mubr.f32.mxu0 0.0
  %1329 = vmatmul.mubr.f32.gmra.mxu0 %v567
  %v1330 = vpop.f32.mrf.mxu0
  %v1331 = vadd.f32 0.0, %v1330
  %v1332 = vpop.f32.mrf.mxu0
  %1333 = vmatprep.mubr.f32.mxu0 0.0
  %1334 = vmatmul.mubr.f32.gmra.mxu0 %v570
  %v1335 = vpop.f32.mrf.mxu0
  %v1336 = vadd.f32 0.0, %v1335
  %v1337 = vpop.f32.mrf.mxu0
  %1338 = vmatprep.mubr.f32.mxu0 0.0
  %1339 = vmatmul.mubr.f32.gmra.mxu0 %v573
  %v1340 = vpop.f32.mrf.mxu0
  %v1341 = vadd.f32 0.0, %v1340
  %v1342 = vpop.f32.mrf.mxu0
  %1343 = vmatprep.mubr.f32.mxu0 0.0
  %1344 = vmatmul.mubr.f32.gmra.mxu0 %v576
  %v1345 = vpop.f32.mrf.mxu0
  %v1346 = vadd.f32 0.0, %v1345
  %v1347 = vpop.f32.mrf.mxu0
  %1348 = vmatprep.mubr.f32.mxu0 0.0
  %1349 = vmatmul.mubr.f32.gmra.mxu0 %v579
  %v1350 = vpop.f32.mrf.mxu0
  %v1351 = vadd.f32 0.0, %v1350
  %v1352 = vpop.f32.mrf.mxu0
  %1353 = vmatprep.mubr.f32.mxu0 0.0
  %1354 = vmatmul.mubr.f32.gmra.mxu0 %v582
  %v1355 = vpop.f32.mrf.mxu0
  %v1356 = vadd.f32 0.0, %v1355
  %v1357 = vpop.f32.mrf.mxu0
  %1358 = vmatprep.mubr.f32.mxu0 0.0
  %1359 = vmatmul.mubr.f32.gmra.mxu0 %v585
  %v1360 = vpop.f32.mrf.mxu0
  %v1361 = vadd.f32 0.0, %v1360
  %v1362 = vpop.f32.mrf.mxu0
  %1363 = vmatprep.mubr.f32.mxu0 0.0
  %1364 = vmatmul.mubr.f32.gmra.mxu0 %v588
  %v1365 = vpop.f32.mrf.mxu0
  %v1366 = vadd.f32 0.0, %v1365
  %v1367 = vpop.f32.mrf.mxu0
  %1368 = vmatprep.mubr.f32.mxu0 0.0
  %1369 = vmatmul.mubr.f32.gmra.mxu0 %v591
  %v1370 = vpop.f32.mrf.mxu0
  %v1371 = vadd.f32 0.0, %v1370
  %v1372 = vpop.f32.mrf.mxu0
  %1373 = vmatprep.mubr.f32.mxu0 0.0
  %1374 = vmatmul.mubr.f32.gmra.mxu0 %v594
  %v1375 = vpop.f32.mrf.mxu0
  %v1376 = vadd.f32 0.0, %v1375
  %v1377 = vpop.f32.mrf.mxu0
  %1378 = vmatprep.mubr.f32.mxu0 0.0
  %1379 = vmatmul.mubr.f32.gmra.mxu0 %v597
  %v1380 = vpop.f32.mrf.mxu0
  %v1381 = vadd.f32 0.0, %v1380
  %v1382 = vpop.f32.mrf.mxu0
  %1383 = vmatprep.mubr.f32.mxu0 0.0
  %1384 = vmatmul.mubr.f32.gmra.mxu0 %v600
  %v1385 = vpop.f32.mrf.mxu0
  %v1386 = vadd.f32 0.0, %v1385
  %v1387 = vpop.f32.mrf.mxu0
  %1388 = vmatprep.mubr.f32.mxu0 0.0
  %1389 = vmatmul.mubr.f32.gmra.mxu0 %v603
  %v1390 = vpop.f32.mrf.mxu0
  %v1391 = vadd.f32 0.0, %v1390
  %v1392 = vpop.f32.mrf.mxu0
  %1393 = vdwg.mxu0
  %vm1394 = vcmask 261120
  %v1395 = vsel %vm1394, %v676, -inf
  %v1396 = vsel %vm1394, %v856, -inf
  %v1397 = vmax.f32 %v1395, %v1396
  %v1398 = vsel %vm1394, %v1036, -inf
  %v1399 = vmax.f32 %v1397, %v1398
  %v1400 = vsel %vm1394, %v1216, -inf
  %v1401 = vmax.f32 %v1399, %v1400
  %v1402 = vsel %vm1394, %v681, -inf
  %v1403 = vsel %vm1394, %v861, -inf
  %v1404 = vmax.f32 %v1402, %v1403
  %v1405 = vsel %vm1394, %v1041, -inf
  %v1406 = vmax.f32 %v1404, %v1405
  %v1407 = vsel %vm1394, %v1221, -inf
  %v1408 = vmax.f32 %v1406, %v1407
  %v1409 = vsel %vm1394, %v686, -inf
  %v1410 = vsel %vm1394, %v866, -inf
  %v1411 = vmax.f32 %v1409, %v1410
  %v1412 = vsel %vm1394, %v1046, -inf
  %v1413 = vmax.f32 %v1411, %v1412
  %v1414 = vsel %vm1394, %v1226, -inf
  %v1415 = vmax.f32 %v1413, %v1414
  %v1416 = vsel %vm1394, %v691, -inf
  %v1417 = vsel %vm1394, %v871, -inf
  %v1418 = vmax.f32 %v1416, %v1417
  %v1419 = vsel %vm1394, %v1051, -inf
  %v1420 = vmax.f32 %v1418, %v1419
  %v1421 = vsel %vm1394, %v1231, -inf
  %v1422 = vmax.f32 %v1420, %v1421
  %v1423 = vsel %vm1394, %v696, -inf
  %v1424 = vsel %vm1394, %v876, -inf
  %v1425 = vmax.f32 %v1423, %v1424
  %v1426 = vsel %vm1394, %v1056, -inf
  %v1427 = vmax.f32 %v1425, %v1426
  %v1428 = vsel %vm1394, %v1236, -inf
  %v1429 = vmax.f32 %v1427, %v1428
  %v1430 = vsel %vm1394, %v701, -inf
  %v1431 = vsel %vm1394, %v881, -inf
  %v1432 = vmax.f32 %v1430, %v1431
  %v1433 = vsel %vm1394, %v1061, -inf
  %v1434 = vmax.f32 %v1432, %v1433
  %v1435 = vsel %vm1394, %v1241, -inf
  %v1436 = vmax.f32 %v1434, %v1435
  %v1437 = vsel %vm1394, %v706, -inf
  %v1438 = vsel %vm1394, %v886, -inf
  %v1439 = vmax.f32 %v1437, %v1438
  %v1440 = vsel %vm1394, %v1066, -inf
  %v1441 = vmax.f32 %v1439, %v1440
  %v1442 = vsel %vm1394, %v1246, -inf
  %v1443 = vmax.f32 %v1441, %v1442
  %v1444 = vsel %vm1394, %v711, -inf
  %v1445 = vsel %vm1394, %v891, -inf
  %v1446 = vmax.f32 %v1444, %v1445
  %v1447 = vsel %vm1394, %v1071, -inf
  %v1448 = vmax.f32 %v1446, %v1447
  %v1449 = vsel %vm1394, %v1251, -inf
  %v1450 = vmax.f32 %v1448, %v1449
  %v1451 = vsel %vm1394, %v716, -inf
  %v1452 = vsel %vm1394, %v896, -inf
  %v1453 = vmax.f32 %v1451, %v1452
  %v1454 = vsel %vm1394, %v1076, -inf
  %v1455 = vmax.f32 %v1453, %v1454
  %v1456 = vsel %vm1394, %v1256, -inf
  %v1457 = vmax.f32 %v1455, %v1456
  %v1458 = vsel %vm1394, %v721, -inf
  %v1459 = vsel %vm1394, %v901, -inf
  %v1460 = vmax.f32 %v1458, %v1459
  %v1461 = vsel %vm1394, %v1081, -inf
  %v1462 = vmax.f32 %v1460, %v1461
  %v1463 = vsel %vm1394, %v1261, -inf
  %v1464 = vmax.f32 %v1462, %v1463
  %v1465 = vsel %vm1394, %v726, -inf
  %v1466 = vsel %vm1394, %v906, -inf
  %v1467 = vmax.f32 %v1465, %v1466
  %v1468 = vsel %vm1394, %v1086, -inf
  %v1469 = vmax.f32 %v1467, %v1468
  %v1470 = vsel %vm1394, %v1266, -inf
  %v1471 = vmax.f32 %v1469, %v1470
  %v1472 = vsel %vm1394, %v731, -inf
  %v1473 = vsel %vm1394, %v911, -inf
  %v1474 = vmax.f32 %v1472, %v1473
  %v1475 = vsel %vm1394, %v1091, -inf
  %v1476 = vmax.f32 %v1474, %v1475
  %v1477 = vsel %vm1394, %v1271, -inf
  %v1478 = vmax.f32 %v1476, %v1477
  %v1479 = vsel %vm1394, %v736, -inf
  %v1480 = vsel %vm1394, %v916, -inf
  %v1481 = vmax.f32 %v1479, %v1480
  %v1482 = vsel %vm1394, %v1096, -inf
  %v1483 = vmax.f32 %v1481, %v1482
  %v1484 = vsel %vm1394, %v1276, -inf
  %v1485 = vmax.f32 %v1483, %v1484
  %v1486 = vsel %vm1394, %v741, -inf
  %v1487 = vsel %vm1394, %v921, -inf
  %v1488 = vmax.f32 %v1486, %v1487
  %v1489 = vsel %vm1394, %v1101, -inf
  %v1490 = vmax.f32 %v1488, %v1489
  %v1491 = vsel %vm1394, %v1281, -inf
  %v1492 = vmax.f32 %v1490, %v1491
  %v1493 = vsel %vm1394, %v746, -inf
  %v1494 = vsel %vm1394, %v926, -inf
  %v1495 = vmax.f32 %v1493, %v1494
  %v1496 = vsel %vm1394, %v1106, -inf
  %v1497 = vmax.f32 %v1495, %v1496
  %v1498 = vsel %vm1394, %v1286, -inf
  %v1499 = vmax.f32 %v1497, %v1498
  %v1500 = vsel %vm1394, %v751, -inf
  %v1501 = vsel %vm1394, %v931, -inf
  %v1502 = vmax.f32 %v1500, %v1501
  %v1503 = vsel %vm1394, %v1111, -inf
  %v1504 = vmax.f32 %v1502, %v1503
  %v1505 = vsel %vm1394, %v1291, -inf
  %v1506 = vmax.f32 %v1504, %v1505
  %v1507 = vsel %vm1394, %v756, -inf
  %v1508 = vsel %vm1394, %v936, -inf
  %v1509 = vmax.f32 %v1507, %v1508
  %v1510 = vsel %vm1394, %v1116, -inf
  %v1511 = vmax.f32 %v1509, %v1510
  %v1512 = vsel %vm1394, %v1296, -inf
  %v1513 = vmax.f32 %v1511, %v1512
  %v1514 = vsel %vm1394, %v761, -inf
  %v1515 = vsel %vm1394, %v941, -inf
  %v1516 = vmax.f32 %v1514, %v1515
  %v1517 = vsel %vm1394, %v1121, -inf
  %v1518 = vmax.f32 %v1516, %v1517
  %v1519 = vsel %vm1394, %v1301, -inf
  %v1520 = vmax.f32 %v1518, %v1519
  %v1521 = vsel %vm1394, %v766, -inf
  %v1522 = vsel %vm1394, %v946, -inf
  %v1523 = vmax.f32 %v1521, %v1522
  %v1524 = vsel %vm1394, %v1126, -inf
  %v1525 = vmax.f32 %v1523, %v1524
  %v1526 = vsel %vm1394, %v1306, -inf
  %v1527 = vmax.f32 %v1525, %v1526
  %v1528 = vsel %vm1394, %v771, -inf
  %v1529 = vsel %vm1394, %v951, -inf
  %v1530 = vmax.f32 %v1528, %v1529
  %v1531 = vsel %vm1394, %v1131, -inf
  %v1532 = vmax.f32 %v1530, %v1531
  %v1533 = vsel %vm1394, %v1311, -inf
  %v1534 = vmax.f32 %v1532, %v1533
  %v1535 = vsel %vm1394, %v776, -inf
  %v1536 = vsel %vm1394, %v956, -inf
  %v1537 = vmax.f32 %v1535, %v1536
  %v1538 = vsel %vm1394, %v1136, -inf
  %v1539 = vmax.f32 %v1537, %v1538
  %v1540 = vsel %vm1394, %v1316, -inf
  %v1541 = vmax.f32 %v1539, %v1540
  %v1542 = vsel %vm1394, %v781, -inf
  %v1543 = vsel %vm1394, %v961, -inf
  %v1544 = vmax.f32 %v1542, %v1543
  %v1545 = vsel %vm1394, %v1141, -inf
  %v1546 = vmax.f32 %v1544, %v1545
  %v1547 = vsel %vm1394, %v1321, -inf
  %v1548 = vmax.f32 %v1546, %v1547
  %v1549 = vsel %vm1394, %v786, -inf
  %v1550 = vsel %vm1394, %v966, -inf
  %v1551 = vmax.f32 %v1549, %v1550
  %v1552 = vsel %vm1394, %v1146, -inf
  %v1553 = vmax.f32 %v1551, %v1552
  %v1554 = vsel %vm1394, %v1326, -inf
  %v1555 = vmax.f32 %v1553, %v1554
  %v1556 = vsel %vm1394, %v791, -inf
  %v1557 = vsel %vm1394, %v971, -inf
  %v1558 = vmax.f32 %v1556, %v1557
  %v1559 = vsel %vm1394, %v1151, -inf
  %v1560 = vmax.f32 %v1558, %v1559
  %v1561 = vsel %vm1394, %v1331, -inf
  %v1562 = vmax.f32 %v1560, %v1561
  %v1563 = vsel %vm1394, %v796, -inf
  %v1564 = vsel %vm1394, %v976, -inf
  %v1565 = vmax.f32 %v1563, %v1564
  %v1566 = vsel %vm1394, %v1156, -inf
  %v1567 = vmax.f32 %v1565, %v1566
  %v1568 = vsel %vm1394, %v1336, -inf
  %v1569 = vmax.f32 %v1567, %v1568
  %v1570 = vsel %vm1394, %v801, -inf
  %v1571 = vsel %vm1394, %v981, -inf
  %v1572 = vmax.f32 %v1570, %v1571
  %v1573 = vsel %vm1394, %v1161, -inf
  %v1574 = vmax.f32 %v1572, %v1573
  %v1575 = vsel %vm1394, %v1341, -inf
  %v1576 = vmax.f32 %v1574, %v1575
  %v1577 = vsel %vm1394, %v806, -inf
  %v1578 = vsel %vm1394, %v986, -inf
  %v1579 = vmax.f32 %v1577, %v1578
  %v1580 = vsel %vm1394, %v1166, -inf
  %v1581 = vmax.f32 %v1579, %v1580
  %v1582 = vsel %vm1394, %v1346, -inf
  %v1583 = vmax.f32 %v1581, %v1582
  %v1584 = vsel %vm1394, %v811, -inf
  %v1585 = vsel %vm1394, %v991, -inf
  %v1586 = vmax.f32 %v1584, %v1585
  %v1587 = vsel %vm1394, %v1171, -inf
  %v1588 = vmax.f32 %v1586, %v1587
  %v1589 = vsel %vm1394, %v1351, -inf
  %v1590 = vmax.f32 %v1588, %v1589
  %v1591 = vsel %vm1394, %v816, -inf
  %v1592 = vsel %vm1394, %v996, -inf
  %v1593 = vmax.f32 %v1591, %v1592
  %v1594 = vsel %vm1394, %v1176, -inf
  %v1595 = vmax.f32 %v1593, %v1594
  %v1596 = vsel %vm1394, %v1356, -inf
  %v1597 = vmax.f32 %v1595, %v1596
  %v1598 = vsel %vm1394, %v821, -inf
  %v1599 = vsel %vm1394, %v1001, -inf
  %v1600 = vmax.f32 %v1598, %v1599
  %v1601 = vsel %vm1394, %v1181, -inf
  %v1602 = vmax.f32 %v1600, %v1601
  %v1603 = vsel %vm1394, %v1361, -inf
  %v1604 = vmax.f32 %v1602, %v1603
  %v1605 = vsel %vm1394, %v826, -inf
  %v1606 = vsel %vm1394, %v1006, -inf
  %v1607 = vmax.f32 %v1605, %v1606
  %v1608 = vsel %vm1394, %v1186, -inf
  %v1609 = vmax.f32 %v1607, %v1608
  %v1610 = vsel %vm1394, %v1366, -inf
  %v1611 = vmax.f32 %v1609, %v1610
  %v1612 = vsel %vm1394, %v831, -inf
  %v1613 = vsel %vm1394, %v1011, -inf
  %v1614 = vmax.f32 %v1612, %v1613
  %v1615 = vsel %vm1394, %v1191, -inf
  %v1616 = vmax.f32 %v1614, %v1615
  %v1617 = vsel %vm1394, %v1371, -inf
  %v1618 = vmax.f32 %v1616, %v1617
  %v1619 = vsel %vm1394, %v836, -inf
  %v1620 = vsel %vm1394, %v1016, -inf
  %v1621 = vmax.f32 %v1619, %v1620
  %v1622 = vsel %vm1394, %v1196, -inf
  %v1623 = vmax.f32 %v1621, %v1622
  %v1624 = vsel %vm1394, %v1376, -inf
  %v1625 = vmax.f32 %v1623, %v1624
  %v1626 = vsel %vm1394, %v841, -inf
  %v1627 = vsel %vm1394, %v1021, -inf
  %v1628 = vmax.f32 %v1626, %v1627
  %v1629 = vsel %vm1394, %v1201, -inf
  %v1630 = vmax.f32 %v1628, %v1629
  %v1631 = vsel %vm1394, %v1381, -inf
  %v1632 = vmax.f32 %v1630, %v1631
  %v1633 = vsel %vm1394, %v846, -inf
  %v1634 = vsel %vm1394, %v1026, -inf
  %v1635 = vmax.f32 %v1633, %v1634
  %v1636 = vsel %vm1394, %v1206, -inf
  %v1637 = vmax.f32 %v1635, %v1636
  %v1638 = vsel %vm1394, %v1386, -inf
  %v1639 = vmax.f32 %v1637, %v1638
  %v1640 = vsel %vm1394, %v851, -inf
  %v1641 = vsel %vm1394, %v1031, -inf
  %v1642 = vmax.f32 %v1640, %v1641
  %v1643 = vsel %vm1394, %v1211, -inf
  %v1644 = vmax.f32 %v1642, %v1643
  %v1645 = vsel %vm1394, %v1391, -inf
  %v1646 = vmax.f32 %v1644, %v1645
  %v1647 = vld [vmem:[%s2] sm:$0x1]
  %v1649 = vlaneseq
  %v1650 = vshrl.u32 %v1649, 7
  %v1651 = vsub.s32 0, %v1650
  %v1652 = vrot.slane %v1647, %v1651
  %v1654 = vadd.f32 %v1401, %v1652
  %v1655 = vadd.f32 %v1408, %v1652
  %v1656 = vadd.f32 %v1415, %v1652
  %v1657 = vadd.f32 %v1422, %v1652
  %v1658 = vadd.f32 %v1429, %v1652
  %v1659 = vadd.f32 %v1436, %v1652
  %v1660 = vadd.f32 %v1443, %v1652
  %v1661 = vadd.f32 %v1450, %v1652
  %v1662 = vadd.f32 %v1457, %v1652
  %v1663 = vadd.f32 %v1464, %v1652
  %v1664 = vadd.f32 %v1471, %v1652
  %v1665 = vadd.f32 %v1478, %v1652
  %v1666 = vadd.f32 %v1485, %v1652
  %v1667 = vadd.f32 %v1492, %v1652
  %v1668 = vadd.f32 %v1499, %v1652
  %v1669 = vadd.f32 %v1506, %v1652
  %v1670 = vadd.f32 %v1513, %v1652
  %v1671 = vadd.f32 %v1520, %v1652
  %v1672 = vadd.f32 %v1527, %v1652
  %v1673 = vadd.f32 %v1534, %v1652
  %v1674 = vadd.f32 %v1541, %v1652
  %v1675 = vadd.f32 %v1548, %v1652
  %v1676 = vadd.f32 %v1555, %v1652
  %v1677 = vadd.f32 %v1562, %v1652
  %v1678 = vadd.f32 %v1569, %v1652
  %v1679 = vadd.f32 %v1576, %v1652
  %v1680 = vadd.f32 %v1583, %v1652
  %v1681 = vadd.f32 %v1590, %v1652
  %v1682 = vadd.f32 %v1597, %v1652
  %v1683 = vadd.f32 %v1604, %v1652
  %v1684 = vadd.f32 %v1611, %v1652
  %v1685 = vadd.f32 %v1618, %v1652
  %v1686 = vadd.f32 %v1625, %v1652
  %v1687 = vadd.f32 %v1632, %v1652
  %v1688 = vadd.f32 %v1639, %v1652
  %v1689 = vadd.f32 %v1646, %v1652
  %v1690 = vmax.f32 %v1654, 0.0
  %v1691 = vmax.f32 %v1655, 0.0
  %v1692 = vmax.f32 %v1656, 0.0
  %v1693 = vmax.f32 %v1657, 0.0
  %v1694 = vmax.f32 %v1658, 0.0
  %v1695 = vmax.f32 %v1659, 0.0
  %v1696 = vmax.f32 %v1660, 0.0
  %v1697 = vmax.f32 %v1661, 0.0
  %v1698 = vmax.f32 %v1662, 0.0
  %v1699 = vmax.f32 %v1663, 0.0
  %v1700 = vmax.f32 %v1664, 0.0
  %v1701 = vmax.f32 %v1665, 0.0
  %v1702 = vmax.f32 %v1666, 0.0
  %v1703 = vmax.f32 %v1667, 0.0
  %v1704 = vmax.f32 %v1668, 0.0
  %v1705 = vmax.f32 %v1669, 0.0
  %v1706 = vmax.f32 %v1670, 0.0
  %v1707 = vmax.f32 %v1671, 0.0
  %v1708 = vmax.f32 %v1672, 0.0
  %v1709 = vmax.f32 %v1673, 0.0
  %v1710 = vmax.f32 %v1674, 0.0
  %v1711 = vmax.f32 %v1675, 0.0
  %v1712 = vmax.f32 %v1676, 0.0
  %v1713 = vmax.f32 %v1677, 0.0
  %v1714 = vmax.f32 %v1678, 0.0
  %v1715 = vmax.f32 %v1679, 0.0
  %v1716 = vmax.f32 %v1680, 0.0
  %v1717 = vmax.f32 %v1681, 0.0
  %v1718 = vmax.f32 %v1682, 0.0
  %v1719 = vmax.f32 %v1683, 0.0
  %v1720 = vmax.f32 %v1684, 0.0
  %v1721 = vmax.f32 %v1685, 0.0
  %v1722 = vmax.f32 %v1686, 0.0
  %v1723 = vmax.f32 %v1687, 0.0
  %v1724 = vmax.f32 %v1688, 0.0
  %v1725 = vmax.f32 %v1689, 0.0
  %v1726 = vld [vmem:[%s4] sm:$0x1]
  %v1727 = vsel %vm1394, %v1690, 0.0
  %v1728 = vsel %vm1394, %v1691, 0.0
  %v1729 = vadd.f32 %v1727, %v1728
  %v1730 = vsel %vm1394, %v1692, 0.0
  %v1731 = vadd.f32 %v1729, %v1730
  %v1732 = vsel %vm1394, %v1693, 0.0
  %v1733 = vadd.f32 %v1731, %v1732
  %v1734 = vsel %vm1394, %v1694, 0.0
  %v1735 = vadd.f32 %v1733, %v1734
  %v1736 = vsel %vm1394, %v1695, 0.0
  %v1737 = vadd.f32 %v1735, %v1736
  %v1738 = vsel %vm1394, %v1696, 0.0
  %v1739 = vadd.f32 %v1737, %v1738
  %v1740 = vsel %vm1394, %v1697, 0.0
  %v1741 = vadd.f32 %v1739, %v1740
  %v1742 = vsel %vm1394, %v1698, 0.0
  %v1743 = vadd.f32 %v1741, %v1742
  %v1744 = vsel %vm1394, %v1699, 0.0
  %v1745 = vadd.f32 %v1743, %v1744
  %v1746 = vsel %vm1394, %v1700, 0.0
  %v1747 = vadd.f32 %v1745, %v1746
  %v1748 = vsel %vm1394, %v1701, 0.0
  %v1749 = vadd.f32 %v1747, %v1748
  %v1750 = vsel %vm1394, %v1702, 0.0
  %v1751 = vadd.f32 %v1749, %v1750
  %v1752 = vsel %vm1394, %v1703, 0.0
  %v1753 = vadd.f32 %v1751, %v1752
  %v1754 = vsel %vm1394, %v1704, 0.0
  %v1755 = vadd.f32 %v1753, %v1754
  %v1756 = vsel %vm1394, %v1705, 0.0
  %v1757 = vadd.f32 %v1755, %v1756
  %v1758 = vsel %vm1394, %v1706, 0.0
  %v1759 = vadd.f32 %v1757, %v1758
  %v1760 = vsel %vm1394, %v1707, 0.0
  %v1761 = vadd.f32 %v1759, %v1760
  %v1762 = vsel %vm1394, %v1708, 0.0
  %v1763 = vadd.f32 %v1761, %v1762
  %v1764 = vsel %vm1394, %v1709, 0.0
  %v1765 = vadd.f32 %v1763, %v1764
  %v1766 = vsel %vm1394, %v1710, 0.0
  %v1767 = vadd.f32 %v1765, %v1766
  %v1768 = vsel %vm1394, %v1711, 0.0
  %v1769 = vadd.f32 %v1767, %v1768
  %v1770 = vsel %vm1394, %v1712, 0.0
  %v1771 = vadd.f32 %v1769, %v1770
  %v1772 = vsel %vm1394, %v1713, 0.0
  %v1773 = vadd.f32 %v1771, %v1772
  %v1774 = vsel %vm1394, %v1714, 0.0
  %v1775 = vadd.f32 %v1773, %v1774
  %v1776 = vsel %vm1394, %v1715, 0.0
  %v1777 = vadd.f32 %v1775, %v1776
  %v1778 = vsel %vm1394, %v1716, 0.0
  %v1779 = vadd.f32 %v1777, %v1778
  %v1780 = vsel %vm1394, %v1717, 0.0
  %v1781 = vadd.f32 %v1779, %v1780
  %v1782 = vsel %vm1394, %v1718, 0.0
  %v1783 = vadd.f32 %v1781, %v1782
  %v1784 = vsel %vm1394, %v1719, 0.0
  %v1785 = vadd.f32 %v1783, %v1784
  %v1786 = vsel %vm1394, %v1720, 0.0
  %v1787 = vadd.f32 %v1785, %v1786
  %v1788 = vsel %vm1394, %v1721, 0.0
  %v1789 = vadd.f32 %v1787, %v1788
  %v1790 = vsel %vm1394, %v1722, 0.0
  %v1791 = vadd.f32 %v1789, %v1790
  %v1792 = vsel %vm1394, %v1723, 0.0
  %v1793 = vadd.f32 %v1791, %v1792
  %v1794 = vsel %vm1394, %v1724, 0.0
  %v1795 = vadd.f32 %v1793, %v1794
  %v1796 = vsel %vm1394, %v1725, 0.0
  %v1797 = vadd.f32 %v1795, %v1796
  %v1798 = vrot.slane %v1797, 4
  %v1799 = vadd.f32 %v1797, %v1798
  %v1800 = vrot.slane %v1799, 2
  %v1801 = vadd.f32 %v1799, %v1800
  %v1802 = vrot.slane %v1801, 1
  %v1803 = vadd.f32 %v1801, %v1802
  %v1804 = vadd.f32 %v1726, %v1803
  %vm1805 = vcmask 253952
  %1806 = vst.msk [vmem:[%s4] sm:$0x1] %vm1805, %v1804
  %v1807 = vld [vmem:[%s5] sm:$0x1]
  %v1808 = vmul.f32 %v1690, %v1690
  %v1809 = vmul.f32 %v1691, %v1691
  %v1810 = vmul.f32 %v1692, %v1692
  %v1811 = vmul.f32 %v1693, %v1693
  %v1812 = vmul.f32 %v1694, %v1694
  %v1813 = vmul.f32 %v1695, %v1695
  %v1814 = vmul.f32 %v1696, %v1696
  %v1815 = vmul.f32 %v1697, %v1697
  %v1816 = vmul.f32 %v1698, %v1698
  %v1817 = vmul.f32 %v1699, %v1699
  %v1818 = vmul.f32 %v1700, %v1700
  %v1819 = vmul.f32 %v1701, %v1701
  %v1820 = vmul.f32 %v1702, %v1702
  %v1821 = vmul.f32 %v1703, %v1703
  %v1822 = vmul.f32 %v1704, %v1704
  %v1823 = vmul.f32 %v1705, %v1705
  %v1824 = vmul.f32 %v1706, %v1706
  %v1825 = vmul.f32 %v1707, %v1707
  %v1826 = vmul.f32 %v1708, %v1708
  %v1827 = vmul.f32 %v1709, %v1709
  %v1828 = vmul.f32 %v1710, %v1710
  %v1829 = vmul.f32 %v1711, %v1711
  %v1830 = vmul.f32 %v1712, %v1712
  %v1831 = vmul.f32 %v1713, %v1713
  %v1832 = vmul.f32 %v1714, %v1714
  %v1833 = vmul.f32 %v1715, %v1715
  %v1834 = vmul.f32 %v1716, %v1716
  %v1835 = vmul.f32 %v1717, %v1717
  %v1836 = vmul.f32 %v1718, %v1718
  %v1837 = vmul.f32 %v1719, %v1719
  %v1838 = vmul.f32 %v1720, %v1720
  %v1839 = vmul.f32 %v1721, %v1721
  %v1840 = vmul.f32 %v1722, %v1722
  %v1841 = vmul.f32 %v1723, %v1723
  %v1842 = vmul.f32 %v1724, %v1724
  %v1843 = vmul.f32 %v1725, %v1725
  %v1844 = vsel %vm1394, %v1808, 0.0
  %v1845 = vsel %vm1394, %v1809, 0.0
  %v1846 = vadd.f32 %v1844, %v1845
  %v1847 = vsel %vm1394, %v1810, 0.0
  %v1848 = vadd.f32 %v1846, %v1847
  %v1849 = vsel %vm1394, %v1811, 0.0
  %v1850 = vadd.f32 %v1848, %v1849
  %v1851 = vsel %vm1394, %v1812, 0.0
  %v1852 = vadd.f32 %v1850, %v1851
  %v1853 = vsel %vm1394, %v1813, 0.0
  %v1854 = vadd.f32 %v1852, %v1853
  %v1855 = vsel %vm1394, %v1814, 0.0
  %v1856 = vadd.f32 %v1854, %v1855
  %v1857 = vsel %vm1394, %v1815, 0.0
  %v1858 = vadd.f32 %v1856, %v1857
  %v1859 = vsel %vm1394, %v1816, 0.0
  %v1860 = vadd.f32 %v1858, %v1859
  %v1861 = vsel %vm1394, %v1817, 0.0
  %v1862 = vadd.f32 %v1860, %v1861
  %v1863 = vsel %vm1394, %v1818, 0.0
  %v1864 = vadd.f32 %v1862, %v1863
  %v1865 = vsel %vm1394, %v1819, 0.0
  %v1866 = vadd.f32 %v1864, %v1865
  %v1867 = vsel %vm1394, %v1820, 0.0
  %v1868 = vadd.f32 %v1866, %v1867
  %v1869 = vsel %vm1394, %v1821, 0.0
  %v1870 = vadd.f32 %v1868, %v1869
  %v1871 = vsel %vm1394, %v1822, 0.0
  %v1872 = vadd.f32 %v1870, %v1871
  %v1873 = vsel %vm1394, %v1823, 0.0
  %v1874 = vadd.f32 %v1872, %v1873
  %v1875 = vsel %vm1394, %v1824, 0.0
  %v1876 = vadd.f32 %v1874, %v1875
  %v1877 = vsel %vm1394, %v1825, 0.0
  %v1878 = vadd.f32 %v1876, %v1877
  %v1879 = vsel %vm1394, %v1826, 0.0
  %v1880 = vadd.f32 %v1878, %v1879
  %v1881 = vsel %vm1394, %v1827, 0.0
  %v1882 = vadd.f32 %v1880, %v1881
  %v1883 = vsel %vm1394, %v1828, 0.0
  %v1884 = vadd.f32 %v1882, %v1883
  %v1885 = vsel %vm1394, %v1829, 0.0
  %v1886 = vadd.f32 %v1884, %v1885
  %v1887 = vsel %vm1394, %v1830, 0.0
  %v1888 = vadd.f32 %v1886, %v1887
  %v1889 = vsel %vm1394, %v1831, 0.0
  %v1890 = vadd.f32 %v1888, %v1889
  %v1891 = vsel %vm1394, %v1832, 0.0
  %v1892 = vadd.f32 %v1890, %v1891
  %v1893 = vsel %vm1394, %v1833, 0.0
  %v1894 = vadd.f32 %v1892, %v1893
  %v1895 = vsel %vm1394, %v1834, 0.0
  %v1896 = vadd.f32 %v1894, %v1895
  %v1897 = vsel %vm1394, %v1835, 0.0
  %v1898 = vadd.f32 %v1896, %v1897
  %v1899 = vsel %vm1394, %v1836, 0.0
  %v1900 = vadd.f32 %v1898, %v1899
  %v1901 = vsel %vm1394, %v1837, 0.0
  %v1902 = vadd.f32 %v1900, %v1901
  %v1903 = vsel %vm1394, %v1838, 0.0
  %v1904 = vadd.f32 %v1902, %v1903
  %v1905 = vsel %vm1394, %v1839, 0.0
  %v1906 = vadd.f32 %v1904, %v1905
  %v1907 = vsel %vm1394, %v1840, 0.0
  %v1908 = vadd.f32 %v1906, %v1907
  %v1909 = vsel %vm1394, %v1841, 0.0
  %v1910 = vadd.f32 %v1908, %v1909
  %v1911 = vsel %vm1394, %v1842, 0.0
  %v1912 = vadd.f32 %v1910, %v1911
  %v1913 = vsel %vm1394, %v1843, 0.0
  %v1914 = vadd.f32 %v1912, %v1913
  %v1915 = vrot.slane %v1914, 4
  %v1916 = vadd.f32 %v1914, %v1915
  %v1917 = vrot.slane %v1916, 2
  %v1918 = vadd.f32 %v1916, %v1917
  %v1919 = vrot.slane %v1918, 1
  %v1920 = vadd.f32 %v1918, %v1919
  %v1921 = vadd.f32 %v1807, %v1920
  %1922 = vst.msk [vmem:[%s5] sm:$0x1] %vm1805, %v1921
  %1923 = vst.msk [vmem:[%s3] sm:$0xff] %vm1394, %v1690
  %1924 = vst.msk [vmem:[%s3 + $0x8] sm:$0xff] %vm1394, %v1691
  %1925 = vst.msk [vmem:[%s3 + $0x10] sm:$0xff] %vm1394, %v1692
  %1926 = vst.msk [vmem:[%s3 + $0x18] sm:$0xff] %vm1394, %v1693
  %1927 = vst.msk [vmem:[%s3 + $0x20] sm:$0xff] %vm1394, %v1694
  %1928 = vst.msk [vmem:[%s3 + $0x28] sm:$0xff] %vm1394, %v1695
  %1929 = vst.msk [vmem:[%s3 + $0x30] sm:$0xff] %vm1394, %v1696
  %1930 = vst.msk [vmem:[%s3 + $0x38] sm:$0xff] %vm1394, %v1697
  %1931 = vst.msk [vmem:[%s3 + $0x40] sm:$0xff] %vm1394, %v1698
  %1932 = vst.msk [vmem:[%s3 + $0x48] sm:$0xff] %vm1394, %v1699
  %1933 = vst.msk [vmem:[%s3 + $0x50] sm:$0xff] %vm1394, %v1700
  %1934 = vst.msk [vmem:[%s3 + $0x58] sm:$0xff] %vm1394, %v1701
  %1935 = vst.msk [vmem:[%s3 + $0x60] sm:$0xff] %vm1394, %v1702
  %1936 = vst.msk [vmem:[%s3 + $0x68] sm:$0xff] %vm1394, %v1703
  %1937 = vst.msk [vmem:[%s3 + $0x70] sm:$0xff] %vm1394, %v1704
  %1938 = vst.msk [vmem:[%s3 + $0x78] sm:$0xff] %vm1394, %v1705
  %1939 = vst.msk [vmem:[%s3 + $0x80] sm:$0xff] %vm1394, %v1706
  %1940 = vst.msk [vmem:[%s3 + $0x88] sm:$0xff] %vm1394, %v1707
  %1941 = vst.msk [vmem:[%s3 + $0x90] sm:$0xff] %vm1394, %v1708
  %1942 = vst.msk [vmem:[%s3 + $0x98] sm:$0xff] %vm1394, %v1709
  %1943 = vst.msk [vmem:[%s3 + $0xa0] sm:$0xff] %vm1394, %v1710
  %1944 = vst.msk [vmem:[%s3 + $0xa8] sm:$0xff] %vm1394, %v1711
  %1945 = vst.msk [vmem:[%s3 + $0xb0] sm:$0xff] %vm1394, %v1712
  %1946 = vst.msk [vmem:[%s3 + $0xb8] sm:$0xff] %vm1394, %v1713
  %1947 = vst.msk [vmem:[%s3 + $0xc0] sm:$0xff] %vm1394, %v1714
  %1948 = vst.msk [vmem:[%s3 + $0xc8] sm:$0xff] %vm1394, %v1715
  %1949 = vst.msk [vmem:[%s3 + $0xd0] sm:$0xff] %vm1394, %v1716
  %1950 = vst.msk [vmem:[%s3 + $0xd8] sm:$0xff] %vm1394, %v1717
  %1951 = vst.msk [vmem:[%s3 + $0xe0] sm:$0xff] %vm1394, %v1718
  %1952 = vst.msk [vmem:[%s3 + $0xe8] sm:$0xff] %vm1394, %v1719
  %1953 = vst.msk [vmem:[%s3 + $0xf0] sm:$0xff] %vm1394, %v1720
  %1954 = vst.msk [vmem:[%s3 + $0xf8] sm:$0xff] %vm1394, %v1721
  %1955 = vst.msk [vmem:[%s3 + $0x100] sm:$0xff] %vm1394, %v1722
  %1956 = vst.msk [vmem:[%s3 + $0x108] sm:$0xff] %vm1394, %v1723
  %1957 = vst.msk [vmem:[%s3 + $0x110] sm:$0xff] %vm1394, %v1724
  %1958 = vst.msk [vmem:[%s3 + $0x118] sm:$0xff] %vm1394, %v1725
  // Predicated region
  $region18: #{image_model_forward.3} parent=0 // pred_check
    _
  $region19: #{image_model_forward.3} parent=0 // pred_check_branch
    %1960 = sbr.rel (0) target = $region21
  $region20: #{image_model_forward.3} parent=0 // pred_region
    _
  $region21: #{image_model_forward.3} parent=0 // pred_fallthru
    _
  // Predicated region
  $region22: #{image_model_forward.3} parent=0 // pred_check
    _
  $region23: #{image_model_forward.3} parent=0 // pred_check_branch
    %1962 = sbr.rel (0) target = $region25
  $region24: #{image_model_forward.3} parent=0 // pred_region
    _
  $region25: #{image_model_forward.3} parent=0 // pred_fallthru
    _
  // Predicated region
  $region26: #{image_model_forward.3} parent=0 // pred_check
    _
  $region27: #{image_model_forward.3} parent=0 // pred_check_branch
    %1964 = sbr.rel (0) target = $region29
  $region28: #{image_model_forward.3} parent=0 // pred_region
    _
  $region29: #{image_model_forward.3} parent=0 // pred_fallthru
    _
  // Predicated region
  $region30: #{image_model_forward.3} parent=0 // pred_check
    _
  $region31: #{image_model_forward.3} parent=0 // pred_check_branch
    %1966 = sbr.rel (0) target = $region33
  $region32: #{image_model_forward.3} parent=0 // pred_region
    _
  $region33: #{image_model_forward.3} parent=0 // pred_fallthru
    _
  // Predicated region
  $region34: #{image_model_forward.3} parent=0 // pred_check
    _
  $region35: #{image_model_forward.3} parent=0 // pred_check_branch
    %1968 = sbr.rel (0) target = $region37
  $region36: #{image_model_forward.3} parent=0 // pred_region
    _
  $region37: #{image_model_forward.3} parent=0 // pred_fallthru
    _
  // Predicated region
  $region38: #{image_model_forward.3} parent=0 // pred_check
    _
  $region39: #{image_model_forward.3} parent=0 // pred_check_branch
    %1970 = sbr.rel (0) target = $region41
  $region40: #{image_model_forward.3} parent=0 // pred_region
    _
  $region41: #{image_model_forward.3} parent=0 // pred_fallthru
    _

// kernel: image_model_forward.4
$region0: #{image_model_forward.4}
  #allocation0 [shape = 'u32[]', space=smem, size = 0x4, offset = 0x4, fixed_abs, tag = 'smem constant byte address 0x4 - core index']
  #allocation1 [shape = 'u32[144,128]{1,0:T(1,128)}', space=vmem, size = 0x12000, scoped, tag = 'internal scratch']
  %s0 = inlined_call_operand.vmem [shape: f32[4,32,800], index: 0, kind: input, shape index: {}]
  %s1 = inlined_call_operand.vmem [shape: f32[800,64], index: 1, kind: input, shape index: {}]
  %s2 = inlined_call_operand.vmem [shape: f32[1,64], index: 2, kind: input, shape index: {}]
  %s3 = inlined_call_operand.vmem [shape: f32[32,64], index: 3, kind: output, shape index: {0}]
  %s4 = inlined_call_operand.vmem [shape: f32[1,64], index: 4, kind: output, shape index: {1}]
  %s5 = inlined_call_operand.vmem [shape: f32[1,64], index: 5, kind: output, shape index: {2}]
  %6 = xla_tuple %s3, %s4, %s5
  %s7 = sld [smem:[#allocation0]]
  $region42: #{image_model_forward.4} parent=0
    _
  %s9 = ssub.s32 1, %s7
  %s10 = scalar_select 0, %s9, %s7
  // Predicated region
  $region2: #{image_model_forward.4} parent=0 // pred_check
    _
  $region3: #{image_model_forward.4} parent=0 // pred_check_branch
    %12 = sbr.rel (0) target = $region5
  $region4: #{image_model_forward.4} parent=0 // pred_region
    _
  $region5: #{image_model_forward.4} parent=0 // pred_fallthru
    _
  // Predicated region
  $region6: #{image_model_forward.4} parent=0 // pred_check
    _
  $region7: #{image_model_forward.4} parent=0 // pred_check_branch
    %14 = sbr.rel (0) target = $region9
  $region8: #{image_model_forward.4} parent=0 // pred_region
    _
  $region9: #{image_model_forward.4} parent=0 // pred_fallthru
    _
  // Predicated region
  $region10: #{image_model_forward.4} parent=0 // pred_check
    _
  $region11: #{image_model_forward.4} parent=0 // pred_check_branch
    %16 = sbr.rel (0) target = $region13
  $region12: #{image_model_forward.4} parent=0 // pred_region
    _
  $region13: #{image_model_forward.4} parent=0 // pred_fallthru
    _
  %p17 = scmp.eq.s32.totalorder 0, 0
  // Predicated region
  $region14: #{image_model_forward.4} parent=0 // pred_check
    %p18 = pneg %p17
  $region15: #{image_model_forward.4} parent=0 // pred_check_branch
    %20 = sbr.rel (%p18) target = $region17
  $region16: #{image_model_forward.4} parent=0 // pred_region
    %vm21 = vcmask 516096
    %22 = vst.msk [vmem:[%s4] sm:$0x1] %vm21, 0.0
    %23 = vst.msk [vmem:[%s5] sm:$0x1] %vm21, 0.0
  $region17: #{image_model_forward.4} parent=0 // pred_fallthru
    _
  %v24 = vld [vmem:[%s0] sm:$0xff]
  %v25 = vld [vmem:[%s0 + $0x8] sm:$0xff]
  %v26 = vld [vmem:[%s0 + $0x10] sm:$0xff]
  %v27 = vld [vmem:[%s0 + $0x18] sm:$0xff]
  %v28 = vld [vmem:[%s0 + $0x20] sm:$0xff]
  %v29 = vld [vmem:[%s0 + $0x28] sm:$0xff]
  %v30 = vld [vmem:[%s0 + $0x30] sm:$0xff]
  %v31 = vld [vmem:[%s0 + $0x38] sm:$0xff]
  %v32 = vld [vmem:[%s0 + $0x40] sm:$0xff]
  %v33 = vld [vmem:[%s0 + $0x48] sm:$0xff]
  %v34 = vld [vmem:[%s0 + $0x50] sm:$0xff]
  %v35 = vld [vmem:[%s0 + $0x58] sm:$0xff]
  %v36 = vld [vmem:[%s0 + $0x60] sm:$0xff]
  %v37 = vld [vmem:[%s0 + $0x68] sm:$0xff]
  %v38 = vld [vmem:[%s0 + $0x70] sm:$0xff]
  %v39 = vld [vmem:[%s0 + $0x78] sm:$0xff]
  %v40 = vld [vmem:[%s0 + $0x80] sm:$0xff]
  %v41 = vld [vmem:[%s0 + $0x88] sm:$0xff]
  %v42 = vld [vmem:[%s0 + $0x90] sm:$0xff]
  %v43 = vld [vmem:[%s0 + $0x98] sm:$0xff]
  %v44 = vld [vmem:[%s0 + $0xa0] sm:$0xff]
  %v45 = vld [vmem:[%s0 + $0xa8] sm:$0xff]
  %v46 = vld [vmem:[%s0 + $0xb0] sm:$0xff]
  %v47 = vld [vmem:[%s0 + $0xb8] sm:$0xff]
  %v48 = vld [vmem:[%s0 + $0xc0] sm:$0xff]
  %v49 = vld [vmem:[%s0 + $0xc8] sm:$0xff]
  %v50 = vld [vmem:[%s0 + $0xd0] sm:$0xff]
  %v51 = vld [vmem:[%s0 + $0xd8] sm:$0xff]
  %v52 = vld [vmem:[%s0 + $0xe0] sm:$0xff]
  %v53 = vld [vmem:[%s0 + $0xe8] sm:$0xff]
  %v54 = vld [vmem:[%s0 + $0xf0] sm:$0xff]
  %v55 = vld [vmem:[%s0 + $0xf8] sm:$0xff]
  %v56 = vld [vmem:[%s0 + $0x100] sm:$0xff]
  %v57 = vld [vmem:[%s0 + $0x108] sm:$0xff]
  %v58 = vld [vmem:[%s0 + $0x110] sm:$0xff]
  %v59 = vld [vmem:[%s0 + $0x118] sm:$0xff]
  %v60 = vld [vmem:[%s0 + $0x120] sm:$0xff]
  %v61 = vld [vmem:[%s0 + $0x128] sm:$0xff]
  %v62 = vld [vmem:[%s0 + $0x130] sm:$0xff]
  %v63 = vld [vmem:[%s0 + $0x138] sm:$0xff]
  %v64 = vld [vmem:[%s0 + $0x140] sm:$0xff]
  %v65 = vld [vmem:[%s0 + $0x148] sm:$0xff]
  %v66 = vld [vmem:[%s0 + $0x150] sm:$0xff]
  %v67 = vld [vmem:[%s0 + $0x158] sm:$0xff]
  %v68 = vld [vmem:[%s0 + $0x160] sm:$0xff]
  %v69 = vld [vmem:[%s0 + $0x168] sm:$0xff]
  %v70 = vld [vmem:[%s0 + $0x170] sm:$0xff]
  %v71 = vld [vmem:[%s0 + $0x178] sm:$0xff]
  %v72 = vld [vmem:[%s0 + $0x180] sm:$0xff]
  %v73 = vld [vmem:[%s0 + $0x188] sm:$0xff]
  %v74 = vld [vmem:[%s0 + $0x190] sm:$0xff]
  %v75 = vld [vmem:[%s0 + $0x198] sm:$0xff]
  %v76 = vld [vmem:[%s0 + $0x1a0] sm:$0xff]
  %v77 = vld [vmem:[%s0 + $0x1a8] sm:$0xff]
  %v78 = vld [vmem:[%s0 + $0x1b0] sm:$0xff]
  %v79 = vld [vmem:[%s0 + $0x1b8] sm:$0xff]
  %v80 = vld [vmem:[%s0 + $0x1c0] sm:$0xff]
  %v81 = vld [vmem:[%s0 + $0x1c8] sm:$0xff]
  %v82 = vld [vmem:[%s0 + $0x1d0] sm:$0xff]
  %v83 = vld [vmem:[%s0 + $0x1d8] sm:$0xff]
  %v84 = vld [vmem:[%s0 + $0x1e0] sm:$0xff]
  %v85 = vld [vmem:[%s0 + $0x1e8] sm:$0xff]
  %v86 = vld [vmem:[%s0 + $0x1f0] sm:$0xff]
  %v87 = vld [vmem:[%s0 + $0x1f8] sm:$0xff]
  %v88 = vld [vmem:[%s0 + $0x200] sm:$0xff]
  %v89 = vld [vmem:[%s0 + $0x208] sm:$0xff]
  %v90 = vld [vmem:[%s0 + $0x210] sm:$0xff]
  %v91 = vld [vmem:[%s0 + $0x218] sm:$0xff]
  %v92 = vld [vmem:[%s0 + $0x220] sm:$0xff]
  %v93 = vld [vmem:[%s0 + $0x228] sm:$0xff]
  %v94 = vld [vmem:[%s0 + $0x230] sm:$0xff]
  %v95 = vld [vmem:[%s0 + $0x238] sm:$0xff]
  %v96 = vld [vmem:[%s0 + $0x240] sm:$0xff]
  %v97 = vld [vmem:[%s0 + $0x248] sm:$0xff]
  %v98 = vld [vmem:[%s0 + $0x250] sm:$0xff]
  %v99 = vld [vmem:[%s0 + $0x258] sm:$0xff]
  %v100 = vld [vmem:[%s0 + $0x260] sm:$0xff]
  %v101 = vld [vmem:[%s0 + $0x268] sm:$0xff]
  %v102 = vld [vmem:[%s0 + $0x270] sm:$0xff]
  %v103 = vld [vmem:[%s0 + $0x278] sm:$0xff]
  %v104 = vld [vmem:[%s0 + $0x280] sm:$0xff]
  %v105 = vld [vmem:[%s0 + $0x288] sm:$0xff]
  %v106 = vld [vmem:[%s0 + $0x290] sm:$0xff]
  %v107 = vld [vmem:[%s0 + $0x298] sm:$0xff]
  %v108 = vld [vmem:[%s0 + $0x2a0] sm:$0xff]
  %v109 = vld [vmem:[%s0 + $0x2a8] sm:$0xff]
  %v110 = vld [vmem:[%s0 + $0x2b0] sm:$0xff]
  %v111 = vld [vmem:[%s0 + $0x2b8] sm:$0xff]
  %v112 = vld [vmem:[%s0 + $0x2c0] sm:$0xff]
  %v113 = vld [vmem:[%s0 + $0x2c8] sm:$0xff]
  %v114 = vld [vmem:[%s0 + $0x2d0] sm:$0xff]
  %v115 = vld [vmem:[%s0 + $0x2d8] sm:$0xff]
  %v116 = vld [vmem:[%s0 + $0x2e0] sm:$0xff]
  %v117 = vld [vmem:[%s0 + $0x2e8] sm:$0xff]
  %v118 = vld [vmem:[%s0 + $0x2f0] sm:$0xff]
  %v119 = vld [vmem:[%s0 + $0x2f8] sm:$0xff]
  %v120 = vld [vmem:[%s0 + $0x300] sm:$0xff]
  %v121 = vld [vmem:[%s0 + $0x308] sm:$0xff]
  %v122 = vld [vmem:[%s0 + $0x310] sm:$0xff]
  %v123 = vld [vmem:[%s0 + $0x318] sm:$0xff]
  %v124 = vld [vmem:[%s0 + $0x320] sm:$0xff]
  %v125 = vld [vmem:[%s0 + $0x328] sm:$0xff]
  %v126 = vld [vmem:[%s0 + $0x330] sm:$0xff]
  %v127 = vld [vmem:[%s0 + $0x338] sm:$0xff]
  %v128 = vld [vmem:[%s0 + $0x340] sm:$0xff]
  %v129 = vld [vmem:[%s0 + $0x348] sm:$0xff]
  %v130 = vld [vmem:[%s0 + $0x350] sm:$0xff]
  %v131 = vld [vmem:[%s0 + $0x358] sm:$0xff]
  %v132 = vld [vmem:[%s0 + $0x360] sm:$0xff]
  %v133 = vld [vmem:[%s0 + $0x368] sm:$0xff]
  %v134 = vld [vmem:[%s0 + $0x370] sm:$0xff]
  %v135 = vld [vmem:[%s0 + $0x378] sm:$0xff]
  %v136 = vld [vmem:[%s1] sm:$0xff]
  %v137 = vld [vmem:[%s1 + $0x8] sm:$0xff]
  %v138 = vld [vmem:[%s1 + $0x10] sm:$0xff]
  %v139 = vld [vmem:[%s1 + $0x18] sm:$0xff]
  %v140 = vld [vmem:[%s1 + $0x20] sm:$0xff]
  %v141 = vld [vmem:[%s1 + $0x28] sm:$0xff]
  %v142 = vld [vmem:[%s1 + $0x30] sm:$0xff]
  %v143 = vld [vmem:[%s1 + $0x38] sm:$0xff]
  %v144 = vld [vmem:[%s1 + $0x40] sm:$0xff]
  %v145 = vld [vmem:[%s1 + $0x48] sm:$0xff]
  %v146 = vld [vmem:[%s1 + $0x50] sm:$0xff]
  %v147 = vld [vmem:[%s1 + $0x58] sm:$0xff]
  %v148 = vld [vmem:[%s1 + $0x60] sm:$0xff]
  %v149 = vld [vmem:[%s1 + $0x68] sm:$0xff]
  %v150 = vld [vmem:[%s1 + $0x70] sm:$0xff]
  %v151 = vld [vmem:[%s1 + $0x78] sm:$0xff]
  %v152 = vld [vmem:[%s1 + $0x80] sm:$0xff]
  %v153 = vld [vmem:[%s1 + $0x88] sm:$0xff]
  %v154 = vld [vmem:[%s1 + $0x90] sm:$0xff]
  %v155 = vld [vmem:[%s1 + $0x98] sm:$0xff]
  %v156 = vld [vmem:[%s1 + $0xa0] sm:$0xff]
  %v157 = vld [vmem:[%s1 + $0xa8] sm:$0xff]
  %v158 = vld [vmem:[%s1 + $0xb0] sm:$0xff]
  %v159 = vld [vmem:[%s1 + $0xb8] sm:$0xff]
  %v160 = vld [vmem:[%s1 + $0xc0] sm:$0xff]
  %v161 = vld [vmem:[%s1 + $0xc8] sm:$0xff]
  %v162 = vld [vmem:[%s1 + $0xd0] sm:$0xff]
  %v163 = vld [vmem:[%s1 + $0xd8] sm:$0xff]
  %v164 = vld [vmem:[%s1 + $0xe0] sm:$0xff]
  %v165 = vld [vmem:[%s1 + $0xe8] sm:$0xff]
  %v166 = vld [vmem:[%s1 + $0xf0] sm:$0xff]
  %v167 = vld [vmem:[%s1 + $0xf8] sm:$0xff]
  %v168 = vld [vmem:[%s1 + $0x100] sm:$0xff]
  %v169 = vld [vmem:[%s1 + $0x108] sm:$0xff]
  %v170 = vld [vmem:[%s1 + $0x110] sm:$0xff]
  %v171 = vld [vmem:[%s1 + $0x118] sm:$0xff]
  %v172 = vld [vmem:[%s1 + $0x120] sm:$0xff]
  %v173 = vld [vmem:[%s1 + $0x128] sm:$0xff]
  %v174 = vld [vmem:[%s1 + $0x130] sm:$0xff]
  %v175 = vld [vmem:[%s1 + $0x138] sm:$0xff]
  %v176 = vld [vmem:[%s1 + $0x140] sm:$0xff]
  %v177 = vld [vmem:[%s1 + $0x148] sm:$0xff]
  %v178 = vld [vmem:[%s1 + $0x150] sm:$0xff]
  %v179 = vld [vmem:[%s1 + $0x158] sm:$0xff]
  %v180 = vld [vmem:[%s1 + $0x160] sm:$0xff]
  %v181 = vld [vmem:[%s1 + $0x168] sm:$0xff]
  %v182 = vld [vmem:[%s1 + $0x170] sm:$0xff]
  %v183 = vld [vmem:[%s1 + $0x178] sm:$0xff]
  %v184 = vld [vmem:[%s1 + $0x180] sm:$0xff]
  %v185 = vld [vmem:[%s1 + $0x188] sm:$0xff]
  %v186 = vld [vmem:[%s1 + $0x190] sm:$0xff]
  %v187 = vld [vmem:[%s1 + $0x198] sm:$0xff]
  %v188 = vld [vmem:[%s1 + $0x1a0] sm:$0xff]
  %v189 = vld [vmem:[%s1 + $0x1a8] sm:$0xff]
  %v190 = vld [vmem:[%s1 + $0x1b0] sm:$0xff]
  %v191 = vld [vmem:[%s1 + $0x1b8] sm:$0xff]
  %v192 = vld [vmem:[%s1 + $0x1c0] sm:$0xff]
  %v193 = vld [vmem:[%s1 + $0x1c8] sm:$0xff]
  %v194 = vld [vmem:[%s1 + $0x1d0] sm:$0xff]
  %v195 = vld [vmem:[%s1 + $0x1d8] sm:$0xff]
  %v196 = vld [vmem:[%s1 + $0x1e0] sm:$0xff]
  %v197 = vld [vmem:[%s1 + $0x1e8] sm:$0xff]
  %v198 = vld [vmem:[%s1 + $0x1f0] sm:$0xff]
  %v199 = vld [vmem:[%s1 + $0x1f8] sm:$0xff]
  %v200 = vld [vmem:[%s1 + $0x200] sm:$0xff]
  %v201 = vld [vmem:[%s1 + $0x208] sm:$0xff]
  %v202 = vld [vmem:[%s1 + $0x210] sm:$0xff]
  %v203 = vld [vmem:[%s1 + $0x218] sm:$0xff]
  %v204 = vld [vmem:[%s1 + $0x220] sm:$0xff]
  %v205 = vld [vmem:[%s1 + $0x228] sm:$0xff]
  %v206 = vld [vmem:[%s1 + $0x230] sm:$0xff]
  %v207 = vld [vmem:[%s1 + $0x238] sm:$0xff]
  %v208 = vld [vmem:[%s1 + $0x240] sm:$0xff]
  %v209 = vld [vmem:[%s1 + $0x248] sm:$0xff]
  %v210 = vld [vmem:[%s1 + $0x250] sm:$0xff]
  %v211 = vld [vmem:[%s1 + $0x258] sm:$0xff]
  %v212 = vld [vmem:[%s1 + $0x260] sm:$0xff]
  %v213 = vld [vmem:[%s1 + $0x268] sm:$0xff]
  %v214 = vld [vmem:[%s1 + $0x270] sm:$0xff]
  %v215 = vld [vmem:[%s1 + $0x278] sm:$0xff]
  %v216 = vld [vmem:[%s1 + $0x280] sm:$0xff]
  %v217 = vld [vmem:[%s1 + $0x288] sm:$0xff]
  %v218 = vld [vmem:[%s1 + $0x290] sm:$0xff]
  %v219 = vld [vmem:[%s1 + $0x298] sm:$0xff]
  %v220 = vld [vmem:[%s1 + $0x2a0] sm:$0xff]
  %v221 = vld [vmem:[%s1 + $0x2a8] sm:$0xff]
  %v222 = vld [vmem:[%s1 + $0x2b0] sm:$0xff]
  %v223 = vld [vmem:[%s1 + $0x2b8] sm:$0xff]
  %v224 = vld [vmem:[%s1 + $0x2c0] sm:$0xff]
  %v225 = vld [vmem:[%s1 + $0x2c8] sm:$0xff]
  %v226 = vld [vmem:[%s1 + $0x2d0] sm:$0xff]
  %v227 = vld [vmem:[%s1 + $0x2d8] sm:$0xff]
  %v228 = vld [vmem:[%s1 + $0x2e0] sm:$0xff]
  %v229 = vld [vmem:[%s1 + $0x2e8] sm:$0xff]
  %v230 = vld [vmem:[%s1 + $0x2f0] sm:$0xff]
  %v231 = vld [vmem:[%s1 + $0x2f8] sm:$0xff]
  %v232 = vld [vmem:[%s1 + $0x300] sm:$0xff]
  %v233 = vld [vmem:[%s1 + $0x308] sm:$0xff]
  %v234 = vld [vmem:[%s1 + $0x310] sm:$0xff]
  %v235 = vld [vmem:[%s1 + $0x318] sm:$0xff]
  %vm236 = vcmask 261120
  %v238 = vsel %vm236, %v30, 0
  %v241 = vsel %vm236, %v37, 0
  %v244 = vsel %vm236, %v44, 0
  %v247 = vsel %vm236, %v51, 0
  %v250 = vsel %vm236, %v58, 0
  %v253 = vsel %vm236, %v65, 0
  %v256 = vsel %vm236, %v72, 0
  %v259 = vsel %vm236, %v79, 0
  %v262 = vsel %vm236, %v86, 0
  %v265 = vsel %vm236, %v93, 0
  %v268 = vsel %vm236, %v100, 0
  %v271 = vsel %vm236, %v107, 0
  %v274 = vsel %vm236, %v114, 0
  %v277 = vsel %vm236, %v121, 0
  %v280 = vsel %vm236, %v128, 0
  %v283 = vsel %vm236, %v135, 0
  %285 = vmatprep.subr.mxu0 0.0
  %286 = vmatpush1.msra.mxu0 %v151
  %287 = vmatprep.subr.mxu0 0.0
  %288 = vmatpush1.msra.mxu0 %v150
  %289 = vmatprep.subr.mxu0 0.0
  %290 = vmatpush1.msra.mxu0 %v149
  %291 = vmatprep.subr.mxu0 0.0
  %292 = vmatpush1.msra.mxu0 %v148
  %293 = vmatprep.subr.mxu0 0.0
  %294 = vmatpush1.msra.mxu0 %v147
  %295 = vmatprep.subr.mxu0 0.0
  %296 = vmatpush1.msra.mxu0 %v146
  %297 = vmatprep.subr.mxu0 0.0
  %298 = vmatpush1.msra.mxu0 %v145
  %299 = vmatprep.subr.mxu0 0.0
  %300 = vmatpush1.msra.mxu0 %v144
  %301 = vmatprep.subr.mxu0 0.0
  %302 = vmatpush1.msra.mxu0 %v143
  %303 = vmatprep.subr.mxu0 0.0
  %304 = vmatpush1.msra.mxu0 %v142
  %305 = vmatprep.subr.mxu0 0.0
  %306 = vmatpush1.msra.mxu0 %v141
  %307 = vmatprep.subr.mxu0 0.0
  %308 = vmatpush1.msra.mxu0 %v140
  %309 = vmatprep.subr.mxu0 0.0
  %310 = vmatpush1.msra.mxu0 %v139
  %311 = vmatprep.subr.mxu0 0.0
  %312 = vmatpush1.msra.mxu0 %v138
  %313 = vmatprep.subr.mxu0 0.0
  %314 = vmatpush1.msra.mxu0 %v137
  %315 = vmatprep.subr.mxu0 0.0
  %316 = vmatpush1.msra.mxu0 %v136
  %317 = vmatprep.subr.mxu0 0.0
  %318 = vmatpush2.msra.mxu0 %v167
  %319 = vmatprep.subr.mxu0 0.0
  %320 = vmatpush2.msra.mxu0 %v166
  %321 = vmatprep.subr.mxu0 0.0
  %322 = vmatpush2.msra.mxu0 %v165
  %323 = vmatprep.subr.mxu0 0.0
  %324 = vmatpush2.msra.mxu0 %v164
  %325 = vmatprep.subr.mxu0 0.0
  %326 = vmatpush2.msra.mxu0 %v163
  %327 = vmatprep.subr.mxu0 0.0
  %328 = vmatpush2.msra.mxu0 %v162
  %329 = vmatprep.subr.mxu0 0.0
  %330 = vmatpush2.msra.mxu0 %v161
  %331 = vmatprep.subr.mxu0 0.0
  %332 = vmatpush2.msra.mxu0 %v160
  %333 = vmatprep.subr.mxu0 0.0
  %334 = vmatpush2.msra.mxu0 %v159
  %335 = vmatprep.subr.mxu0 0.0
  %336 = vmatpush2.msra.mxu0 %v158
  %337 = vmatprep.subr.mxu0 0.0
  %338 = vmatpush2.msra.mxu0 %v157
  %339 = vmatprep.subr.mxu0 0.0
  %340 = vmatpush2.msra.mxu0 %v156
  %341 = vmatprep.subr.mxu0 0.0
  %342 = vmatpush2.msra.mxu0 %v155
  %343 = vmatprep.subr.mxu0 0.0
  %344 = vmatpush2.msra.mxu0 %v154
  %345 = vmatprep.subr.mxu0 0.0
  %346 = vmatpush2.msra.mxu0 %v153
  %347 = vmatprep.subr.mxu0 0.0
  %348 = vmatpush2.msra.mxu0 %v152
  %349 = vmatprep.mubr.f32.mxu0 %v25
  %350 = vmatmul.mubr.f32.gmra.mxu0 %v24
  %v351 = vpop.f32.mrf.mxu0
  %v352 = vadd.f32 0.0, %v351
  %v353 = vpop.f32.mrf.mxu0
  %354 = vmatprep.mubr.f32.mxu0 %v32
  %355 = vmatmul.mubr.f32.gmra.mxu0 %v31
  %v356 = vpop.f32.mrf.mxu0
  %v357 = vadd.f32 0.0, %v356
  %v358 = vpop.f32.mrf.mxu0
  %359 = vmatprep.mubr.f32.mxu0 %v39
  %360 = vmatmul.mubr.f32.gmra.mxu0 %v38
  %v361 = vpop.f32.mrf.mxu0
  %v362 = vadd.f32 0.0, %v361
  %v363 = vpop.f32.mrf.mxu0
  %364 = vmatprep.mubr.f32.mxu0 %v46
  %365 = vmatmul.mubr.f32.gmra.mxu0 %v45
  %v366 = vpop.f32.mrf.mxu0
  %v367 = vadd.f32 0.0, %v366
  %v368 = vpop.f32.mrf.mxu0
  %369 = vmatprep.mubr.f32.mxu0 %v53
  %370 = vmatmul.mubr.f32.gmra.mxu0 %v52
  %v371 = vpop.f32.mrf.mxu0
  %v372 = vadd.f32 0.0, %v371
  %v373 = vpop.f32.mrf.mxu0
  %374 = vmatprep.mubr.f32.mxu0 %v60
  %375 = vmatmul.mubr.f32.gmra.mxu0 %v59
  %v376 = vpop.f32.mrf.mxu0
  %v377 = vadd.f32 0.0, %v376
  %v378 = vpop.f32.mrf.mxu0
  %379 = vmatprep.mubr.f32.mxu0 %v67
  %380 = vmatmul.mubr.f32.gmra.mxu0 %v66
  %v381 = vpop.f32.mrf.mxu0
  %v382 = vadd.f32 0.0, %v381
  %v383 = vpop.f32.mrf.mxu0
  %384 = vmatprep.mubr.f32.mxu0 %v74
  %385 = vmatmul.mubr.f32.gmra.mxu0 %v73
  %v386 = vpop.f32.mrf.mxu0
  %v387 = vadd.f32 0.0, %v386
  %v388 = vpop.f32.mrf.mxu0
  %389 = vmatprep.mubr.f32.mxu0 %v81
  %390 = vmatmul.mubr.f32.gmra.mxu0 %v80
  %v391 = vpop.f32.mrf.mxu0
  %v392 = vadd.f32 0.0, %v391
  %v393 = vpop.f32.mrf.mxu0
  %394 = vmatprep.mubr.f32.mxu0 %v88
  %395 = vmatmul.mubr.f32.gmra.mxu0 %v87
  %v396 = vpop.f32.mrf.mxu0
  %v397 = vadd.f32 0.0, %v396
  %v398 = vpop.f32.mrf.mxu0
  %399 = vmatprep.mubr.f32.mxu0 %v95
  %400 = vmatmul.mubr.f32.gmra.mxu0 %v94
  %v401 = vpop.f32.mrf.mxu0
  %v402 = vadd.f32 0.0, %v401
  %v403 = vpop.f32.mrf.mxu0
  %404 = vmatprep.mubr.f32.mxu0 %v102
  %405 = vmatmul.mubr.f32.gmra.mxu0 %v101
  %v406 = vpop.f32.mrf.mxu0
  %v407 = vadd.f32 0.0, %v406
  %v408 = vpop.f32.mrf.mxu0
  %409 = vmatprep.mubr.f32.mxu0 %v109
  %410 = vmatmul.mubr.f32.gmra.mxu0 %v108
  %v411 = vpop.f32.mrf.mxu0
  %v412 = vadd.f32 0.0, %v411
  %v413 = vpop.f32.mrf.mxu0
  %414 = vmatprep.mubr.f32.mxu0 %v116
  %415 = vmatmul.mubr.f32.gmra.mxu0 %v115
  %v416 = vpop.f32.mrf.mxu0
  %v417 = vadd.f32 0.0, %v416
  %v418 = vpop.f32.mrf.mxu0
  %419 = vmatprep.mubr.f32.mxu0 %v123
  %420 = vmatmul.mubr.f32.gmra.mxu0 %v122
  %v421 = vpop.f32.mrf.mxu0
  %v422 = vadd.f32 0.0, %v421
  %v423 = vpop.f32.mrf.mxu0
  %424 = vmatprep.mubr.f32.mxu0 %v130
  %425 = vmatmul.mubr.f32.gmra.mxu0 %v129
  %v426 = vpop.f32.mrf.mxu0
  %v427 = vadd.f32 0.0, %v426
  %v428 = vpop.f32.mrf.mxu0
  %429 = vdwg.mxu0
  %430 = vmatprep.subr.mxu0 0.0
  %431 = vmatpush1.msra.mxu0 %v183
  %432 = vmatprep.subr.mxu0 0.0
  %433 = vmatpush1.msra.mxu0 %v182
  %434 = vmatprep.subr.mxu0 0.0
  %435 = vmatpush1.msra.mxu0 %v181
  %436 = vmatprep.subr.mxu0 0.0
  %437 = vmatpush1.msra.mxu0 %v180
  %438 = vmatprep.subr.mxu0 0.0
  %439 = vmatpush1.msra.mxu0 %v179
  %440 = vmatprep.subr.mxu0 0.0
  %441 = vmatpush1.msra.mxu0 %v178
  %442 = vmatprep.subr.mxu0 0.0
  %443 = vmatpush1.msra.mxu0 %v177
  %444 = vmatprep.subr.mxu0 0.0
  %445 = vmatpush1.msra.mxu0 %v176
  %446 = vmatprep.subr.mxu0 0.0
  %447 = vmatpush1.msra.mxu0 %v175
  %448 = vmatprep.subr.mxu0 0.0
  %449 = vmatpush1.msra.mxu0 %v174
  %450 = vmatprep.subr.mxu0 0.0
  %451 = vmatpush1.msra.mxu0 %v173
  %452 = vmatprep.subr.mxu0 0.0
  %453 = vmatpush1.msra.mxu0 %v172
  %454 = vmatprep.subr.mxu0 0.0
  %455 = vmatpush1.msra.mxu0 %v171
  %456 = vmatprep.subr.mxu0 0.0
  %457 = vmatpush1.msra.mxu0 %v170
  %458 = vmatprep.subr.mxu0 0.0
  %459 = vmatpush1.msra.mxu0 %v169
  %460 = vmatprep.subr.mxu0 0.0
  %461 = vmatpush1.msra.mxu0 %v168
  %462 = vmatprep.subr.mxu0 0.0
  %463 = vmatpush2.msra.mxu0 %v199
  %464 = vmatprep.subr.mxu0 0.0
  %465 = vmatpush2.msra.mxu0 %v198
  %466 = vmatprep.subr.mxu0 0.0
  %467 = vmatpush2.msra.mxu0 %v197
  %468 = vmatprep.subr.mxu0 0.0
  %469 = vmatpush2.msra.mxu0 %v196
  %470 = vmatprep.subr.mxu0 0.0
  %471 = vmatpush2.msra.mxu0 %v195
  %472 = vmatprep.subr.mxu0 0.0
  %473 = vmatpush2.msra.mxu0 %v194
  %474 = vmatprep.subr.mxu0 0.0
  %475 = vmatpush2.msra.mxu0 %v193
  %476 = vmatprep.subr.mxu0 0.0
  %477 = vmatpush2.msra.mxu0 %v192
  %478 = vmatprep.subr.mxu0 0.0
  %479 = vmatpush2.msra.mxu0 %v191
  %480 = vmatprep.subr.mxu0 0.0
  %481 = vmatpush2.msra.mxu0 %v190
  %482 = vmatprep.subr.mxu0 0.0
  %483 = vmatpush2.msra.mxu0 %v189
  %484 = vmatprep.subr.mxu0 0.0
  %485 = vmatpush2.msra.mxu0 %v188
  %486 = vmatprep.subr.mxu0 0.0
  %487 = vmatpush2.msra.mxu0 %v187
  %488 = vmatprep.subr.mxu0 0.0
  %489 = vmatpush2.msra.mxu0 %v186
  %490 = vmatprep.subr.mxu0 0.0
  %491 = vmatpush2.msra.mxu0 %v185
  %492 = vmatprep.subr.mxu0 0.0
  %493 = vmatpush2.msra.mxu0 %v184
  %494 = vmatprep.mubr.f32.mxu0 %v27
  %495 = vmatmul.mubr.f32.gmra.mxu0 %v26
  %v496 = vpop.f32.mrf.mxu0
  %v497 = vadd.f32 %v352, %v496
  %v498 = vpop.f32.mrf.mxu0
  %499 = vmatprep.mubr.f32.mxu0 %v34
  %500 = vmatmul.mubr.f32.gmra.mxu0 %v33
  %v501 = vpop.f32.mrf.mxu0
  %v502 = vadd.f32 %v357, %v501
  %v503 = vpop.f32.mrf.mxu0
  %504 = vmatprep.mubr.f32.mxu0 %v41
  %505 = vmatmul.mubr.f32.gmra.mxu0 %v40
  %v506 = vpop.f32.mrf.mxu0
  %v507 = vadd.f32 %v362, %v506
  %v508 = vpop.f32.mrf.mxu0
  %509 = vmatprep.mubr.f32.mxu0 %v48
  %510 = vmatmul.mubr.f32.gmra.mxu0 %v47
  %v511 = vpop.f32.mrf.mxu0
  %v512 = vadd.f32 %v367, %v511
  %v513 = vpop.f32.mrf.mxu0
  %514 = vmatprep.mubr.f32.mxu0 %v55
  %515 = vmatmul.mubr.f32.gmra.mxu0 %v54
  %v516 = vpop.f32.mrf.mxu0
  %v517 = vadd.f32 %v372, %v516
  %v518 = vpop.f32.mrf.mxu0
  %519 = vmatprep.mubr.f32.mxu0 %v62
  %520 = vmatmul.mubr.f32.gmra.mxu0 %v61
  %v521 = vpop.f32.mrf.mxu0
  %v522 = vadd.f32 %v377, %v521
  %v523 = vpop.f32.mrf.mxu0
  %524 = vmatprep.mubr.f32.mxu0 %v69
  %525 = vmatmul.mubr.f32.gmra.mxu0 %v68
  %v526 = vpop.f32.mrf.mxu0
  %v527 = vadd.f32 %v382, %v526
  %v528 = vpop.f32.mrf.mxu0
  %529 = vmatprep.mubr.f32.mxu0 %v76
  %530 = vmatmul.mubr.f32.gmra.mxu0 %v75
  %v531 = vpop.f32.mrf.mxu0
  %v532 = vadd.f32 %v387, %v531
  %v533 = vpop.f32.mrf.mxu0
  %534 = vmatprep.mubr.f32.mxu0 %v83
  %535 = vmatmul.mubr.f32.gmra.mxu0 %v82
  %v536 = vpop.f32.mrf.mxu0
  %v537 = vadd.f32 %v392, %v536
  %v538 = vpop.f32.mrf.mxu0
  %539 = vmatprep.mubr.f32.mxu0 %v90
  %540 = vmatmul.mubr.f32.gmra.mxu0 %v89
  %v541 = vpop.f32.mrf.mxu0
  %v542 = vadd.f32 %v397, %v541
  %v543 = vpop.f32.mrf.mxu0
  %544 = vmatprep.mubr.f32.mxu0 %v97
  %545 = vmatmul.mubr.f32.gmra.mxu0 %v96
  %v546 = vpop.f32.mrf.mxu0
  %v547 = vadd.f32 %v402, %v546
  %v548 = vpop.f32.mrf.mxu0
  %549 = vmatprep.mubr.f32.mxu0 %v104
  %550 = vmatmul.mubr.f32.gmra.mxu0 %v103
  %v551 = vpop.f32.mrf.mxu0
  %v552 = vadd.f32 %v407, %v551
  %v553 = vpop.f32.mrf.mxu0
  %554 = vmatprep.mubr.f32.mxu0 %v111
  %555 = vmatmul.mubr.f32.gmra.mxu0 %v110
  %v556 = vpop.f32.mrf.mxu0
  %v557 = vadd.f32 %v412, %v556
  %v558 = vpop.f32.mrf.mxu0
  %559 = vmatprep.mubr.f32.mxu0 %v118
  %560 = vmatmul.mubr.f32.gmra.mxu0 %v117
  %v561 = vpop.f32.mrf.mxu0
  %v562 = vadd.f32 %v417, %v561
  %v563 = vpop.f32.mrf.mxu0
  %564 = vmatprep.mubr.f32.mxu0 %v125
  %565 = vmatmul.mubr.f32.gmra.mxu0 %v124
  %v566 = vpop.f32.mrf.mxu0
  %v567 = vadd.f32 %v422, %v566
  %v568 = vpop.f32.mrf.mxu0
  %569 = vmatprep.mubr.f32.mxu0 %v132
  %570 = vmatmul.mubr.f32.gmra.mxu0 %v131
  %v571 = vpop.f32.mrf.mxu0
  %v572 = vadd.f32 %v427, %v571
  %v573 = vpop.f32.mrf.mxu0
  %574 = vdwg.mxu0
  %575 = vmatprep.subr.mxu0 0.0
  %576 = vmatpush1.msra.mxu0 %v215
  %577 = vmatprep.subr.mxu0 0.0
  %578 = vmatpush1.msra.mxu0 %v214
  %579 = vmatprep.subr.mxu0 0.0
  %580 = vmatpush1.msra.mxu0 %v213
  %581 = vmatprep.subr.mxu0 0.0
  %582 = vmatpush1.msra.mxu0 %v212
  %583 = vmatprep.subr.mxu0 0.0
  %584 = vmatpush1.msra.mxu0 %v211
  %585 = vmatprep.subr.mxu0 0.0
  %586 = vmatpush1.msra.mxu0 %v210
  %587 = vmatprep.subr.mxu0 0.0
  %588 = vmatpush1.msra.mxu0 %v209
  %589 = vmatprep.subr.mxu0 0.0
  %590 = vmatpush1.msra.mxu0 %v208
  %591 = vmatprep.subr.mxu0 0.0
  %592 = vmatpush1.msra.mxu0 %v207
  %593 = vmatprep.subr.mxu0 0.0
  %594 = vmatpush1.msra.mxu0 %v206
  %595 = vmatprep.subr.mxu0 0.0
  %596 = vmatpush1.msra.mxu0 %v205
  %597 = vmatprep.subr.mxu0 0.0
  %598 = vmatpush1.msra.mxu0 %v204
  %599 = vmatprep.subr.mxu0 0.0
  %600 = vmatpush1.msra.mxu0 %v203
  %601 = vmatprep.subr.mxu0 0.0
  %602 = vmatpush1.msra.mxu0 %v202
  %603 = vmatprep.subr.mxu0 0.0
  %604 = vmatpush1.msra.mxu0 %v201
  %605 = vmatprep.subr.mxu0 0.0
  %606 = vmatpush1.msra.mxu0 %v200
  %607 = vmatprep.subr.mxu0 0.0
  %608 = vmatpush2.msra.mxu0 %v231
  %609 = vmatprep.subr.mxu0 0.0
  %610 = vmatpush2.msra.mxu0 %v230
  %611 = vmatprep.subr.mxu0 0.0
  %612 = vmatpush2.msra.mxu0 %v229
  %613 = vmatprep.subr.mxu0 0.0
  %614 = vmatpush2.msra.mxu0 %v228
  %615 = vmatprep.subr.mxu0 0.0
  %616 = vmatpush2.msra.mxu0 %v227
  %617 = vmatprep.subr.mxu0 0.0
  %618 = vmatpush2.msra.mxu0 %v226
  %619 = vmatprep.subr.mxu0 0.0
  %620 = vmatpush2.msra.mxu0 %v225
  %621 = vmatprep.subr.mxu0 0.0
  %622 = vmatpush2.msra.mxu0 %v224
  %623 = vmatprep.subr.mxu0 0.0
  %624 = vmatpush2.msra.mxu0 %v223
  %625 = vmatprep.subr.mxu0 0.0
  %626 = vmatpush2.msra.mxu0 %v222
  %627 = vmatprep.subr.mxu0 0.0
  %628 = vmatpush2.msra.mxu0 %v221
  %629 = vmatprep.subr.mxu0 0.0
  %630 = vmatpush2.msra.mxu0 %v220
  %631 = vmatprep.subr.mxu0 0.0
  %632 = vmatpush2.msra.mxu0 %v219
  %633 = vmatprep.subr.mxu0 0.0
  %634 = vmatpush2.msra.mxu0 %v218
  %635 = vmatprep.subr.mxu0 0.0
  %636 = vmatpush2.msra.mxu0 %v217
  %637 = vmatprep.subr.mxu0 0.0
  %638 = vmatpush2.msra.mxu0 %v216
  %639 = vmatprep.mubr.f32.mxu0 %v29
  %640 = vmatmul.mubr.f32.gmra.mxu0 %v28
  %v641 = vpop.f32.mrf.mxu0
  %v642 = vadd.f32 %v497, %v641
  %v643 = vpop.f32.mrf.mxu0
  %644 = vmatprep.mubr.f32.mxu0 %v36
  %645 = vmatmul.mubr.f32.gmra.mxu0 %v35
  %v646 = vpop.f32.mrf.mxu0
  %v647 = vadd.f32 %v502, %v646
  %v648 = vpop.f32.mrf.mxu0
  %649 = vmatprep.mubr.f32.mxu0 %v43
  %650 = vmatmul.mubr.f32.gmra.mxu0 %v42
  %v651 = vpop.f32.mrf.mxu0
  %v652 = vadd.f32 %v507, %v651
  %v653 = vpop.f32.mrf.mxu0
  %654 = vmatprep.mubr.f32.mxu0 %v50
  %655 = vmatmul.mubr.f32.gmra.mxu0 %v49
  %v656 = vpop.f32.mrf.mxu0
  %v657 = vadd.f32 %v512, %v656
  %v658 = vpop.f32.mrf.mxu0
  %659 = vmatprep.mubr.f32.mxu0 %v57
  %660 = vmatmul.mubr.f32.gmra.mxu0 %v56
  %v661 = vpop.f32.mrf.mxu0
  %v662 = vadd.f32 %v517, %v661
  %v663 = vpop.f32.mrf.mxu0
  %664 = vmatprep.mubr.f32.mxu0 %v64
  %665 = vmatmul.mubr.f32.gmra.mxu0 %v63
  %v666 = vpop.f32.mrf.mxu0
  %v667 = vadd.f32 %v522, %v666
  %v668 = vpop.f32.mrf.mxu0
  %669 = vmatprep.mubr.f32.mxu0 %v71
  %670 = vmatmul.mubr.f32.gmra.mxu0 %v70
  %v671 = vpop.f32.mrf.mxu0
  %v672 = vadd.f32 %v527, %v671
  %v673 = vpop.f32.mrf.mxu0
  %674 = vmatprep.mubr.f32.mxu0 %v78
  %675 = vmatmul.mubr.f32.gmra.mxu0 %v77
  %v676 = vpop.f32.mrf.mxu0
  %v677 = vadd.f32 %v532, %v676
  %v678 = vpop.f32.mrf.mxu0
  %679 = vmatprep.mubr.f32.mxu0 %v85
  %680 = vmatmul.mubr.f32.gmra.mxu0 %v84
  %v681 = vpop.f32.mrf.mxu0
  %v682 = vadd.f32 %v537, %v681
  %v683 = vpop.f32.mrf.mxu0
  %684 = vmatprep.mubr.f32.mxu0 %v92
  %685 = vmatmul.mubr.f32.gmra.mxu0 %v91
  %v686 = vpop.f32.mrf.mxu0
  %v687 = vadd.f32 %v542, %v686
  %v688 = vpop.f32.mrf.mxu0
  %689 = vmatprep.mubr.f32.mxu0 %v99
  %690 = vmatmul.mubr.f32.gmra.mxu0 %v98
  %v691 = vpop.f32.mrf.mxu0
  %v692 = vadd.f32 %v547, %v691
  %v693 = vpop.f32.mrf.mxu0
  %694 = vmatprep.mubr.f32.mxu0 %v106
  %695 = vmatmul.mubr.f32.gmra.mxu0 %v105
  %v696 = vpop.f32.mrf.mxu0
  %v697 = vadd.f32 %v552, %v696
  %v698 = vpop.f32.mrf.mxu0
  %699 = vmatprep.mubr.f32.mxu0 %v113
  %700 = vmatmul.mubr.f32.gmra.mxu0 %v112
  %v701 = vpop.f32.mrf.mxu0
  %v702 = vadd.f32 %v557, %v701
  %v703 = vpop.f32.mrf.mxu0
  %704 = vmatprep.mubr.f32.mxu0 %v120
  %705 = vmatmul.mubr.f32.gmra.mxu0 %v119
  %v706 = vpop.f32.mrf.mxu0
  %v707 = vadd.f32 %v562, %v706
  %v708 = vpop.f32.mrf.mxu0
  %709 = vmatprep.mubr.f32.mxu0 %v127
  %710 = vmatmul.mubr.f32.gmra.mxu0 %v126
  %v711 = vpop.f32.mrf.mxu0
  %v712 = vadd.f32 %v567, %v711
  %v713 = vpop.f32.mrf.mxu0
  %714 = vmatprep.mubr.f32.mxu0 %v134
  %715 = vmatmul.mubr.f32.gmra.mxu0 %v133
  %v716 = vpop.f32.mrf.mxu0
  %v717 = vadd.f32 %v572, %v716
  %v718 = vpop.f32.mrf.mxu0
  %719 = vdwg.mxu0
  %720 = vmatprep.subr.mxu0 0.0
  %721 = vmatpush1.msra.mxu0 0.0
  %722 = vmatprep.subr.mxu0 0.0
  %723 = vmatpush1.msra.mxu0 0.0
  %724 = vmatprep.subr.mxu0 0.0
  %725 = vmatpush1.msra.mxu0 0.0
  %726 = vmatprep.subr.mxu0 0.0
  %727 = vmatpush1.msra.mxu0 0.0
  %728 = vmatprep.subr.mxu0 0.0
  %729 = vmatpush1.msra.mxu0 0.0
  %730 = vmatprep.subr.mxu0 0.0
  %731 = vmatpush1.msra.mxu0 0.0
  %732 = vmatprep.subr.mxu0 0.0
  %733 = vmatpush1.msra.mxu0 0.0
  %734 = vmatprep.subr.mxu0 0.0
  %735 = vmatpush1.msra.mxu0 0.0
  %736 = vmatprep.subr.mxu0 0.0
  %737 = vmatpush1.msra.mxu0 0.0
  %738 = vmatprep.subr.mxu0 0.0
  %739 = vmatpush1.msra.mxu0 0.0
  %740 = vmatprep.subr.mxu0 0.0
  %741 = vmatpush1.msra.mxu0 0.0
  %742 = vmatprep.subr.mxu0 0.0
  %743 = vmatpush1.msra.mxu0 0.0
  %744 = vmatprep.subr.mxu0 0.0
  %745 = vmatpush1.msra.mxu0 %v235
  %746 = vmatprep.subr.mxu0 0.0
  %747 = vmatpush1.msra.mxu0 %v234
  %748 = vmatprep.subr.mxu0 0.0
  %749 = vmatpush1.msra.mxu0 %v233
  %750 = vmatprep.subr.mxu0 0.0
  %751 = vmatpush1.msra.mxu0 %v232
  %752 = vmatprep.subr.mxu0 0.0
  %753 = vmatpush2.msra.mxu0 0.0
  %754 = vmatprep.subr.mxu0 0.0
  %755 = vmatpush2.msra.mxu0 0.0
  %756 = vmatprep.subr.mxu0 0.0
  %757 = vmatpush2.msra.mxu0 0.0
  %758 = vmatprep.subr.mxu0 0.0
  %759 = vmatpush2.msra.mxu0 0.0
  %760 = vmatprep.subr.mxu0 0.0
  %761 = vmatpush2.msra.mxu0 0.0
  %762 = vmatprep.subr.mxu0 0.0
  %763 = vmatpush2.msra.mxu0 0.0
  %764 = vmatprep.subr.mxu0 0.0
  %765 = vmatpush2.msra.mxu0 0.0
  %766 = vmatprep.subr.mxu0 0.0
  %767 = vmatpush2.msra.mxu0 0.0
  %768 = vmatprep.subr.mxu0 0.0
  %769 = vmatpush2.msra.mxu0 0.0
  %770 = vmatprep.subr.mxu0 0.0
  %771 = vmatpush2.msra.mxu0 0.0
  %772 = vmatprep.subr.mxu0 0.0
  %773 = vmatpush2.msra.mxu0 0.0
  %774 = vmatprep.subr.mxu0 0.0
  %775 = vmatpush2.msra.mxu0 0.0
  %776 = vmatprep.subr.mxu0 0.0
  %777 = vmatpush2.msra.mxu0 0.0
  %778 = vmatprep.subr.mxu0 0.0
  %779 = vmatpush2.msra.mxu0 0.0
  %780 = vmatprep.subr.mxu0 0.0
  %781 = vmatpush2.msra.mxu0 0.0
  %782 = vmatprep.subr.mxu0 0.0
  %783 = vmatpush2.msra.mxu0 0.0
  %784 = vmatprep.mubr.f32.mxu0 0.0
  %785 = vmatmul.mubr.f32.gmra.mxu0 %v238
  %v786 = vpop.f32.mrf.mxu0
  %v787 = vadd.f32 %v642, %v786
  %v788 = vpop.f32.mrf.mxu0
  %789 = vmatprep.mubr.f32.mxu0 0.0
  %790 = vmatmul.mubr.f32.gmra.mxu0 %v241
  %v791 = vpop.f32.mrf.mxu0
  %v792 = vadd.f32 %v647, %v791
  %v793 = vpop.f32.mrf.mxu0
  %794 = vmatprep.mubr.f32.mxu0 0.0
  %795 = vmatmul.mubr.f32.gmra.mxu0 %v244
  %v796 = vpop.f32.mrf.mxu0
  %v797 = vadd.f32 %v652, %v796
  %v798 = vpop.f32.mrf.mxu0
  %799 = vmatprep.mubr.f32.mxu0 0.0
  %800 = vmatmul.mubr.f32.gmra.mxu0 %v247
  %v801 = vpop.f32.mrf.mxu0
  %v802 = vadd.f32 %v657, %v801
  %v803 = vpop.f32.mrf.mxu0
  %804 = vmatprep.mubr.f32.mxu0 0.0
  %805 = vmatmul.mubr.f32.gmra.mxu0 %v250
  %v806 = vpop.f32.mrf.mxu0
  %v807 = vadd.f32 %v662, %v806
  %v808 = vpop.f32.mrf.mxu0
  %809 = vmatprep.mubr.f32.mxu0 0.0
  %810 = vmatmul.mubr.f32.gmra.mxu0 %v253
  %v811 = vpop.f32.mrf.mxu0
  %v812 = vadd.f32 %v667, %v811
  %v813 = vpop.f32.mrf.mxu0
  %814 = vmatprep.mubr.f32.mxu0 0.0
  %815 = vmatmul.mubr.f32.gmra.mxu0 %v256
  %v816 = vpop.f32.mrf.mxu0
  %v817 = vadd.f32 %v672, %v816
  %v818 = vpop.f32.mrf.mxu0
  %819 = vmatprep.mubr.f32.mxu0 0.0
  %820 = vmatmul.mubr.f32.gmra.mxu0 %v259
  %v821 = vpop.f32.mrf.mxu0
  %v822 = vadd.f32 %v677, %v821
  %v823 = vpop.f32.mrf.mxu0
  %824 = vmatprep.mubr.f32.mxu0 0.0
  %825 = vmatmul.mubr.f32.gmra.mxu0 %v262
  %v826 = vpop.f32.mrf.mxu0
  %v827 = vadd.f32 %v682, %v826
  %v828 = vpop.f32.mrf.mxu0
  %829 = vmatprep.mubr.f32.mxu0 0.0
  %830 = vmatmul.mubr.f32.gmra.mxu0 %v265
  %v831 = vpop.f32.mrf.mxu0
  %v832 = vadd.f32 %v687, %v831
  %v833 = vpop.f32.mrf.mxu0
  %834 = vmatprep.mubr.f32.mxu0 0.0
  %835 = vmatmul.mubr.f32.gmra.mxu0 %v268
  %v836 = vpop.f32.mrf.mxu0
  %v837 = vadd.f32 %v692, %v836
  %v838 = vpop.f32.mrf.mxu0
  %839 = vmatprep.mubr.f32.mxu0 0.0
  %840 = vmatmul.mubr.f32.gmra.mxu0 %v271
  %v841 = vpop.f32.mrf.mxu0
  %v842 = vadd.f32 %v697, %v841
  %v843 = vpop.f32.mrf.mxu0
  %844 = vmatprep.mubr.f32.mxu0 0.0
  %845 = vmatmul.mubr.f32.gmra.mxu0 %v274
  %v846 = vpop.f32.mrf.mxu0
  %v847 = vadd.f32 %v702, %v846
  %v848 = vpop.f32.mrf.mxu0
  %849 = vmatprep.mubr.f32.mxu0 0.0
  %850 = vmatmul.mubr.f32.gmra.mxu0 %v277
  %v851 = vpop.f32.mrf.mxu0
  %v852 = vadd.f32 %v707, %v851
  %v853 = vpop.f32.mrf.mxu0
  %854 = vmatprep.mubr.f32.mxu0 0.0
  %855 = vmatmul.mubr.f32.gmra.mxu0 %v280
  %v856 = vpop.f32.mrf.mxu0
  %v857 = vadd.f32 %v712, %v856
  %v858 = vpop.f32.mrf.mxu0
  %859 = vmatprep.mubr.f32.mxu0 0.0
  %860 = vmatmul.mubr.f32.gmra.mxu0 %v283
  %v861 = vpop.f32.mrf.mxu0
  %v862 = vadd.f32 %v717, %v861
  %v863 = vpop.f32.mrf.mxu0
  %864 = vdwg.mxu0
  %vm865 = vcmask 523264
  %v866 = vsel %vm865, %v787, -inf
  %v867 = vsel %vm865, %v807, -inf
  %v868 = vmax.f32 %v866, %v867
  %v869 = vsel %vm865, %v827, -inf
  %v870 = vmax.f32 %v868, %v869
  %v871 = vsel %vm865, %v847, -inf
  %v872 = vmax.f32 %v870, %v871
  %v873 = vsel %vm865, %v792, -inf
  %v874 = vsel %vm865, %v812, -inf
  %v875 = vmax.f32 %v873, %v874
  %v876 = vsel %vm865, %v832, -inf
  %v877 = vmax.f32 %v875, %v876
  %v878 = vsel %vm865, %v852, -inf
  %v879 = vmax.f32 %v877, %v878
  %v880 = vsel %vm865, %v797, -inf
  %v881 = vsel %vm865, %v817, -inf
  %v882 = vmax.f32 %v880, %v881
  %v883 = vsel %vm865, %v837, -inf
  %v884 = vmax.f32 %v882, %v883
  %v885 = vsel %vm865, %v857, -inf
  %v886 = vmax.f32 %v884, %v885
  %v887 = vsel %vm865, %v802, -inf
  %v888 = vsel %vm865, %v822, -inf
  %v889 = vmax.f32 %v887, %v888
  %v890 = vsel %vm865, %v842, -inf
  %v891 = vmax.f32 %v889, %v890
  %v892 = vsel %vm865, %v862, -inf
  %v893 = vmax.f32 %v891, %v892
  %v894 = vld [vmem:[%s2] sm:$0x1]
  %v896 = vlaneseq
  %v897 = vshrl.u32 %v896, 7
  %v898 = vsub.s32 0, %v897
  %v899 = vrot.slane %v894, %v898
  %v901 = vadd.f32 %v872, %v899
  %v902 = vadd.f32 %v879, %v899
  %v903 = vadd.f32 %v886, %v899
  %v904 = vadd.f32 %v893, %v899
  %v905 = vmax.f32 %v901, 0.0
  %v906 = vmax.f32 %v902, 0.0
  %v907 = vmax.f32 %v903, 0.0
  %v908 = vmax.f32 %v904, 0.0
  %v909 = vld [vmem:[%s4] sm:$0x1]
  %v910 = vsel %vm865, %v905, 0.0
  %v911 = vsel %vm865, %v906, 0.0
  %v912 = vadd.f32 %v910, %v911
  %v913 = vsel %vm865, %v907, 0.0
  %v914 = vadd.f32 %v912, %v913
  %v915 = vsel %vm865, %v908, 0.0
  %v916 = vadd.f32 %v914, %v915
  %v917 = vrot.slane %v916, 4
  %v918 = vadd.f32 %v916, %v917
  %v919 = vrot.slane %v918, 2
  %v920 = vadd.f32 %v918, %v919
  %v921 = vrot.slane %v920, 1
  %v922 = vadd.f32 %v920, %v921
  %v923 = vadd.f32 %v909, %v922
  %vm924 = vcmask 516096
  %925 = vst.msk [vmem:[%s4] sm:$0x1] %vm924, %v923
  %v926 = vld [vmem:[%s5] sm:$0x1]
  %v927 = vmul.f32 %v905, %v905
  %v928 = vmul.f32 %v906, %v906
  %v929 = vmul.f32 %v907, %v907
  %v930 = vmul.f32 %v908, %v908
  %v931 = vsel %vm865, %v927, 0.0
  %v932 = vsel %vm865, %v928, 0.0
  %v933 = vadd.f32 %v931, %v932
  %v934 = vsel %vm865, %v929, 0.0
  %v935 = vadd.f32 %v933, %v934
  %v936 = vsel %vm865, %v930, 0.0
  %v937 = vadd.f32 %v935, %v936
  %v938 = vrot.slane %v937, 4
  %v939 = vadd.f32 %v937, %v938
  %v940 = vrot.slane %v939, 2
  %v941 = vadd.f32 %v939, %v940
  %v942 = vrot.slane %v941, 1
  %v943 = vadd.f32 %v941, %v942
  %v944 = vadd.f32 %v926, %v943
  %945 = vst.msk [vmem:[%s5] sm:$0x1] %vm924, %v944
  %946 = vst.msk [vmem:[%s3] sm:$0xff] %vm865, %v905
  %947 = vst.msk [vmem:[%s3 + $0x8] sm:$0xff] %vm865, %v906
  %948 = vst.msk [vmem:[%s3 + $0x10] sm:$0xff] %vm865, %v907
  %949 = vst.msk [vmem:[%s3 + $0x18] sm:$0xff] %vm865, %v908
  // Predicated region
  $region18: #{image_model_forward.4} parent=0 // pred_check
    _
  $region19: #{image_model_forward.4} parent=0 // pred_check_branch
    %951 = sbr.rel (0) target = $region21
  $region20: #{image_model_forward.4} parent=0 // pred_region
    _
  $region21: #{image_model_forward.4} parent=0 // pred_fallthru
    _
  // Predicated region
  $region22: #{image_model_forward.4} parent=0 // pred_check
    _
  $region23: #{image_model_forward.4} parent=0 // pred_check_branch
    %953 = sbr.rel (0) target = $region25
  $region24: #{image_model_forward.4} parent=0 // pred_region
    _
  $region25: #{image_model_forward.4} parent=0 // pred_fallthru
    _
  // Predicated region
  $region26: #{image_model_forward.4} parent=0 // pred_check
    _
  $region27: #{image_model_forward.4} parent=0 // pred_check_branch
    %955 = sbr.rel (0) target = $region29
  $region28: #{image_model_forward.4} parent=0 // pred_region
    _
  $region29: #{image_model_forward.4} parent=0 // pred_fallthru
    _
  // Predicated region
  $region30: #{image_model_forward.4} parent=0 // pred_check
    _
  $region31: #{image_model_forward.4} parent=0 // pred_check_branch
    %957 = sbr.rel (0) target = $region33
  $region32: #{image_model_forward.4} parent=0 // pred_region
    _
  $region33: #{image_model_forward.4} parent=0 // pred_fallthru
    _
  // Predicated region
  $region34: #{image_model_forward.4} parent=0 // pred_check
    _
  $region35: #{image_model_forward.4} parent=0 // pred_check_branch
    %959 = sbr.rel (0) target = $region37
  $region36: #{image_model_forward.4} parent=0 // pred_region
    _
  $region37: #{image_model_forward.4} parent=0 // pred_fallthru
    _
  // Predicated region
  $region38: #{image_model_forward.4} parent=0 // pred_check
    _
  $region39: #{image_model_forward.4} parent=0 // pred_check_branch
    %961 = sbr.rel (0) target = $region41
  $region40: #{image_model_forward.4} parent=0 // pred_region
    _
  $region41: #{image_model_forward.4} parent=0 // pred_fallthru
    _

// kernel: image_model_forward.5
$region0: #{image_model_forward.5}
  #allocation0 [shape = 'u32[]', space=smem, size = 0x4, offset = 0x4, fixed_abs, tag = 'smem constant byte address 0x4 - core index']
  #allocation1 [shape = 'u32[144,128]{1,0:T(1,128)}', space=vmem, size = 0x12000, scoped, tag = 'internal scratch']
  %s0 = inlined_call_operand.vmem [shape: f32[2,1024], index: 0, kind: input, shape index: {}]
  %s1 = inlined_call_operand.vmem [shape: f32[1024,64], index: 1, kind: input, shape index: {}]
  %s2 = inlined_call_operand.vmem [shape: f32[1,64], index: 2, kind: input, shape index: {}]
  %s3 = inlined_call_operand.hbm [shape: f32[2,64], index: 3, kind: output, shape index: {}]
  %s4 = sld [smem:[#allocation0]]
  $region22: #{image_model_forward.5} parent=0
    _
  %s6 = ssub.s32 1, %s4
  %s7 = scalar_select 0, %s6, %s4
  $region1: #{image_model_forward.5} parent=0
    #allocation2 [shape = 'u8[1024]{0}', space=vmem, size = 0x400, scoped, tag = 'output window, operand 0, single buffered']
    #allocation3 [shape = 's32[1]{0}', space=sflag, size = 0x4, scoped, tag = 'scoped memory for image_model_forward.5']
    %8 = vsyncpa [#allocation3], 0
    // Predicated region
    $region2: #{image_model_forward.5} parent=1 // pred_check
      _
    $region3: #{image_model_forward.5} parent=1 // pred_check_branch
      %10 = sbr.rel (0) target = $region5
    $region4: #{image_model_forward.5} parent=1 // pred_region
      _
    $region5: #{image_model_forward.5} parent=1 // pred_fallthru
      _
    // Predicated region
    $region6: #{image_model_forward.5} parent=1 // pred_check
      _
    $region7: #{image_model_forward.5} parent=1 // pred_check_branch
      %12 = sbr.rel (0) target = $region9
    $region8: #{image_model_forward.5} parent=1 // pred_region
      _
    $region9: #{image_model_forward.5} parent=1 // pred_fallthru
      _
    // Predicated region
    $region10: #{image_model_forward.5} parent=1 // pred_check
      _
    $region11: #{image_model_forward.5} parent=1 // pred_check_branch
      %14 = sbr.rel (0) target = $region13
    $region12: #{image_model_forward.5} parent=1 // pred_region
      _
    $region13: #{image_model_forward.5} parent=1 // pred_fallthru
      _
    %v15 = vld [vmem:[%s0] sm:$0xff]
    %v16 = vld [vmem:[%s0 + $0x8] sm:$0xff]
    %v17 = vld [vmem:[%s1] sm:$0xff]
    %v18 = vld [vmem:[%s1 + $0x8] sm:$0xff]
    %v19 = vld [vmem:[%s1 + $0x10] sm:$0xff]
    %v20 = vld [vmem:[%s1 + $0x18] sm:$0xff]
    %v21 = vld [vmem:[%s1 + $0x20] sm:$0xff]
    %v22 = vld [vmem:[%s1 + $0x28] sm:$0xff]
    %v23 = vld [vmem:[%s1 + $0x30] sm:$0xff]
    %v24 = vld [vmem:[%s1 + $0x38] sm:$0xff]
    %v25 = vld [vmem:[%s1 + $0x40] sm:$0xff]
    %v26 = vld [vmem:[%s1 + $0x48] sm:$0xff]
    %v27 = vld [vmem:[%s1 + $0x50] sm:$0xff]
    %v28 = vld [vmem:[%s1 + $0x58] sm:$0xff]
    %v29 = vld [vmem:[%s1 + $0x60] sm:$0xff]
    %v30 = vld [vmem:[%s1 + $0x68] sm:$0xff]
    %v31 = vld [vmem:[%s1 + $0x70] sm:$0xff]
    %v32 = vld [vmem:[%s1 + $0x78] sm:$0xff]
    %v33 = vld [vmem:[%s1 + $0x80] sm:$0xff]
    %v34 = vld [vmem:[%s1 + $0x88] sm:$0xff]
    %v35 = vld [vmem:[%s1 + $0x90] sm:$0xff]
    %v36 = vld [vmem:[%s1 + $0x98] sm:$0xff]
    %v37 = vld [vmem:[%s1 + $0xa0] sm:$0xff]
    %v38 = vld [vmem:[%s1 + $0xa8] sm:$0xff]
    %v39 = vld [vmem:[%s1 + $0xb0] sm:$0xff]
    %v40 = vld [vmem:[%s1 + $0xb8] sm:$0xff]
    %v41 = vld [vmem:[%s1 + $0xc0] sm:$0xff]
    %v42 = vld [vmem:[%s1 + $0xc8] sm:$0xff]
    %v43 = vld [vmem:[%s1 + $0xd0] sm:$0xff]
    %v44 = vld [vmem:[%s1 + $0xd8] sm:$0xff]
    %v45 = vld [vmem:[%s1 + $0xe0] sm:$0xff]
    %v46 = vld [vmem:[%s1 + $0xe8] sm:$0xff]
    %v47 = vld [vmem:[%s1 + $0xf0] sm:$0xff]
    %v48 = vld [vmem:[%s1 + $0xf8] sm:$0xff]
    %v49 = vld [vmem:[%s1 + $0x100] sm:$0xff]
    %v50 = vld [vmem:[%s1 + $0x108] sm:$0xff]
    %v51 = vld [vmem:[%s1 + $0x110] sm:$0xff]
    %v52 = vld [vmem:[%s1 + $0x118] sm:$0xff]
    %v53 = vld [vmem:[%s1 + $0x120] sm:$0xff]
    %v54 = vld [vmem:[%s1 + $0x128] sm:$0xff]
    %v55 = vld [vmem:[%s1 + $0x130] sm:$0xff]
    %v56 = vld [vmem:[%s1 + $0x138] sm:$0xff]
    %v57 = vld [vmem:[%s1 + $0x140] sm:$0xff]
    %v58 = vld [vmem:[%s1 + $0x148] sm:$0xff]
    %v59 = vld [vmem:[%s1 + $0x150] sm:$0xff]
    %v60 = vld [vmem:[%s1 + $0x158] sm:$0xff]
    %v61 = vld [vmem:[%s1 + $0x160] sm:$0xff]
    %v62 = vld [vmem:[%s1 + $0x168] sm:$0xff]
    %v63 = vld [vmem:[%s1 + $0x170] sm:$0xff]
    %v64 = vld [vmem:[%s1 + $0x178] sm:$0xff]
    %v65 = vld [vmem:[%s1 + $0x180] sm:$0xff]
    %v66 = vld [vmem:[%s1 + $0x188] sm:$0xff]
    %v67 = vld [vmem:[%s1 + $0x190] sm:$0xff]
    %v68 = vld [vmem:[%s1 + $0x198] sm:$0xff]
    %v69 = vld [vmem:[%s1 + $0x1a0] sm:$0xff]
    %v70 = vld [vmem:[%s1 + $0x1a8] sm:$0xff]
    %v71 = vld [vmem:[%s1 + $0x1b0] sm:$0xff]
    %v72 = vld [vmem:[%s1 + $0x1b8] sm:$0xff]
    %v73 = vld [vmem:[%s1 + $0x1c0] sm:$0xff]
    %v74 = vld [vmem:[%s1 + $0x1c8] sm:$0xff]
    %v75 = vld [vmem:[%s1 + $0x1d0] sm:$0xff]
    %v76 = vld [vmem:[%s1 + $0x1d8] sm:$0xff]
    %v77 = vld [vmem:[%s1 + $0x1e0] sm:$0xff]
    %v78 = vld [vmem:[%s1 + $0x1e8] sm:$0xff]
    %v79 = vld [vmem:[%s1 + $0x1f0] sm:$0xff]
    %v80 = vld [vmem:[%s1 + $0x1f8] sm:$0xff]
    %v81 = vld [vmem:[%s1 + $0x200] sm:$0xff]
    %v82 = vld [vmem:[%s1 + $0x208] sm:$0xff]
    %v83 = vld [vmem:[%s1 + $0x210] sm:$0xff]
    %v84 = vld [vmem:[%s1 + $0x218] sm:$0xff]
    %v85 = vld [vmem:[%s1 + $0x220] sm:$0xff]
    %v86 = vld [vmem:[%s1 + $0x228] sm:$0xff]
    %v87 = vld [vmem:[%s1 + $0x230] sm:$0xff]
    %v88 = vld [vmem:[%s1 + $0x238] sm:$0xff]
    %v89 = vld [vmem:[%s1 + $0x240] sm:$0xff]
    %v90 = vld [vmem:[%s1 + $0x248] sm:$0xff]
    %v91 = vld [vmem:[%s1 + $0x250] sm:$0xff]
    %v92 = vld [vmem:[%s1 + $0x258] sm:$0xff]
    %v93 = vld [vmem:[%s1 + $0x260] sm:$0xff]
    %v94 = vld [vmem:[%s1 + $0x268] sm:$0xff]
    %v95 = vld [vmem:[%s1 + $0x270] sm:$0xff]
    %v96 = vld [vmem:[%s1 + $0x278] sm:$0xff]
    %v97 = vld [vmem:[%s1 + $0x280] sm:$0xff]
    %v98 = vld [vmem:[%s1 + $0x288] sm:$0xff]
    %v99 = vld [vmem:[%s1 + $0x290] sm:$0xff]
    %v100 = vld [vmem:[%s1 + $0x298] sm:$0xff]
    %v101 = vld [vmem:[%s1 + $0x2a0] sm:$0xff]
    %v102 = vld [vmem:[%s1 + $0x2a8] sm:$0xff]
    %v103 = vld [vmem:[%s1 + $0x2b0] sm:$0xff]
    %v104 = vld [vmem:[%s1 + $0x2b8] sm:$0xff]
    %v105 = vld [vmem:[%s1 + $0x2c0] sm:$0xff]
    %v106 = vld [vmem:[%s1 + $0x2c8] sm:$0xff]
    %v107 = vld [vmem:[%s1 + $0x2d0] sm:$0xff]
    %v108 = vld [vmem:[%s1 + $0x2d8] sm:$0xff]
    %v109 = vld [vmem:[%s1 + $0x2e0] sm:$0xff]
    %v110 = vld [vmem:[%s1 + $0x2e8] sm:$0xff]
    %v111 = vld [vmem:[%s1 + $0x2f0] sm:$0xff]
    %v112 = vld [vmem:[%s1 + $0x2f8] sm:$0xff]
    %v113 = vld [vmem:[%s1 + $0x300] sm:$0xff]
    %v114 = vld [vmem:[%s1 + $0x308] sm:$0xff]
    %v115 = vld [vmem:[%s1 + $0x310] sm:$0xff]
    %v116 = vld [vmem:[%s1 + $0x318] sm:$0xff]
    %v117 = vld [vmem:[%s1 + $0x320] sm:$0xff]
    %v118 = vld [vmem:[%s1 + $0x328] sm:$0xff]
    %v119 = vld [vmem:[%s1 + $0x330] sm:$0xff]
    %v120 = vld [vmem:[%s1 + $0x338] sm:$0xff]
    %v121 = vld [vmem:[%s1 + $0x340] sm:$0xff]
    %v122 = vld [vmem:[%s1 + $0x348] sm:$0xff]
    %v123 = vld [vmem:[%s1 + $0x350] sm:$0xff]
    %v124 = vld [vmem:[%s1 + $0x358] sm:$0xff]
    %v125 = vld [vmem:[%s1 + $0x360] sm:$0xff]
    %v126 = vld [vmem:[%s1 + $0x368] sm:$0xff]
    %v127 = vld [vmem:[%s1 + $0x370] sm:$0xff]
    %v128 = vld [vmem:[%s1 + $0x378] sm:$0xff]
    %v129 = vld [vmem:[%s1 + $0x380] sm:$0xff]
    %v130 = vld [vmem:[%s1 + $0x388] sm:$0xff]
    %v131 = vld [vmem:[%s1 + $0x390] sm:$0xff]
    %v132 = vld [vmem:[%s1 + $0x398] sm:$0xff]
    %v133 = vld [vmem:[%s1 + $0x3a0] sm:$0xff]
    %v134 = vld [vmem:[%s1 + $0x3a8] sm:$0xff]
    %v135 = vld [vmem:[%s1 + $0x3b0] sm:$0xff]
    %v136 = vld [vmem:[%s1 + $0x3b8] sm:$0xff]
    %v137 = vld [vmem:[%s1 + $0x3c0] sm:$0xff]
    %v138 = vld [vmem:[%s1 + $0x3c8] sm:$0xff]
    %v139 = vld [vmem:[%s1 + $0x3d0] sm:$0xff]
    %v140 = vld [vmem:[%s1 + $0x3d8] sm:$0xff]
    %v141 = vld [vmem:[%s1 + $0x3e0] sm:$0xff]
    %v142 = vld [vmem:[%s1 + $0x3e8] sm:$0xff]
    %v143 = vld [vmem:[%s1 + $0x3f0] sm:$0xff]
    %v144 = vld [vmem:[%s1 + $0x3f8] sm:$0xff]
    %v145 = vld [vmem:[%s2] sm:$0x1]
    %v147 = vlaneseq
    %v148 = vshrl.u32 %v147, 7
    %v149 = vsub.s32 0, %v148
    %v150 = vrot.slane %v145, %v149
    %v154 = vcombine.high %v15, %v15
    %v156 = vunpack.c.l.s4 1983009808
    %v157 = vunpack.c.0.s8 %v156
    %v158 = vlaneseq
    %v159 = vshrl.u32 %v158, 7
    %v160 = vsub.s32 %v157, %v159
    %v161 = vrot.slane %v15, %v160
    %v163 = vunpack.c.l.s4 1983009808
    %v164 = vunpack.c.0.s8 %v163
    %v165 = vlaneseq
    %v166 = vshrl.u32 %v165, 7
    %v167 = vsub.s32 %v164, %v166
    %v168 = vrot.slane %v154, %v167
    %v169 = vcombine.high %v161, %v161
    %v170 = vcombine.high %v168, %v168
    %v171 = vcombine.high %v16, %v16
    %v173 = vunpack.c.l.s4 1983009808
    %v174 = vunpack.c.0.s8 %v173
    %v175 = vlaneseq
    %v176 = vshrl.u32 %v175, 7
    %v177 = vsub.s32 %v174, %v176
    %v178 = vrot.slane %v16, %v177
    %v180 = vunpack.c.l.s4 1983009808
    %v181 = vunpack.c.0.s8 %v180
    %v182 = vlaneseq
    %v183 = vshrl.u32 %v182, 7
    %v184 = vsub.s32 %v181, %v183
    %v185 = vrot.slane %v171, %v184
    %v186 = vcombine.high %v178, %v178
    %v187 = vcombine.high %v185, %v185
    %196 = vmatprep.subr.mxu0 0.0
    %197 = vmatpush1.msra.mxu0 %v32
    %198 = vmatprep.subr.mxu0 0.0
    %199 = vmatpush1.msra.mxu0 %v31
    %200 = vmatprep.subr.mxu0 0.0
    %201 = vmatpush1.msra.mxu0 %v30
    %202 = vmatprep.subr.mxu0 0.0
    %203 = vmatpush1.msra.mxu0 %v29
    %204 = vmatprep.subr.mxu0 0.0
    %205 = vmatpush1.msra.mxu0 %v28
    %206 = vmatprep.subr.mxu0 0.0
    %207 = vmatpush1.msra.mxu0 %v27
    %208 = vmatprep.subr.mxu0 0.0
    %209 = vmatpush1.msra.mxu0 %v26
    %210 = vmatprep.subr.mxu0 0.0
    %211 = vmatpush1.msra.mxu0 %v25
    %212 = vmatprep.subr.mxu0 0.0
    %213 = vmatpush1.msra.mxu0 %v24
    %214 = vmatprep.subr.mxu0 0.0
    %215 = vmatpush1.msra.mxu0 %v23
    %216 = vmatprep.subr.mxu0 0.0
    %217 = vmatpush1.msra.mxu0 %v22
    %218 = vmatprep.subr.mxu0 0.0
    %219 = vmatpush1.msra.mxu0 %v21
    %220 = vmatprep.subr.mxu0 0.0
    %221 = vmatpush1.msra.mxu0 %v20
    %222 = vmatprep.subr.mxu0 0.0
    %223 = vmatpush1.msra.mxu0 %v19
    %224 = vmatprep.subr.mxu0 0.0
    %225 = vmatpush1.msra.mxu0 %v18
    %226 = vmatprep.subr.mxu0 0.0
    %227 = vmatpush1.msra.mxu0 %v17
    %228 = vmatprep.subr.mxu0 0.0
    %229 = vmatpush2.msra.mxu0 %v48
    %230 = vmatprep.subr.mxu0 0.0
    %231 = vmatpush2.msra.mxu0 %v47
    %232 = vmatprep.subr.mxu0 0.0
    %233 = vmatpush2.msra.mxu0 %v46
    %234 = vmatprep.subr.mxu0 0.0
    %235 = vmatpush2.msra.mxu0 %v45
    %236 = vmatprep.subr.mxu0 0.0
    %237 = vmatpush2.msra.mxu0 %v44
    %238 = vmatprep.subr.mxu0 0.0
    %239 = vmatpush2.msra.mxu0 %v43
    %240 = vmatprep.subr.mxu0 0.0
    %241 = vmatpush2.msra.mxu0 %v42
    %242 = vmatprep.subr.mxu0 0.0
    %243 = vmatpush2.msra.mxu0 %v41
    %244 = vmatprep.subr.mxu0 0.0
    %245 = vmatpush2.msra.mxu0 %v40
    %246 = vmatprep.subr.mxu0 0.0
    %247 = vmatpush2.msra.mxu0 %v39
    %248 = vmatprep.subr.mxu0 0.0
    %249 = vmatpush2.msra.mxu0 %v38
    %250 = vmatprep.subr.mxu0 0.0
    %251 = vmatpush2.msra.mxu0 %v37
    %252 = vmatprep.subr.mxu0 0.0
    %253 = vmatpush2.msra.mxu0 %v36
    %254 = vmatprep.subr.mxu0 0.0
    %255 = vmatpush2.msra.mxu0 %v35
    %256 = vmatprep.subr.mxu0 0.0
    %257 = vmatpush2.msra.mxu0 %v34
    %258 = vmatprep.subr.mxu0 0.0
    %259 = vmatpush2.msra.mxu0 %v33
    %260 = vmatprep.mubr.f32.mxu0 %v169
    %261 = vmatmul.mubr.f32.gmra.mxu0 %v161
    %v262 = vpop.f32.mrf.mxu0
    %v263 = vadd.f32 %v150, %v262
    %v264 = vpop.f32.mrf.mxu0
    %265 = vdwg.mxu0
    %266 = vmatprep.subr.mxu0 0.0
    %267 = vmatpush1.msra.mxu0 %v64
    %268 = vmatprep.subr.mxu0 0.0
    %269 = vmatpush1.msra.mxu0 %v63
    %270 = vmatprep.subr.mxu0 0.0
    %271 = vmatpush1.msra.mxu0 %v62
    %272 = vmatprep.subr.mxu0 0.0
    %273 = vmatpush1.msra.mxu0 %v61
    %274 = vmatprep.subr.mxu0 0.0
    %275 = vmatpush1.msra.mxu0 %v60
    %276 = vmatprep.subr.mxu0 0.0
    %277 = vmatpush1.msra.mxu0 %v59
    %278 = vmatprep.subr.mxu0 0.0
    %279 = vmatpush1.msra.mxu0 %v58
    %280 = vmatprep.subr.mxu0 0.0
    %281 = vmatpush1.msra.mxu0 %v57
    %282 = vmatprep.subr.mxu0 0.0
    %283 = vmatpush1.msra.mxu0 %v56
    %284 = vmatprep.subr.mxu0 0.0
    %285 = vmatpush1.msra.mxu0 %v55
    %286 = vmatprep.subr.mxu0 0.0
    %287 = vmatpush1.msra.mxu0 %v54
    %288 = vmatprep.subr.mxu0 0.0
    %289 = vmatpush1.msra.mxu0 %v53
    %290 = vmatprep.subr.mxu0 0.0
    %291 = vmatpush1.msra.mxu0 %v52
    %292 = vmatprep.subr.mxu0 0.0
    %293 = vmatpush1.msra.mxu0 %v51
    %294 = vmatprep.subr.mxu0 0.0
    %295 = vmatpush1.msra.mxu0 %v50
    %296 = vmatprep.subr.mxu0 0.0
    %297 = vmatpush1.msra.mxu0 %v49
    %298 = vmatprep.subr.mxu0 0.0
    %299 = vmatpush2.msra.mxu0 %v80
    %300 = vmatprep.subr.mxu0 0.0
    %301 = vmatpush2.msra.mxu0 %v79
    %302 = vmatprep.subr.mxu0 0.0
    %303 = vmatpush2.msra.mxu0 %v78
    %304 = vmatprep.subr.mxu0 0.0
    %305 = vmatpush2.msra.mxu0 %v77
    %306 = vmatprep.subr.mxu0 0.0
    %307 = vmatpush2.msra.mxu0 %v76
    %308 = vmatprep.subr.mxu0 0.0
    %309 = vmatpush2.msra.mxu0 %v75
    %310 = vmatprep.subr.mxu0 0.0
    %311 = vmatpush2.msra.mxu0 %v74
    %312 = vmatprep.subr.mxu0 0.0
    %313 = vmatpush2.msra.mxu0 %v73
    %314 = vmatprep.subr.mxu0 0.0
    %315 = vmatpush2.msra.mxu0 %v72
    %316 = vmatprep.subr.mxu0 0.0
    %317 = vmatpush2.msra.mxu0 %v71
    %318 = vmatprep.subr.mxu0 0.0
    %319 = vmatpush2.msra.mxu0 %v70
    %320 = vmatprep.subr.mxu0 0.0
    %321 = vmatpush2.msra.mxu0 %v69
    %322 = vmatprep.subr.mxu0 0.0
    %323 = vmatpush2.msra.mxu0 %v68
    %324 = vmatprep.subr.mxu0 0.0
    %325 = vmatpush2.msra.mxu0 %v67
    %326 = vmatprep.subr.mxu0 0.0
    %327 = vmatpush2.msra.mxu0 %v66
    %328 = vmatprep.subr.mxu0 0.0
    %329 = vmatpush2.msra.mxu0 %v65
    %330 = vmatprep.mubr.f32.mxu0 %v170
    %331 = vmatmul.mubr.f32.gmra.mxu0 %v168
    %v332 = vpop.f32.mrf.mxu0
    %v333 = vadd.f32 %v263, %v332
    %v334 = vpop.f32.mrf.mxu0
    %335 = vdwg.mxu0
    %336 = vmatprep.subr.mxu0 0.0
    %337 = vmatpush1.msra.mxu0 %v96
    %338 = vmatprep.subr.mxu0 0.0
    %339 = vmatpush1.msra.mxu0 %v95
    %340 = vmatprep.subr.mxu0 0.0
    %341 = vmatpush1.msra.mxu0 %v94
    %342 = vmatprep.subr.mxu0 0.0
    %343 = vmatpush1.msra.mxu0 %v93
    %344 = vmatprep.subr.mxu0 0.0
    %345 = vmatpush1.msra.mxu0 %v92
    %346 = vmatprep.subr.mxu0 0.0
    %347 = vmatpush1.msra.mxu0 %v91
    %348 = vmatprep.subr.mxu0 0.0
    %349 = vmatpush1.msra.mxu0 %v90
    %350 = vmatprep.subr.mxu0 0.0
    %351 = vmatpush1.msra.mxu0 %v89
    %352 = vmatprep.subr.mxu0 0.0
    %353 = vmatpush1.msra.mxu0 %v88
    %354 = vmatprep.subr.mxu0 0.0
    %355 = vmatpush1.msra.mxu0 %v87
    %356 = vmatprep.subr.mxu0 0.0
    %357 = vmatpush1.msra.mxu0 %v86
    %358 = vmatprep.subr.mxu0 0.0
    %359 = vmatpush1.msra.mxu0 %v85
    %360 = vmatprep.subr.mxu0 0.0
    %361 = vmatpush1.msra.mxu0 %v84
    %362 = vmatprep.subr.mxu0 0.0
    %363 = vmatpush1.msra.mxu0 %v83
    %364 = vmatprep.subr.mxu0 0.0
    %365 = vmatpush1.msra.mxu0 %v82
    %366 = vmatprep.subr.mxu0 0.0
    %367 = vmatpush1.msra.mxu0 %v81
    %368 = vmatprep.subr.mxu0 0.0
    %369 = vmatpush2.msra.mxu0 %v112
    %370 = vmatprep.subr.mxu0 0.0
    %371 = vmatpush2.msra.mxu0 %v111
    %372 = vmatprep.subr.mxu0 0.0
    %373 = vmatpush2.msra.mxu0 %v110
    %374 = vmatprep.subr.mxu0 0.0
    %375 = vmatpush2.msra.mxu0 %v109
    %376 = vmatprep.subr.mxu0 0.0
    %377 = vmatpush2.msra.mxu0 %v108
    %378 = vmatprep.subr.mxu0 0.0
    %379 = vmatpush2.msra.mxu0 %v107
    %380 = vmatprep.subr.mxu0 0.0
    %381 = vmatpush2.msra.mxu0 %v106
    %382 = vmatprep.subr.mxu0 0.0
    %383 = vmatpush2.msra.mxu0 %v105
    %384 = vmatprep.subr.mxu0 0.0
    %385 = vmatpush2.msra.mxu0 %v104
    %386 = vmatprep.subr.mxu0 0.0
    %387 = vmatpush2.msra.mxu0 %v103
    %388 = vmatprep.subr.mxu0 0.0
    %389 = vmatpush2.msra.mxu0 %v102
    %390 = vmatprep.subr.mxu0 0.0
    %391 = vmatpush2.msra.mxu0 %v101
    %392 = vmatprep.subr.mxu0 0.0
    %393 = vmatpush2.msra.mxu0 %v100
    %394 = vmatprep.subr.mxu0 0.0
    %395 = vmatpush2.msra.mxu0 %v99
    %396 = vmatprep.subr.mxu0 0.0
    %397 = vmatpush2.msra.mxu0 %v98
    %398 = vmatprep.subr.mxu0 0.0
    %399 = vmatpush2.msra.mxu0 %v97
    %400 = vmatprep.mubr.f32.mxu0 %v186
    %401 = vmatmul.mubr.f32.gmra.mxu0 %v178
    %v402 = vpop.f32.mrf.mxu0
    %v403 = vadd.f32 %v333, %v402
    %v404 = vpop.f32.mrf.mxu0
    %405 = vdwg.mxu0
    %406 = vmatprep.subr.mxu0 0.0
    %407 = vmatpush1.msra.mxu0 %v128
    %408 = vmatprep.subr.mxu0 0.0
    %409 = vmatpush1.msra.mxu0 %v127
    %410 = vmatprep.subr.mxu0 0.0
    %411 = vmatpush1.msra.mxu0 %v126
    %412 = vmatprep.subr.mxu0 0.0
    %413 = vmatpush1.msra.mxu0 %v125
    %414 = vmatprep.subr.mxu0 0.0
    %415 = vmatpush1.msra.mxu0 %v124
    %416 = vmatprep.subr.mxu0 0.0
    %417 = vmatpush1.msra.mxu0 %v123
    %418 = vmatprep.subr.mxu0 0.0
    %419 = vmatpush1.msra.mxu0 %v122
    %420 = vmatprep.subr.mxu0 0.0
    %421 = vmatpush1.msra.mxu0 %v121
    %422 = vmatprep.subr.mxu0 0.0
    %423 = vmatpush1.msra.mxu0 %v120
    %424 = vmatprep.subr.mxu0 0.0
    %425 = vmatpush1.msra.mxu0 %v119
    %426 = vmatprep.subr.mxu0 0.0
    %427 = vmatpush1.msra.mxu0 %v118
    %428 = vmatprep.subr.mxu0 0.0
    %429 = vmatpush1.msra.mxu0 %v117
    %430 = vmatprep.subr.mxu0 0.0
    %431 = vmatpush1.msra.mxu0 %v116
    %432 = vmatprep.subr.mxu0 0.0
    %433 = vmatpush1.msra.mxu0 %v115
    %434 = vmatprep.subr.mxu0 0.0
    %435 = vmatpush1.msra.mxu0 %v114
    %436 = vmatprep.subr.mxu0 0.0
    %437 = vmatpush1.msra.mxu0 %v113
    %438 = vmatprep.subr.mxu0 0.0
    %439 = vmatpush2.msra.mxu0 %v144
    %440 = vmatprep.subr.mxu0 0.0
    %441 = vmatpush2.msra.mxu0 %v143
    %442 = vmatprep.subr.mxu0 0.0
    %443 = vmatpush2.msra.mxu0 %v142
    %444 = vmatprep.subr.mxu0 0.0
    %445 = vmatpush2.msra.mxu0 %v141
    %446 = vmatprep.subr.mxu0 0.0
    %447 = vmatpush2.msra.mxu0 %v140
    %448 = vmatprep.subr.mxu0 0.0
    %449 = vmatpush2.msra.mxu0 %v139
    %450 = vmatprep.subr.mxu0 0.0
    %451 = vmatpush2.msra.mxu0 %v138
    %452 = vmatprep.subr.mxu0 0.0
    %453 = vmatpush2.msra.mxu0 %v137
    %454 = vmatprep.subr.mxu0 0.0
    %455 = vmatpush2.msra.mxu0 %v136
    %456 = vmatprep.subr.mxu0 0.0
    %457 = vmatpush2.msra.mxu0 %v135
    %458 = vmatprep.subr.mxu0 0.0
    %459 = vmatpush2.msra.mxu0 %v134
    %460 = vmatprep.subr.mxu0 0.0
    %461 = vmatpush2.msra.mxu0 %v133
    %462 = vmatprep.subr.mxu0 0.0
    %463 = vmatpush2.msra.mxu0 %v132
    %464 = vmatprep.subr.mxu0 0.0
    %465 = vmatpush2.msra.mxu0 %v131
    %466 = vmatprep.subr.mxu0 0.0
    %467 = vmatpush2.msra.mxu0 %v130
    %468 = vmatprep.subr.mxu0 0.0
    %469 = vmatpush2.msra.mxu0 %v129
    %470 = vmatprep.mubr.f32.mxu0 %v187
    %471 = vmatmul.mubr.f32.gmra.mxu0 %v185
    %v472 = vpop.f32.mrf.mxu0
    %v473 = vadd.f32 %v403, %v472
    %v474 = vpop.f32.mrf.mxu0
    %475 = vdwg.mxu0
    %vm476 = vcmask 517120
    %477 = vst.msk [vmem:[#allocation2] sm:$0x3] %vm476, %v473
    // Predicated region
    $region14: #{image_model_forward.5} parent=1 // pred_check
      _
    $region15: #{image_model_forward.5} parent=1 // pred_check_branch
      %479 = sbr.rel (0) target = $region17
    $region16: #{image_model_forward.5} parent=1 // pred_region
      %s481 = ssub.s32 32, 32
      %482 = vsyncadd [#allocation3], %s481
      %s484 = sshll.u32 [#allocation2], 4
      %s485 = int_to_ptr.vmem [resolvable:$true] %s484
      %487 = dma.vmem_to_hbm [thread:$0]  %s485, 32, %s3, [#allocation3]
    $region17: #{image_model_forward.5} parent=1 // pred_fallthru
      _
    // Predicated region
    $region18: #{image_model_forward.5} parent=1 // pred_check
      _
    $region19: #{image_model_forward.5} parent=1 // pred_check_branch
      %489 = sbr.rel (0) target = $region21
    $region20: #{image_model_forward.5} parent=1 // pred_region
      %490 = dma.done [#allocation3], 32
    $region21: #{image_model_forward.5} parent=1 // pred_fallthru
      _
    %491 = vsyncpa [#allocation3], 1

</llo_original>
